<compile_context>
chip_gen: v7x
topology: tpu7x:2x2x1
jax: 0.10.0
libtpu: 0.0.40
codegen_flags: <defaults>
</compile_context>

<pallas_src>
import jax
import jax.numpy as jnp
from jax import lax
from jax.experimental import pallas as pl
from jax.experimental.pallas import tpu as pltpu


# -----------------------------------------------------------------------------
# Fused dense head:  cat(feat, angles) -> Dropout(id) -> fc1 -> batch4 -> ReLU -> fc2
# -----------------------------------------------------------------------------
def _head_kernel(feat_ref, ang_ref, w1_ref, wang_ref, b1_ref, w2_ref, b2_ref,
                 o_ref):
    # fc1 over the 2048 image features: bf16 x bf16 on the MXU, f32 accumulation.
    h = jnp.dot(feat_ref[...], w1_ref[...], preferred_element_type=jnp.float32)
    # fc1's single "angle" column (K=1): rank-1 broadcast FMA on the VPU instead
    # of an extra (almost empty) MXU K row.
    h = h + ang_ref[...] * wang_ref[...]
    # Bias (batch4 eval-mode affine already folded in) + ReLU, f32 on the VPU.
    h = jnp.maximum(h + b1_ref[...], 0.0)
    # fc2 (512 -> 1, N=1): VPU multiply + cross-lane (XLU) reduction; skips a
    # second MXU weight-load/drain for a single output column. Kept on purpose
    # (an N=1 MXU pass would pad to a full lane group on the bound unit).
    o_ref[...] = jnp.sum(h * w2_ref[...], axis=-1, keepdims=True) + b2_ref[...]
    # NOTE: SimplestNet.forward() never applies self.sig, so no sigmoid here.


def _round_up(x, m):
    return ((x + m - 1) // m) * m


def _max_batch_tile():
    """Generation-aware upper bound on the batch tile."""
    try:
        kind = jax.devices()[0].device_kind.lower()
    except Exception:  # pragma: no cover - defensive, keeps the safe default
        kind = ""
    # v6e / v7x: DMA/MXU balanced -> 1024-row tiles amortize per-step overhead.
    # v5e (and anything unrecognized): MXU-bound + smaller default scoped VMEM
    # -> 512-row tiles; bigger tiles buy ~nothing there.
    if ("v6" in kind) or ("v7" in kind) or ("7x" in kind):
        return 1024
    return 512


def _pick_batch_tile(B):
    max_tile = _max_batch_tile()
    if B < 128:
        return B                           # single (possibly ragged) tile
    if B <= 2 * max_tile:
        # >=2 grid steps: lights up both v7x TensorCores on the "parallel"
        # batch axis and overlaps tile i+1's feat DMA with tile i's MXU work.
        # Keep the tile a multiple of 16 (bf16 sublane pack).
        return min(max_tile, _round_up(pl.cdiv(B, 2), 16))
    return max_tile


def fused_head(feat, angles, head_params):
    """feat: (B, 2048) bf16 (cast inside _features), angles: (B, 1) f32 -> (B, 1) f32."""
    w1, wang, b1, w2, b2 = head_params
    B, F = feat.shape
    assert F == 2048 and angles.shape == (B, 1)

    tb = _pick_batch_tile(B)
    grid = (pl.cdiv(B, tb),)   # ragged boundary handled by Pallas (no jnp.pad)

    cost = pl.CostEstimate(
        flops=2 * B * (2048 * 512 + 512 + 512),
        transcendentals=0,
        bytes_accessed=int(
            w1.size * 2                                     # bf16 fc1 weights
            + (wang.size + b1.size + w2.size + b2.size) * 4
            + B * 2048 * 2 + B * 4 + B * 4),                # feat + angles + out
    )

    out = pl.pallas_call(
        _head_kernel,
        out_shape=jax.ShapeDtypeStruct((B, 1), jnp.float32),
        grid=grid,
        in_specs=[
            pl.BlockSpec((tb, 2048), lambda i: (i, 0)),     # feature tile (bf16)
            pl.BlockSpec((tb, 1), lambda i: (i, 0)),        # angle tile
            pl.BlockSpec((2048, 512), lambda i: (0, 0)),    # fc1 weights, resident
            pl.BlockSpec((1, 512), lambda i: (0, 0)),       # fc1 angle row
            pl.BlockSpec((1, 512), lambda i: (0, 0)),       # fc1 bias (+BN4 fold)
            pl.BlockSpec((1, 512), lambda i: (0, 0)),       # fc2 weight row
            pl.BlockSpec((1, 1), lambda i: (0, 0)),         # fc2 bias
        ],
        out_specs=pl.BlockSpec((tb, 1), lambda i: (i, 0)),
        compiler_params=pltpu.CompilerParams(
            dimension_semantics=("parallel",),   # v7x dual-TC; harmless elsewhere
            vmem_limit_bytes=28 * 1024 * 1024),  # headroom for the 1024-row tile
        cost_estimate=cost,
    )(feat, angles, w1, wang, b1, w2, b2)
    return out


# -----------------------------------------------------------------------------
# Conv / BN / pool feature extractor (eval mode)
# TODO(synk): this tiny frontend ((2,75,75) -> (32,8,8), <1 MFLOP/img) stays on
# XLA (lax.conv_general_dilated / reduce_window); a Pallas conv at these shapes
# would badly underfill the MXU — the Pallas win is the fc1-dominated head above.
# -----------------------------------------------------------------------------
def _bn_eval(x, gamma, beta, mean, var, eps=1e-5):
    scale = gamma / jnp.sqrt(var + eps)
    shift = beta - mean * scale
    return x * scale[None, :, None, None] + shift[None, :, None, None]


def _conv2d(x, w, b, stride):
    y = lax.conv_general_dilated(
        x, w, window_strides=(stride, stride), padding="VALID",
        dimension_numbers=("NCHW", "OIHW", "NCHW"))
    return y + b[None, :, None, None]


def _maxpool2x2(x):
    return lax.reduce_window(x, -jnp.inf, lax.max,
                             window_dimensions=(1, 1, 2, 2),
                             window_strides=(1, 1, 2, 2),
                             padding="VALID")


def _features(x, params, out_dtype=jnp.bfloat16):
    x = _bn_eval(x, *params["bn1"])                              # batch1
    x = _conv2d(x, *params["conv1"], stride=2)                   # conv1
    x = _maxpool2x2(jax.nn.relu(_bn_eval(x, *params["bn2"])))    # bn2, relu, pool
    x = _conv2d(x, *params["conv2"], stride=1)                   # conv2
    x = _maxpool2x2(jax.nn.relu(_bn_eval(x, *params["bn3"])))    # bn3, relu, pool
    # Cast here so the conv-stack epilogue writes bf16 directly; the head kernel
    # then reads 2 B/elem (no standalone 4B-read/2B-write convert op in between).
    x = x.astype(out_dtype)
    return x.reshape(x.shape[0], -1)                             # (B, 2048)


def simplest_net_forward(x, angles, params):
    feat = _features(x, params)                                  # bf16 (B, 2048)
    # torch.cat((x, angles), 1) + Dropout (identity in eval) + fc1 + batch4 + ReLU
    # + fc2 are all fused into the Pallas head kernel (the cat is realized by
    # feeding the 2048 feature columns and the 1 angle column separately).
    return fused_head(feat, angles, params["head"])


def simplest_net_reference(x, angles, params):
    """Pure-JAX f32 reference of the same eval-mode forward, for validation."""
    feat = _features(x, params, out_dtype=jnp.float32)
    w1, wang, b1, w2, b2 = params["head"]
    h = feat @ w1.astype(jnp.float32) + angles * wang + b1
    h = jnp.maximum(h, 0.0)
    return jnp.sum(h * w2, axis=-1, keepdims=True) + b2


# -----------------------------------------------------------------------------
# Parameter init (PyTorch-default-style uniform; BN at default running stats)
# -----------------------------------------------------------------------------
def init_params(key):
    ks = jax.random.split(key, 6)

    def uniform(k, shape, bound):
        return jax.random.uniform(k, shape, jnp.float32, -bound, bound)

    def conv_init(k, cout, cin, kh, kw):
        kw_, kb_ = jax.random.split(k)
        bound = 1.0 / float(cin * kh * kw) ** 0.5
        return uniform(kw_, (cout, cin, kh, kw), bound), uniform(kb_, (cout,), bound)

    def bn_init(c):  # (gamma, beta, running_mean, running_var)
        return (jnp.ones((c,), jnp.float32), jnp.zeros((c,), jnp.float32),
                jnp.zeros((c,), jnp.float32), jnp.ones((c,), jnp.float32))

    conv1 = conv_init(ks[0], 8, 2, 5, 5)
    conv2 = conv_init(ks[1], 32, 8, 3, 3)

    # fc1: Linear(2048 + 1, 512), stored pre-transposed and split into the 2048
    # image-feature rows (bf16, MXU operand) and the single angle row (f32, VPU).
    bound1 = 1.0 / float(2049) ** 0.5
    w1_full = uniform(ks[2], (2049, 512), bound1)
    b1 = uniform(ks[3], (1, 512), bound1)

    # batch4 (BatchNorm over the 512 features) in eval mode is an affine; fold it
    # into fc1's weight and bias once, at init time.
    g4, be4, m4, v4 = bn_init(512)
    scale4 = g4 / jnp.sqrt(v4 + 1e-5)
    shift4 = be4 - m4 * scale4
    w1_full = w1_full * scale4[None, :]
    b1 = b1 * scale4[None, :] + shift4[None, :]

    w1 = w1_full[:2048].astype(jnp.bfloat16)      # (2048, 512) bf16
    wang = w1_full[2048:]                         # (1, 512)    f32

    bound2 = 1.0 / float(512) ** 0.5
    w2 = uniform(ks[4], (1, 512), bound2)         # fc2 weight as a row vector
    b2 = uniform(ks[5], (1, 1), bound2)           # fc2 bias

    return {
        "bn1": bn_init(2),
        "conv1": conv1,
        "bn2": bn_init(8),
        "conv2": conv2,
        "bn3": bn_init(32),
        "head": (w1, wang, b1, w2, b2),
    }


if __name__ == "__main__":
    key = jax.random.PRNGKey(0)
    k_params, k_x, k_a = jax.random.split(key, 3)

    params = init_params(k_params)

    # 75x75 input -> conv1(k5,s2)=36 -> pool=18 -> conv2(k3)=16 -> pool=8,
    # giving 32*8*8 = 2048 flattened features, matching Linear(2048 + 1, 512).
    B = 2
    x = jax.random.normal(k_x, (B, 2, 75, 75), jnp.float32)
    angles = jax.random.normal(k_a, (B, 1), jnp.float32)

    fwd = jax.jit(simplest_net_forward)
    out = jax.block_until_ready(fwd(x, angles, params))

    ref = jax.block_until_ready(simplest_net_reference(x, angles, params))

    assert out.shape == (B, 1)
    # Only the valid B rows exist in `out` (boundary blocks are masked on write),
    # so finiteness / closeness checks over the full output are safe.
    assert bool(jnp.all(jnp.isfinite(out)))
    # bf16 weights/activations on the MXU with f32 accumulation -> small tolerance.
    assert bool(jnp.allclose(out, ref, rtol=1e-2, atol=1e-2)), (out, ref)
    print("KERNEL_OK")
</pallas_src>

<mosaic_0001>
module attributes {stable_mosaic.version = 11 : i64} {
  func.func @_head_kernel(%arg0: i32, %arg1: memref<2x2048xbf16, #tpu.memory_space<vmem>>, %arg2: memref<2x1xf32, #tpu.memory_space<vmem>>, %arg3: memref<2048x512xbf16, #tpu.memory_space<vmem>>, %arg4: memref<1x512xf32, #tpu.memory_space<vmem>>, %arg5: memref<1x512xf32, #tpu.memory_space<vmem>>, %arg6: memref<1x512xf32, #tpu.memory_space<vmem>>, %arg7: memref<1x1xf32, #tpu.memory_space<vmem>>, %arg8: memref<2x1xf32, #tpu.memory_space<vmem>>) attributes {dimension_semantics = [#tpu.dimension_semantics<parallel>], iteration_bounds = array<i64: 1>, scalar_prefetch = 0 : i64, scratch_operands = 0 : i64, tpu.core_type = #tpu.core_type<tc>, window_params = [{transform_indices = @transform_0, window_bounds = array<i64: 2, 2048>}, {transform_indices = @transform_1, window_bounds = array<i64: 2, 1>}, {pipeline_mode = #tpu.pipeline_mode<synchronous>, transform_indices = @transform_2, window_bounds = array<i64: 2048, 512>}, {pipeline_mode = #tpu.pipeline_mode<synchronous>, transform_indices = @transform_3, window_bounds = array<i64: 1, 512>}, {pipeline_mode = #tpu.pipeline_mode<synchronous>, transform_indices = @transform_4, window_bounds = array<i64: 1, 512>}, {pipeline_mode = #tpu.pipeline_mode<synchronous>, transform_indices = @transform_5, window_bounds = array<i64: 1, 512>}, {pipeline_mode = #tpu.pipeline_mode<synchronous>, transform_indices = @transform_6, window_bounds = array<i64: 1, 1>}, {transform_indices = @transform_7, window_bounds = array<i64: 2, 1>}]} {
    %c0 = arith.constant 0 : index
    %c0_0 = arith.constant 0 : index
    %0 = vector.load %arg1[%c0, %c0_0] : memref<2x2048xbf16, #tpu.memory_space<vmem>>, vector<2x2048xbf16>
    %c0_1 = arith.constant 0 : index
    %c0_2 = arith.constant 0 : index
    %1 = vector.load %arg3[%c0_1, %c0_2] : memref<2048x512xbf16, #tpu.memory_space<vmem>>, vector<2048x512xbf16>
    %cst = arith.constant dense<0.000000e+00> : vector<2x512xf32>
    %2 = tpu.matmul %0, %1, %cst {dimension_numbers = #tpu.dot_dimension_numbers<[1], [0], [0], [1], [0, 0, 1, 1], [], []>} : vector<2x2048xbf16>, vector<2048x512xbf16>, vector<2x512xf32> -> vector<2x512xf32>
    %c0_3 = arith.constant 0 : index
    %c0_4 = arith.constant 0 : index
    %3 = vector.load %arg2[%c0_3, %c0_4] : memref<2x1xf32, #tpu.memory_space<vmem>>, vector<2x1xf32>
    %c0_5 = arith.constant 0 : index
    %c0_6 = arith.constant 0 : index
    %4 = vector.load %arg4[%c0_5, %c0_6] : memref<1x512xf32, #tpu.memory_space<vmem>>, vector<1x512xf32>
    %5 = vector.broadcast %3 : vector<2x1xf32> to vector<2x512xf32>
    %6 = vector.broadcast %4 : vector<1x512xf32> to vector<2x512xf32>
    %7 = arith.mulf %5, %6 : vector<2x512xf32>
    %8 = arith.addf %2, %7 : vector<2x512xf32>
    %c0_7 = arith.constant 0 : index
    %c0_8 = arith.constant 0 : index
    %9 = vector.load %arg5[%c0_7, %c0_8] : memref<1x512xf32, #tpu.memory_space<vmem>>, vector<1x512xf32>
    %10 = vector.broadcast %9 : vector<1x512xf32> to vector<2x512xf32>
    %11 = arith.addf %8, %10 : vector<2x512xf32>
    %cst_9 = arith.constant 0.000000e+00 : f32
    %12 = vector.broadcast %cst_9 : f32 to vector<2x512xf32>
    %13 = arith.maximumf %11, %12 : vector<2x512xf32>
    %c0_10 = arith.constant 0 : index
    %c0_11 = arith.constant 0 : index
    %14 = vector.load %arg6[%c0_10, %c0_11] : memref<1x512xf32, #tpu.memory_space<vmem>>, vector<1x512xf32>
    %15 = vector.broadcast %14 : vector<1x512xf32> to vector<2x512xf32>
    %16 = arith.mulf %13, %15 : vector<2x512xf32>
    %cst_12 = arith.constant dense<0.000000e+00> : vector<2xf32>
    %17 = vector.multi_reduction <add>, %16, %cst_12 [1] : vector<2x512xf32> to vector<2xf32>
    %18 = vector.shape_cast %17 : vector<2xf32> to vector<2x1xf32>
    %c0_13 = arith.constant 0 : index
    %c0_14 = arith.constant 0 : index
    %19 = vector.load %arg7[%c0_13, %c0_14] : memref<1x1xf32, #tpu.memory_space<vmem>>, vector<1x1xf32>
    %20 = vector.broadcast %19 : vector<1x1xf32> to vector<2x1xf32>
    %21 = arith.addf %18, %20 : vector<2x1xf32>
    %c0_15 = arith.constant 0 : index
    %c0_16 = arith.constant 0 : index
    %22 = vector.load %arg8[%c0_15, %c0_16] : memref<2x1xf32, #tpu.memory_space<vmem>>, vector<2x1xf32>
    tpu.vector_store %arg8[%c0_15, %c0_16], %21 {strides = array<i32>} : memref<2x1xf32, #tpu.memory_space<vmem>>, vector<2x1xf32>,
    return
  }
  func.func @transform_0(%arg0: i32) -> (i32, i32) {
    %c0_i32 = arith.constant 0 : i32
    %c0_i32_0 = arith.constant 0 : i32
    return %arg0, %c0_i32 : i32, i32
  }
  func.func @transform_1(%arg0: i32) -> (i32, i32) {
    %c0_i32 = arith.constant 0 : i32
    %c0_i32_0 = arith.constant 0 : i32
    return %arg0, %c0_i32 : i32, i32
  }
  func.func @transform_2(%arg0: i32) -> (i32, i32) {
    %c0_i32 = arith.constant 0 : i32
    %c0_i32_0 = arith.constant 0 : i32
    %c0_i32_1 = arith.constant 0 : i32
    return %c0_i32, %c0_i32_0 : i32, i32
  }
  func.func @transform_3(%arg0: i32) -> (i32, i32) {
    %c0_i32 = arith.constant 0 : i32
    %c0_i32_0 = arith.constant 0 : i32
    %c0_i32_1 = arith.constant 0 : i32
    return %c0_i32, %c0_i32_0 : i32, i32
  }
  func.func @transform_4(%arg0: i32) -> (i32, i32) {
    %c0_i32 = arith.constant 0 : i32
    %c0_i32_0 = arith.constant 0 : i32
    %c0_i32_1 = arith.constant 0 : i32
    return %c0_i32, %c0_i32_0 : i32, i32
  }
  func.func @transform_5(%arg0: i32) -> (i32, i32) {
    %c0_i32 = arith.constant 0 : i32
    %c0_i32_0 = arith.constant 0 : i32
    %c0_i32_1 = arith.constant 0 : i32
    return %c0_i32, %c0_i32_0 : i32, i32
  }
  func.func @transform_6(%arg0: i32) -> (i32, i32) {
    %c0_i32 = arith.constant 0 : i32
    %c0_i32_0 = arith.constant 0 : i32
    %c0_i32_1 = arith.constant 0 : i32
    return %c0_i32, %c0_i32_0 : i32, i32
  }
  func.func @transform_7(%arg0: i32) -> (i32, i32) {
    %c0_i32 = arith.constant 0 : i32
    %c0_i32_0 = arith.constant 0 : i32
    return %arg0, %c0_i32 : i32, i32
  }
}

</mosaic_0001>

<llo_original>
// kernel: simplest_net_forward.1
$region0: #{simplest_net_forward.1}
  #allocation0 [shape = 'u32[]', space=smem, size = 0x4, offset = 0x4, fixed_abs, tag = 'smem constant byte address 0x4 - core index']
  #allocation1 [shape = 'u32[144,128]{1,0:T(1,128)}', space=vmem, size = 0x12000, scoped, tag = 'internal scratch']
  #allocation2 [shape = 'f32[1,1]{1,0:T(1,128)S(1)}', space=vmem, size = 0x200, scoped, tag = 'scoped memory for simplest_net_forward.1']
  %s0 = inlined_call_operand.vmem [shape: bf16[2,2048], index: 0, kind: input, shape index: {}]
  %s1 = inlined_call_operand.vmem [shape: f32[2,1], index: 1, kind: input, shape index: {}]
  %s2 = inlined_call_operand.vmem [shape: bf16[2048,512], index: 2, kind: input, shape index: {}]
  %s3 = inlined_call_operand.vmem [shape: f32[1,512], index: 3, kind: input, shape index: {}]
  %s4 = inlined_call_operand.vmem [shape: f32[1,512], index: 4, kind: input, shape index: {}]
  %s5 = inlined_call_operand.vmem [shape: f32[1,512], index: 5, kind: input, shape index: {}]
  %s6 = inlined_call_operand.<no memory space> [shape: f32[1,1], index: 6, kind: input, shape index: {}]
  %s7 = inlined_call_operand.vmem [shape: f32[2,1], index: 7, kind: output, shape index: {}]
  %s8 = sld [smem:[#allocation0]]
  $region38: #{simplest_net_forward.1} parent=0
    _
  %s10 = ssub.s32 1, %s8
  %s11 = scalar_select 0, %s10, %s8
  %v12 = vstv %s6
  %13 = vst [vmem:[#allocation2] sm:$0x1] %v12
  // Predicated region
  $region2: #{simplest_net_forward.1} parent=0 // pred_check
    _
  $region3: #{simplest_net_forward.1} parent=0 // pred_check_branch
    %15 = sbr.rel (0) target = $region5
  $region4: #{simplest_net_forward.1} parent=0 // pred_region
    _
  $region5: #{simplest_net_forward.1} parent=0 // pred_fallthru
    _
  // Predicated region
  $region6: #{simplest_net_forward.1} parent=0 // pred_check
    _
  $region7: #{simplest_net_forward.1} parent=0 // pred_check_branch
    %17 = sbr.rel (0) target = $region9
  $region8: #{simplest_net_forward.1} parent=0 // pred_region
    _
  $region9: #{simplest_net_forward.1} parent=0 // pred_fallthru
    _
  // Predicated region
  $region10: #{simplest_net_forward.1} parent=0 // pred_check
    _
  $region11: #{simplest_net_forward.1} parent=0 // pred_check_branch
    %19 = sbr.rel (0) target = $region13
  $region12: #{simplest_net_forward.1} parent=0 // pred_region
    _
  $region13: #{simplest_net_forward.1} parent=0 // pred_fallthru
    _
  // Predicated region
  $region14: #{simplest_net_forward.1} parent=0 // pred_check
    _
  $region15: #{simplest_net_forward.1} parent=0 // pred_check_branch
    %21 = sbr.rel (0) target = $region17
  $region16: #{simplest_net_forward.1} parent=0 // pred_region
    _
  $region17: #{simplest_net_forward.1} parent=0 // pred_fallthru
    _
  // Predicated region
  $region18: #{simplest_net_forward.1} parent=0 // pred_check
    _
  $region19: #{simplest_net_forward.1} parent=0 // pred_check_branch
    %23 = sbr.rel (0) target = $region21
  $region20: #{simplest_net_forward.1} parent=0 // pred_region
    _
  $region21: #{simplest_net_forward.1} parent=0 // pred_fallthru
    _
  // Predicated region
  $region22: #{simplest_net_forward.1} parent=0 // pred_check
    _
  $region23: #{simplest_net_forward.1} parent=0 // pred_check_branch
    %25 = sbr.rel (0) target = $region25
  $region24: #{simplest_net_forward.1} parent=0 // pred_region
    _
  $region25: #{simplest_net_forward.1} parent=0 // pred_fallthru
    _
  // Predicated region
  $region26: #{simplest_net_forward.1} parent=0 // pred_check
    _
  $region27: #{simplest_net_forward.1} parent=0 // pred_check_branch
    %27 = sbr.rel (0) target = $region29
  $region28: #{simplest_net_forward.1} parent=0 // pred_region
    _
  $region29: #{simplest_net_forward.1} parent=0 // pred_fallthru
    _
  %v28 = vld [vmem:[%s0] sm:$0xff]
  %v29 = vld [vmem:[%s0 + $0x8] sm:$0xff]
  %v30 = vld [vmem:[%s2] sm:$0xff]
  %v31 = vld [vmem:[%s2 + $0x8] sm:$0xff]
  %v32 = vld [vmem:[%s2 + $0x10] sm:$0xff]
  %v33 = vld [vmem:[%s2 + $0x18] sm:$0xff]
  %v34 = vld [vmem:[%s2 + $0x20] sm:$0xff]
  %v35 = vld [vmem:[%s2 + $0x28] sm:$0xff]
  %v36 = vld [vmem:[%s2 + $0x30] sm:$0xff]
  %v37 = vld [vmem:[%s2 + $0x38] sm:$0xff]
  %v38 = vld [vmem:[%s2 + $0x40] sm:$0xff]
  %v39 = vld [vmem:[%s2 + $0x48] sm:$0xff]
  %v40 = vld [vmem:[%s2 + $0x50] sm:$0xff]
  %v41 = vld [vmem:[%s2 + $0x58] sm:$0xff]
  %v42 = vld [vmem:[%s2 + $0x60] sm:$0xff]
  %v43 = vld [vmem:[%s2 + $0x68] sm:$0xff]
  %v44 = vld [vmem:[%s2 + $0x70] sm:$0xff]
  %v45 = vld [vmem:[%s2 + $0x78] sm:$0xff]
  %v46 = vld [vmem:[%s2 + $0x80] sm:$0xff]
  %v47 = vld [vmem:[%s2 + $0x88] sm:$0xff]
  %v48 = vld [vmem:[%s2 + $0x90] sm:$0xff]
  %v49 = vld [vmem:[%s2 + $0x98] sm:$0xff]
  %v50 = vld [vmem:[%s2 + $0xa0] sm:$0xff]
  %v51 = vld [vmem:[%s2 + $0xa8] sm:$0xff]
  %v52 = vld [vmem:[%s2 + $0xb0] sm:$0xff]
  %v53 = vld [vmem:[%s2 + $0xb8] sm:$0xff]
  %v54 = vld [vmem:[%s2 + $0xc0] sm:$0xff]
  %v55 = vld [vmem:[%s2 + $0xc8] sm:$0xff]
  %v56 = vld [vmem:[%s2 + $0xd0] sm:$0xff]
  %v57 = vld [vmem:[%s2 + $0xd8] sm:$0xff]
  %v58 = vld [vmem:[%s2 + $0xe0] sm:$0xff]
  %v59 = vld [vmem:[%s2 + $0xe8] sm:$0xff]
  %v60 = vld [vmem:[%s2 + $0xf0] sm:$0xff]
  %v61 = vld [vmem:[%s2 + $0xf8] sm:$0xff]
  %v62 = vld [vmem:[%s2 + $0x100] sm:$0xff]
  %v63 = vld [vmem:[%s2 + $0x108] sm:$0xff]
  %v64 = vld [vmem:[%s2 + $0x110] sm:$0xff]
  %v65 = vld [vmem:[%s2 + $0x118] sm:$0xff]
  %v66 = vld [vmem:[%s2 + $0x120] sm:$0xff]
  %v67 = vld [vmem:[%s2 + $0x128] sm:$0xff]
  %v68 = vld [vmem:[%s2 + $0x130] sm:$0xff]
  %v69 = vld [vmem:[%s2 + $0x138] sm:$0xff]
  %v70 = vld [vmem:[%s2 + $0x140] sm:$0xff]
  %v71 = vld [vmem:[%s2 + $0x148] sm:$0xff]
  %v72 = vld [vmem:[%s2 + $0x150] sm:$0xff]
  %v73 = vld [vmem:[%s2 + $0x158] sm:$0xff]
  %v74 = vld [vmem:[%s2 + $0x160] sm:$0xff]
  %v75 = vld [vmem:[%s2 + $0x168] sm:$0xff]
  %v76 = vld [vmem:[%s2 + $0x170] sm:$0xff]
  %v77 = vld [vmem:[%s2 + $0x178] sm:$0xff]
  %v78 = vld [vmem:[%s2 + $0x180] sm:$0xff]
  %v79 = vld [vmem:[%s2 + $0x188] sm:$0xff]
  %v80 = vld [vmem:[%s2 + $0x190] sm:$0xff]
  %v81 = vld [vmem:[%s2 + $0x198] sm:$0xff]
  %v82 = vld [vmem:[%s2 + $0x1a0] sm:$0xff]
  %v83 = vld [vmem:[%s2 + $0x1a8] sm:$0xff]
  %v84 = vld [vmem:[%s2 + $0x1b0] sm:$0xff]
  %v85 = vld [vmem:[%s2 + $0x1b8] sm:$0xff]
  %v86 = vld [vmem:[%s2 + $0x1c0] sm:$0xff]
  %v87 = vld [vmem:[%s2 + $0x1c8] sm:$0xff]
  %v88 = vld [vmem:[%s2 + $0x1d0] sm:$0xff]
  %v89 = vld [vmem:[%s2 + $0x1d8] sm:$0xff]
  %v90 = vld [vmem:[%s2 + $0x1e0] sm:$0xff]
  %v91 = vld [vmem:[%s2 + $0x1e8] sm:$0xff]
  %v92 = vld [vmem:[%s2 + $0x1f0] sm:$0xff]
  %v93 = vld [vmem:[%s2 + $0x1f8] sm:$0xff]
  %v94 = vld [vmem:[%s2 + $0x200] sm:$0xff]
  %v95 = vld [vmem:[%s2 + $0x208] sm:$0xff]
  %v96 = vld [vmem:[%s2 + $0x210] sm:$0xff]
  %v97 = vld [vmem:[%s2 + $0x218] sm:$0xff]
  %v98 = vld [vmem:[%s2 + $0x220] sm:$0xff]
  %v99 = vld [vmem:[%s2 + $0x228] sm:$0xff]
  %v100 = vld [vmem:[%s2 + $0x230] sm:$0xff]
  %v101 = vld [vmem:[%s2 + $0x238] sm:$0xff]
  %v102 = vld [vmem:[%s2 + $0x240] sm:$0xff]
  %v103 = vld [vmem:[%s2 + $0x248] sm:$0xff]
  %v104 = vld [vmem:[%s2 + $0x250] sm:$0xff]
  %v105 = vld [vmem:[%s2 + $0x258] sm:$0xff]
  %v106 = vld [vmem:[%s2 + $0x260] sm:$0xff]
  %v107 = vld [vmem:[%s2 + $0x268] sm:$0xff]
  %v108 = vld [vmem:[%s2 + $0x270] sm:$0xff]
  %v109 = vld [vmem:[%s2 + $0x278] sm:$0xff]
  %v110 = vld [vmem:[%s2 + $0x280] sm:$0xff]
  %v111 = vld [vmem:[%s2 + $0x288] sm:$0xff]
  %v112 = vld [vmem:[%s2 + $0x290] sm:$0xff]
  %v113 = vld [vmem:[%s2 + $0x298] sm:$0xff]
  %v114 = vld [vmem:[%s2 + $0x2a0] sm:$0xff]
  %v115 = vld [vmem:[%s2 + $0x2a8] sm:$0xff]
  %v116 = vld [vmem:[%s2 + $0x2b0] sm:$0xff]
  %v117 = vld [vmem:[%s2 + $0x2b8] sm:$0xff]
  %v118 = vld [vmem:[%s2 + $0x2c0] sm:$0xff]
  %v119 = vld [vmem:[%s2 + $0x2c8] sm:$0xff]
  %v120 = vld [vmem:[%s2 + $0x2d0] sm:$0xff]
  %v121 = vld [vmem:[%s2 + $0x2d8] sm:$0xff]
  %v122 = vld [vmem:[%s2 + $0x2e0] sm:$0xff]
  %v123 = vld [vmem:[%s2 + $0x2e8] sm:$0xff]
  %v124 = vld [vmem:[%s2 + $0x2f0] sm:$0xff]
  %v125 = vld [vmem:[%s2 + $0x2f8] sm:$0xff]
  %v126 = vld [vmem:[%s2 + $0x300] sm:$0xff]
  %v127 = vld [vmem:[%s2 + $0x308] sm:$0xff]
  %v128 = vld [vmem:[%s2 + $0x310] sm:$0xff]
  %v129 = vld [vmem:[%s2 + $0x318] sm:$0xff]
  %v130 = vld [vmem:[%s2 + $0x320] sm:$0xff]
  %v131 = vld [vmem:[%s2 + $0x328] sm:$0xff]
  %v132 = vld [vmem:[%s2 + $0x330] sm:$0xff]
  %v133 = vld [vmem:[%s2 + $0x338] sm:$0xff]
  %v134 = vld [vmem:[%s2 + $0x340] sm:$0xff]
  %v135 = vld [vmem:[%s2 + $0x348] sm:$0xff]
  %v136 = vld [vmem:[%s2 + $0x350] sm:$0xff]
  %v137 = vld [vmem:[%s2 + $0x358] sm:$0xff]
  %v138 = vld [vmem:[%s2 + $0x360] sm:$0xff]
  %v139 = vld [vmem:[%s2 + $0x368] sm:$0xff]
  %v140 = vld [vmem:[%s2 + $0x370] sm:$0xff]
  %v141 = vld [vmem:[%s2 + $0x378] sm:$0xff]
  %v142 = vld [vmem:[%s2 + $0x380] sm:$0xff]
  %v143 = vld [vmem:[%s2 + $0x388] sm:$0xff]
  %v144 = vld [vmem:[%s2 + $0x390] sm:$0xff]
  %v145 = vld [vmem:[%s2 + $0x398] sm:$0xff]
  %v146 = vld [vmem:[%s2 + $0x3a0] sm:$0xff]
  %v147 = vld [vmem:[%s2 + $0x3a8] sm:$0xff]
  %v148 = vld [vmem:[%s2 + $0x3b0] sm:$0xff]
  %v149 = vld [vmem:[%s2 + $0x3b8] sm:$0xff]
  %v150 = vld [vmem:[%s2 + $0x3c0] sm:$0xff]
  %v151 = vld [vmem:[%s2 + $0x3c8] sm:$0xff]
  %v152 = vld [vmem:[%s2 + $0x3d0] sm:$0xff]
  %v153 = vld [vmem:[%s2 + $0x3d8] sm:$0xff]
  %v154 = vld [vmem:[%s2 + $0x3e0] sm:$0xff]
  %v155 = vld [vmem:[%s2 + $0x3e8] sm:$0xff]
  %v156 = vld [vmem:[%s2 + $0x3f0] sm:$0xff]
  %v157 = vld [vmem:[%s2 + $0x3f8] sm:$0xff]
  %v158 = vld [vmem:[%s2 + $0x400] sm:$0xff]
  %v159 = vld [vmem:[%s2 + $0x408] sm:$0xff]
  %v160 = vld [vmem:[%s2 + $0x410] sm:$0xff]
  %v161 = vld [vmem:[%s2 + $0x418] sm:$0xff]
  %v162 = vld [vmem:[%s2 + $0x420] sm:$0xff]
  %v163 = vld [vmem:[%s2 + $0x428] sm:$0xff]
  %v164 = vld [vmem:[%s2 + $0x430] sm:$0xff]
  %v165 = vld [vmem:[%s2 + $0x438] sm:$0xff]
  %v166 = vld [vmem:[%s2 + $0x440] sm:$0xff]
  %v167 = vld [vmem:[%s2 + $0x448] sm:$0xff]
  %v168 = vld [vmem:[%s2 + $0x450] sm:$0xff]
  %v169 = vld [vmem:[%s2 + $0x458] sm:$0xff]
  %v170 = vld [vmem:[%s2 + $0x460] sm:$0xff]
  %v171 = vld [vmem:[%s2 + $0x468] sm:$0xff]
  %v172 = vld [vmem:[%s2 + $0x470] sm:$0xff]
  %v173 = vld [vmem:[%s2 + $0x478] sm:$0xff]
  %v174 = vld [vmem:[%s2 + $0x480] sm:$0xff]
  %v175 = vld [vmem:[%s2 + $0x488] sm:$0xff]
  %v176 = vld [vmem:[%s2 + $0x490] sm:$0xff]
  %v177 = vld [vmem:[%s2 + $0x498] sm:$0xff]
  %v178 = vld [vmem:[%s2 + $0x4a0] sm:$0xff]
  %v179 = vld [vmem:[%s2 + $0x4a8] sm:$0xff]
  %v180 = vld [vmem:[%s2 + $0x4b0] sm:$0xff]
  %v181 = vld [vmem:[%s2 + $0x4b8] sm:$0xff]
  %v182 = vld [vmem:[%s2 + $0x4c0] sm:$0xff]
  %v183 = vld [vmem:[%s2 + $0x4c8] sm:$0xff]
  %v184 = vld [vmem:[%s2 + $0x4d0] sm:$0xff]
  %v185 = vld [vmem:[%s2 + $0x4d8] sm:$0xff]
  %v186 = vld [vmem:[%s2 + $0x4e0] sm:$0xff]
  %v187 = vld [vmem:[%s2 + $0x4e8] sm:$0xff]
  %v188 = vld [vmem:[%s2 + $0x4f0] sm:$0xff]
  %v189 = vld [vmem:[%s2 + $0x4f8] sm:$0xff]
  %v190 = vld [vmem:[%s2 + $0x500] sm:$0xff]
  %v191 = vld [vmem:[%s2 + $0x508] sm:$0xff]
  %v192 = vld [vmem:[%s2 + $0x510] sm:$0xff]
  %v193 = vld [vmem:[%s2 + $0x518] sm:$0xff]
  %v194 = vld [vmem:[%s2 + $0x520] sm:$0xff]
  %v195 = vld [vmem:[%s2 + $0x528] sm:$0xff]
  %v196 = vld [vmem:[%s2 + $0x530] sm:$0xff]
  %v197 = vld [vmem:[%s2 + $0x538] sm:$0xff]
  %v198 = vld [vmem:[%s2 + $0x540] sm:$0xff]
  %v199 = vld [vmem:[%s2 + $0x548] sm:$0xff]
  %v200 = vld [vmem:[%s2 + $0x550] sm:$0xff]
  %v201 = vld [vmem:[%s2 + $0x558] sm:$0xff]
  %v202 = vld [vmem:[%s2 + $0x560] sm:$0xff]
  %v203 = vld [vmem:[%s2 + $0x568] sm:$0xff]
  %v204 = vld [vmem:[%s2 + $0x570] sm:$0xff]
  %v205 = vld [vmem:[%s2 + $0x578] sm:$0xff]
  %v206 = vld [vmem:[%s2 + $0x580] sm:$0xff]
  %v207 = vld [vmem:[%s2 + $0x588] sm:$0xff]
  %v208 = vld [vmem:[%s2 + $0x590] sm:$0xff]
  %v209 = vld [vmem:[%s2 + $0x598] sm:$0xff]
  %v210 = vld [vmem:[%s2 + $0x5a0] sm:$0xff]
  %v211 = vld [vmem:[%s2 + $0x5a8] sm:$0xff]
  %v212 = vld [vmem:[%s2 + $0x5b0] sm:$0xff]
  %v213 = vld [vmem:[%s2 + $0x5b8] sm:$0xff]
  %v214 = vld [vmem:[%s2 + $0x5c0] sm:$0xff]
  %v215 = vld [vmem:[%s2 + $0x5c8] sm:$0xff]
  %v216 = vld [vmem:[%s2 + $0x5d0] sm:$0xff]
  %v217 = vld [vmem:[%s2 + $0x5d8] sm:$0xff]
  %v218 = vld [vmem:[%s2 + $0x5e0] sm:$0xff]
  %v219 = vld [vmem:[%s2 + $0x5e8] sm:$0xff]
  %v220 = vld [vmem:[%s2 + $0x5f0] sm:$0xff]
  %v221 = vld [vmem:[%s2 + $0x5f8] sm:$0xff]
  %v222 = vld [vmem:[%s2 + $0x600] sm:$0xff]
  %v223 = vld [vmem:[%s2 + $0x608] sm:$0xff]
  %v224 = vld [vmem:[%s2 + $0x610] sm:$0xff]
  %v225 = vld [vmem:[%s2 + $0x618] sm:$0xff]
  %v226 = vld [vmem:[%s2 + $0x620] sm:$0xff]
  %v227 = vld [vmem:[%s2 + $0x628] sm:$0xff]
  %v228 = vld [vmem:[%s2 + $0x630] sm:$0xff]
  %v229 = vld [vmem:[%s2 + $0x638] sm:$0xff]
  %v230 = vld [vmem:[%s2 + $0x640] sm:$0xff]
  %v231 = vld [vmem:[%s2 + $0x648] sm:$0xff]
  %v232 = vld [vmem:[%s2 + $0x650] sm:$0xff]
  %v233 = vld [vmem:[%s2 + $0x658] sm:$0xff]
  %v234 = vld [vmem:[%s2 + $0x660] sm:$0xff]
  %v235 = vld [vmem:[%s2 + $0x668] sm:$0xff]
  %v236 = vld [vmem:[%s2 + $0x670] sm:$0xff]
  %v237 = vld [vmem:[%s2 + $0x678] sm:$0xff]
  %v238 = vld [vmem:[%s2 + $0x680] sm:$0xff]
  %v239 = vld [vmem:[%s2 + $0x688] sm:$0xff]
  %v240 = vld [vmem:[%s2 + $0x690] sm:$0xff]
  %v241 = vld [vmem:[%s2 + $0x698] sm:$0xff]
  %v242 = vld [vmem:[%s2 + $0x6a0] sm:$0xff]
  %v243 = vld [vmem:[%s2 + $0x6a8] sm:$0xff]
  %v244 = vld [vmem:[%s2 + $0x6b0] sm:$0xff]
  %v245 = vld [vmem:[%s2 + $0x6b8] sm:$0xff]
  %v246 = vld [vmem:[%s2 + $0x6c0] sm:$0xff]
  %v247 = vld [vmem:[%s2 + $0x6c8] sm:$0xff]
  %v248 = vld [vmem:[%s2 + $0x6d0] sm:$0xff]
  %v249 = vld [vmem:[%s2 + $0x6d8] sm:$0xff]
  %v250 = vld [vmem:[%s2 + $0x6e0] sm:$0xff]
  %v251 = vld [vmem:[%s2 + $0x6e8] sm:$0xff]
  %v252 = vld [vmem:[%s2 + $0x6f0] sm:$0xff]
  %v253 = vld [vmem:[%s2 + $0x6f8] sm:$0xff]
  %v254 = vld [vmem:[%s2 + $0x700] sm:$0xff]
  %v255 = vld [vmem:[%s2 + $0x708] sm:$0xff]
  %v256 = vld [vmem:[%s2 + $0x710] sm:$0xff]
  %v257 = vld [vmem:[%s2 + $0x718] sm:$0xff]
  %v258 = vld [vmem:[%s2 + $0x720] sm:$0xff]
  %v259 = vld [vmem:[%s2 + $0x728] sm:$0xff]
  %v260 = vld [vmem:[%s2 + $0x730] sm:$0xff]
  %v261 = vld [vmem:[%s2 + $0x738] sm:$0xff]
  %v262 = vld [vmem:[%s2 + $0x740] sm:$0xff]
  %v263 = vld [vmem:[%s2 + $0x748] sm:$0xff]
  %v264 = vld [vmem:[%s2 + $0x750] sm:$0xff]
  %v265 = vld [vmem:[%s2 + $0x758] sm:$0xff]
  %v266 = vld [vmem:[%s2 + $0x760] sm:$0xff]
  %v267 = vld [vmem:[%s2 + $0x768] sm:$0xff]
  %v268 = vld [vmem:[%s2 + $0x770] sm:$0xff]
  %v269 = vld [vmem:[%s2 + $0x778] sm:$0xff]
  %v270 = vld [vmem:[%s2 + $0x780] sm:$0xff]
  %v271 = vld [vmem:[%s2 + $0x788] sm:$0xff]
  %v272 = vld [vmem:[%s2 + $0x790] sm:$0xff]
  %v273 = vld [vmem:[%s2 + $0x798] sm:$0xff]
  %v274 = vld [vmem:[%s2 + $0x7a0] sm:$0xff]
  %v275 = vld [vmem:[%s2 + $0x7a8] sm:$0xff]
  %v276 = vld [vmem:[%s2 + $0x7b0] sm:$0xff]
  %v277 = vld [vmem:[%s2 + $0x7b8] sm:$0xff]
  %v278 = vld [vmem:[%s2 + $0x7c0] sm:$0xff]
  %v279 = vld [vmem:[%s2 + $0x7c8] sm:$0xff]
  %v280 = vld [vmem:[%s2 + $0x7d0] sm:$0xff]
  %v281 = vld [vmem:[%s2 + $0x7d8] sm:$0xff]
  %v282 = vld [vmem:[%s2 + $0x7e0] sm:$0xff]
  %v283 = vld [vmem:[%s2 + $0x7e8] sm:$0xff]
  %v284 = vld [vmem:[%s2 + $0x7f0] sm:$0xff]
  %v285 = vld [vmem:[%s2 + $0x7f8] sm:$0xff]
  %v286 = vld [vmem:[%s2 + $0x800] sm:$0xff]
  %v287 = vld [vmem:[%s2 + $0x808] sm:$0xff]
  %v288 = vld [vmem:[%s2 + $0x810] sm:$0xff]
  %v289 = vld [vmem:[%s2 + $0x818] sm:$0xff]
  %v290 = vld [vmem:[%s2 + $0x820] sm:$0xff]
  %v291 = vld [vmem:[%s2 + $0x828] sm:$0xff]
  %v292 = vld [vmem:[%s2 + $0x830] sm:$0xff]
  %v293 = vld [vmem:[%s2 + $0x838] sm:$0xff]
  %v294 = vld [vmem:[%s2 + $0x840] sm:$0xff]
  %v295 = vld [vmem:[%s2 + $0x848] sm:$0xff]
  %v296 = vld [vmem:[%s2 + $0x850] sm:$0xff]
  %v297 = vld [vmem:[%s2 + $0x858] sm:$0xff]
  %v298 = vld [vmem:[%s2 + $0x860] sm:$0xff]
  %v299 = vld [vmem:[%s2 + $0x868] sm:$0xff]
  %v300 = vld [vmem:[%s2 + $0x870] sm:$0xff]
  %v301 = vld [vmem:[%s2 + $0x878] sm:$0xff]
  %v302 = vld [vmem:[%s2 + $0x880] sm:$0xff]
  %v303 = vld [vmem:[%s2 + $0x888] sm:$0xff]
  %v304 = vld [vmem:[%s2 + $0x890] sm:$0xff]
  %v305 = vld [vmem:[%s2 + $0x898] sm:$0xff]
  %v306 = vld [vmem:[%s2 + $0x8a0] sm:$0xff]
  %v307 = vld [vmem:[%s2 + $0x8a8] sm:$0xff]
  %v308 = vld [vmem:[%s2 + $0x8b0] sm:$0xff]
  %v309 = vld [vmem:[%s2 + $0x8b8] sm:$0xff]
  %v310 = vld [vmem:[%s2 + $0x8c0] sm:$0xff]
  %v311 = vld [vmem:[%s2 + $0x8c8] sm:$0xff]
  %v312 = vld [vmem:[%s2 + $0x8d0] sm:$0xff]
  %v313 = vld [vmem:[%s2 + $0x8d8] sm:$0xff]
  %v314 = vld [vmem:[%s2 + $0x8e0] sm:$0xff]
  %v315 = vld [vmem:[%s2 + $0x8e8] sm:$0xff]
  %v316 = vld [vmem:[%s2 + $0x8f0] sm:$0xff]
  %v317 = vld [vmem:[%s2 + $0x8f8] sm:$0xff]
  %v318 = vld [vmem:[%s2 + $0x900] sm:$0xff]
  %v319 = vld [vmem:[%s2 + $0x908] sm:$0xff]
  %v320 = vld [vmem:[%s2 + $0x910] sm:$0xff]
  %v321 = vld [vmem:[%s2 + $0x918] sm:$0xff]
  %v322 = vld [vmem:[%s2 + $0x920] sm:$0xff]
  %v323 = vld [vmem:[%s2 + $0x928] sm:$0xff]
  %v324 = vld [vmem:[%s2 + $0x930] sm:$0xff]
  %v325 = vld [vmem:[%s2 + $0x938] sm:$0xff]
  %v326 = vld [vmem:[%s2 + $0x940] sm:$0xff]
  %v327 = vld [vmem:[%s2 + $0x948] sm:$0xff]
  %v328 = vld [vmem:[%s2 + $0x950] sm:$0xff]
  %v329 = vld [vmem:[%s2 + $0x958] sm:$0xff]
  %v330 = vld [vmem:[%s2 + $0x960] sm:$0xff]
  %v331 = vld [vmem:[%s2 + $0x968] sm:$0xff]
  %v332 = vld [vmem:[%s2 + $0x970] sm:$0xff]
  %v333 = vld [vmem:[%s2 + $0x978] sm:$0xff]
  %v334 = vld [vmem:[%s2 + $0x980] sm:$0xff]
  %v335 = vld [vmem:[%s2 + $0x988] sm:$0xff]
  %v336 = vld [vmem:[%s2 + $0x990] sm:$0xff]
  %v337 = vld [vmem:[%s2 + $0x998] sm:$0xff]
  %v338 = vld [vmem:[%s2 + $0x9a0] sm:$0xff]
  %v339 = vld [vmem:[%s2 + $0x9a8] sm:$0xff]
  %v340 = vld [vmem:[%s2 + $0x9b0] sm:$0xff]
  %v341 = vld [vmem:[%s2 + $0x9b8] sm:$0xff]
  %v342 = vld [vmem:[%s2 + $0x9c0] sm:$0xff]
  %v343 = vld [vmem:[%s2 + $0x9c8] sm:$0xff]
  %v344 = vld [vmem:[%s2 + $0x9d0] sm:$0xff]
  %v345 = vld [vmem:[%s2 + $0x9d8] sm:$0xff]
  %v346 = vld [vmem:[%s2 + $0x9e0] sm:$0xff]
  %v347 = vld [vmem:[%s2 + $0x9e8] sm:$0xff]
  %v348 = vld [vmem:[%s2 + $0x9f0] sm:$0xff]
  %v349 = vld [vmem:[%s2 + $0x9f8] sm:$0xff]
  %v350 = vld [vmem:[%s2 + $0xa00] sm:$0xff]
  %v351 = vld [vmem:[%s2 + $0xa08] sm:$0xff]
  %v352 = vld [vmem:[%s2 + $0xa10] sm:$0xff]
  %v353 = vld [vmem:[%s2 + $0xa18] sm:$0xff]
  %v354 = vld [vmem:[%s2 + $0xa20] sm:$0xff]
  %v355 = vld [vmem:[%s2 + $0xa28] sm:$0xff]
  %v356 = vld [vmem:[%s2 + $0xa30] sm:$0xff]
  %v357 = vld [vmem:[%s2 + $0xa38] sm:$0xff]
  %v358 = vld [vmem:[%s2 + $0xa40] sm:$0xff]
  %v359 = vld [vmem:[%s2 + $0xa48] sm:$0xff]
  %v360 = vld [vmem:[%s2 + $0xa50] sm:$0xff]
  %v361 = vld [vmem:[%s2 + $0xa58] sm:$0xff]
  %v362 = vld [vmem:[%s2 + $0xa60] sm:$0xff]
  %v363 = vld [vmem:[%s2 + $0xa68] sm:$0xff]
  %v364 = vld [vmem:[%s2 + $0xa70] sm:$0xff]
  %v365 = vld [vmem:[%s2 + $0xa78] sm:$0xff]
  %v366 = vld [vmem:[%s2 + $0xa80] sm:$0xff]
  %v367 = vld [vmem:[%s2 + $0xa88] sm:$0xff]
  %v368 = vld [vmem:[%s2 + $0xa90] sm:$0xff]
  %v369 = vld [vmem:[%s2 + $0xa98] sm:$0xff]
  %v370 = vld [vmem:[%s2 + $0xaa0] sm:$0xff]
  %v371 = vld [vmem:[%s2 + $0xaa8] sm:$0xff]
  %v372 = vld [vmem:[%s2 + $0xab0] sm:$0xff]
  %v373 = vld [vmem:[%s2 + $0xab8] sm:$0xff]
  %v374 = vld [vmem:[%s2 + $0xac0] sm:$0xff]
  %v375 = vld [vmem:[%s2 + $0xac8] sm:$0xff]
  %v376 = vld [vmem:[%s2 + $0xad0] sm:$0xff]
  %v377 = vld [vmem:[%s2 + $0xad8] sm:$0xff]
  %v378 = vld [vmem:[%s2 + $0xae0] sm:$0xff]
  %v379 = vld [vmem:[%s2 + $0xae8] sm:$0xff]
  %v380 = vld [vmem:[%s2 + $0xaf0] sm:$0xff]
  %v381 = vld [vmem:[%s2 + $0xaf8] sm:$0xff]
  %v382 = vld [vmem:[%s2 + $0xb00] sm:$0xff]
  %v383 = vld [vmem:[%s2 + $0xb08] sm:$0xff]
  %v384 = vld [vmem:[%s2 + $0xb10] sm:$0xff]
  %v385 = vld [vmem:[%s2 + $0xb18] sm:$0xff]
  %v386 = vld [vmem:[%s2 + $0xb20] sm:$0xff]
  %v387 = vld [vmem:[%s2 + $0xb28] sm:$0xff]
  %v388 = vld [vmem:[%s2 + $0xb30] sm:$0xff]
  %v389 = vld [vmem:[%s2 + $0xb38] sm:$0xff]
  %v390 = vld [vmem:[%s2 + $0xb40] sm:$0xff]
  %v391 = vld [vmem:[%s2 + $0xb48] sm:$0xff]
  %v392 = vld [vmem:[%s2 + $0xb50] sm:$0xff]
  %v393 = vld [vmem:[%s2 + $0xb58] sm:$0xff]
  %v394 = vld [vmem:[%s2 + $0xb60] sm:$0xff]
  %v395 = vld [vmem:[%s2 + $0xb68] sm:$0xff]
  %v396 = vld [vmem:[%s2 + $0xb70] sm:$0xff]
  %v397 = vld [vmem:[%s2 + $0xb78] sm:$0xff]
  %v398 = vld [vmem:[%s2 + $0xb80] sm:$0xff]
  %v399 = vld [vmem:[%s2 + $0xb88] sm:$0xff]
  %v400 = vld [vmem:[%s2 + $0xb90] sm:$0xff]
  %v401 = vld [vmem:[%s2 + $0xb98] sm:$0xff]
  %v402 = vld [vmem:[%s2 + $0xba0] sm:$0xff]
  %v403 = vld [vmem:[%s2 + $0xba8] sm:$0xff]
  %v404 = vld [vmem:[%s2 + $0xbb0] sm:$0xff]
  %v405 = vld [vmem:[%s2 + $0xbb8] sm:$0xff]
  %v406 = vld [vmem:[%s2 + $0xbc0] sm:$0xff]
  %v407 = vld [vmem:[%s2 + $0xbc8] sm:$0xff]
  %v408 = vld [vmem:[%s2 + $0xbd0] sm:$0xff]
  %v409 = vld [vmem:[%s2 + $0xbd8] sm:$0xff]
  %v410 = vld [vmem:[%s2 + $0xbe0] sm:$0xff]
  %v411 = vld [vmem:[%s2 + $0xbe8] sm:$0xff]
  %v412 = vld [vmem:[%s2 + $0xbf0] sm:$0xff]
  %v413 = vld [vmem:[%s2 + $0xbf8] sm:$0xff]
  %v414 = vld [vmem:[%s2 + $0xc00] sm:$0xff]
  %v415 = vld [vmem:[%s2 + $0xc08] sm:$0xff]
  %v416 = vld [vmem:[%s2 + $0xc10] sm:$0xff]
  %v417 = vld [vmem:[%s2 + $0xc18] sm:$0xff]
  %v418 = vld [vmem:[%s2 + $0xc20] sm:$0xff]
  %v419 = vld [vmem:[%s2 + $0xc28] sm:$0xff]
  %v420 = vld [vmem:[%s2 + $0xc30] sm:$0xff]
  %v421 = vld [vmem:[%s2 + $0xc38] sm:$0xff]
  %v422 = vld [vmem:[%s2 + $0xc40] sm:$0xff]
  %v423 = vld [vmem:[%s2 + $0xc48] sm:$0xff]
  %v424 = vld [vmem:[%s2 + $0xc50] sm:$0xff]
  %v425 = vld [vmem:[%s2 + $0xc58] sm:$0xff]
  %v426 = vld [vmem:[%s2 + $0xc60] sm:$0xff]
  %v427 = vld [vmem:[%s2 + $0xc68] sm:$0xff]
  %v428 = vld [vmem:[%s2 + $0xc70] sm:$0xff]
  %v429 = vld [vmem:[%s2 + $0xc78] sm:$0xff]
  %v430 = vld [vmem:[%s2 + $0xc80] sm:$0xff]
  %v431 = vld [vmem:[%s2 + $0xc88] sm:$0xff]
  %v432 = vld [vmem:[%s2 + $0xc90] sm:$0xff]
  %v433 = vld [vmem:[%s2 + $0xc98] sm:$0xff]
  %v434 = vld [vmem:[%s2 + $0xca0] sm:$0xff]
  %v435 = vld [vmem:[%s2 + $0xca8] sm:$0xff]
  %v436 = vld [vmem:[%s2 + $0xcb0] sm:$0xff]
  %v437 = vld [vmem:[%s2 + $0xcb8] sm:$0xff]
  %v438 = vld [vmem:[%s2 + $0xcc0] sm:$0xff]
  %v439 = vld [vmem:[%s2 + $0xcc8] sm:$0xff]
  %v440 = vld [vmem:[%s2 + $0xcd0] sm:$0xff]
  %v441 = vld [vmem:[%s2 + $0xcd8] sm:$0xff]
  %v442 = vld [vmem:[%s2 + $0xce0] sm:$0xff]
  %v443 = vld [vmem:[%s2 + $0xce8] sm:$0xff]
  %v444 = vld [vmem:[%s2 + $0xcf0] sm:$0xff]
  %v445 = vld [vmem:[%s2 + $0xcf8] sm:$0xff]
  %v446 = vld [vmem:[%s2 + $0xd00] sm:$0xff]
  %v447 = vld [vmem:[%s2 + $0xd08] sm:$0xff]
  %v448 = vld [vmem:[%s2 + $0xd10] sm:$0xff]
  %v449 = vld [vmem:[%s2 + $0xd18] sm:$0xff]
  %v450 = vld [vmem:[%s2 + $0xd20] sm:$0xff]
  %v451 = vld [vmem:[%s2 + $0xd28] sm:$0xff]
  %v452 = vld [vmem:[%s2 + $0xd30] sm:$0xff]
  %v453 = vld [vmem:[%s2 + $0xd38] sm:$0xff]
  %v454 = vld [vmem:[%s2 + $0xd40] sm:$0xff]
  %v455 = vld [vmem:[%s2 + $0xd48] sm:$0xff]
  %v456 = vld [vmem:[%s2 + $0xd50] sm:$0xff]
  %v457 = vld [vmem:[%s2 + $0xd58] sm:$0xff]
  %v458 = vld [vmem:[%s2 + $0xd60] sm:$0xff]
  %v459 = vld [vmem:[%s2 + $0xd68] sm:$0xff]
  %v460 = vld [vmem:[%s2 + $0xd70] sm:$0xff]
  %v461 = vld [vmem:[%s2 + $0xd78] sm:$0xff]
  %v462 = vld [vmem:[%s2 + $0xd80] sm:$0xff]
  %v463 = vld [vmem:[%s2 + $0xd88] sm:$0xff]
  %v464 = vld [vmem:[%s2 + $0xd90] sm:$0xff]
  %v465 = vld [vmem:[%s2 + $0xd98] sm:$0xff]
  %v466 = vld [vmem:[%s2 + $0xda0] sm:$0xff]
  %v467 = vld [vmem:[%s2 + $0xda8] sm:$0xff]
  %v468 = vld [vmem:[%s2 + $0xdb0] sm:$0xff]
  %v469 = vld [vmem:[%s2 + $0xdb8] sm:$0xff]
  %v470 = vld [vmem:[%s2 + $0xdc0] sm:$0xff]
  %v471 = vld [vmem:[%s2 + $0xdc8] sm:$0xff]
  %v472 = vld [vmem:[%s2 + $0xdd0] sm:$0xff]
  %v473 = vld [vmem:[%s2 + $0xdd8] sm:$0xff]
  %v474 = vld [vmem:[%s2 + $0xde0] sm:$0xff]
  %v475 = vld [vmem:[%s2 + $0xde8] sm:$0xff]
  %v476 = vld [vmem:[%s2 + $0xdf0] sm:$0xff]
  %v477 = vld [vmem:[%s2 + $0xdf8] sm:$0xff]
  %v478 = vld [vmem:[%s2 + $0xe00] sm:$0xff]
  %v479 = vld [vmem:[%s2 + $0xe08] sm:$0xff]
  %v480 = vld [vmem:[%s2 + $0xe10] sm:$0xff]
  %v481 = vld [vmem:[%s2 + $0xe18] sm:$0xff]
  %v482 = vld [vmem:[%s2 + $0xe20] sm:$0xff]
  %v483 = vld [vmem:[%s2 + $0xe28] sm:$0xff]
  %v484 = vld [vmem:[%s2 + $0xe30] sm:$0xff]
  %v485 = vld [vmem:[%s2 + $0xe38] sm:$0xff]
  %v486 = vld [vmem:[%s2 + $0xe40] sm:$0xff]
  %v487 = vld [vmem:[%s2 + $0xe48] sm:$0xff]
  %v488 = vld [vmem:[%s2 + $0xe50] sm:$0xff]
  %v489 = vld [vmem:[%s2 + $0xe58] sm:$0xff]
  %v490 = vld [vmem:[%s2 + $0xe60] sm:$0xff]
  %v491 = vld [vmem:[%s2 + $0xe68] sm:$0xff]
  %v492 = vld [vmem:[%s2 + $0xe70] sm:$0xff]
  %v493 = vld [vmem:[%s2 + $0xe78] sm:$0xff]
  %v494 = vld [vmem:[%s2 + $0xe80] sm:$0xff]
  %v495 = vld [vmem:[%s2 + $0xe88] sm:$0xff]
  %v496 = vld [vmem:[%s2 + $0xe90] sm:$0xff]
  %v497 = vld [vmem:[%s2 + $0xe98] sm:$0xff]
  %v498 = vld [vmem:[%s2 + $0xea0] sm:$0xff]
  %v499 = vld [vmem:[%s2 + $0xea8] sm:$0xff]
  %v500 = vld [vmem:[%s2 + $0xeb0] sm:$0xff]
  %v501 = vld [vmem:[%s2 + $0xeb8] sm:$0xff]
  %v502 = vld [vmem:[%s2 + $0xec0] sm:$0xff]
  %v503 = vld [vmem:[%s2 + $0xec8] sm:$0xff]
  %v504 = vld [vmem:[%s2 + $0xed0] sm:$0xff]
  %v505 = vld [vmem:[%s2 + $0xed8] sm:$0xff]
  %v506 = vld [vmem:[%s2 + $0xee0] sm:$0xff]
  %v507 = vld [vmem:[%s2 + $0xee8] sm:$0xff]
  %v508 = vld [vmem:[%s2 + $0xef0] sm:$0xff]
  %v509 = vld [vmem:[%s2 + $0xef8] sm:$0xff]
  %v510 = vld [vmem:[%s2 + $0xf00] sm:$0xff]
  %v511 = vld [vmem:[%s2 + $0xf08] sm:$0xff]
  %v512 = vld [vmem:[%s2 + $0xf10] sm:$0xff]
  %v513 = vld [vmem:[%s2 + $0xf18] sm:$0xff]
  %v514 = vld [vmem:[%s2 + $0xf20] sm:$0xff]
  %v515 = vld [vmem:[%s2 + $0xf28] sm:$0xff]
  %v516 = vld [vmem:[%s2 + $0xf30] sm:$0xff]
  %v517 = vld [vmem:[%s2 + $0xf38] sm:$0xff]
  %v518 = vld [vmem:[%s2 + $0xf40] sm:$0xff]
  %v519 = vld [vmem:[%s2 + $0xf48] sm:$0xff]
  %v520 = vld [vmem:[%s2 + $0xf50] sm:$0xff]
  %v521 = vld [vmem:[%s2 + $0xf58] sm:$0xff]
  %v522 = vld [vmem:[%s2 + $0xf60] sm:$0xff]
  %v523 = vld [vmem:[%s2 + $0xf68] sm:$0xff]
  %v524 = vld [vmem:[%s2 + $0xf70] sm:$0xff]
  %v525 = vld [vmem:[%s2 + $0xf78] sm:$0xff]
  %v526 = vld [vmem:[%s2 + $0xf80] sm:$0xff]
  %v527 = vld [vmem:[%s2 + $0xf88] sm:$0xff]
  %v528 = vld [vmem:[%s2 + $0xf90] sm:$0xff]
  %v529 = vld [vmem:[%s2 + $0xf98] sm:$0xff]
  %v530 = vld [vmem:[%s2 + $0xfa0] sm:$0xff]
  %v531 = vld [vmem:[%s2 + $0xfa8] sm:$0xff]
  %v532 = vld [vmem:[%s2 + $0xfb0] sm:$0xff]
  %v533 = vld [vmem:[%s2 + $0xfb8] sm:$0xff]
  %v534 = vld [vmem:[%s2 + $0xfc0] sm:$0xff]
  %v535 = vld [vmem:[%s2 + $0xfc8] sm:$0xff]
  %v536 = vld [vmem:[%s2 + $0xfd0] sm:$0xff]
  %v537 = vld [vmem:[%s2 + $0xfd8] sm:$0xff]
  %v538 = vld [vmem:[%s2 + $0xfe0] sm:$0xff]
  %v539 = vld [vmem:[%s2 + $0xfe8] sm:$0xff]
  %v540 = vld [vmem:[%s2 + $0xff0] sm:$0xff]
  %v541 = vld [vmem:[%s2 + $0xff8] sm:$0xff]
  %v542 = vld [vmem:[%s1] sm:$0x3]
  %v543 = vld [vmem:[%s3] sm:$0xf]
  %545 = vset.pattern.permute.xlu0 0
  %546 = vperm.xlu0 %545, %v542
  %v547 = vpop.permute.xlu0 %546
  %v550 = vlaneseq
  %v551 = vshrl.u32 %v550, 7
  %v552 = vsub.s32 0, %v551
  %v553 = vrot.slane %v543, %v552
  %v554 = vlaneseq
  %v555 = vshrl.u32 %v554, 7
  %v556 = vsub.s32 1, %v555
  %v557 = vrot.slane %v543, %v556
  %v558 = vlaneseq
  %v559 = vshrl.u32 %v558, 7
  %v560 = vsub.s32 2, %v559
  %v561 = vrot.slane %v543, %v560
  %v562 = vlaneseq
  %v563 = vshrl.u32 %v562, 7
  %v564 = vsub.s32 3, %v563
  %v565 = vrot.slane %v543, %v564
  %v570 = vmul.f32 %v547, %v553
  %v571 = vmul.f32 %v547, %v557
  %v572 = vmul.f32 %v547, %v561
  %v573 = vmul.f32 %v547, %v565
  %v576 = vcombine.high %v28, %v28
  %v578 = vunpack.c.l.s4 1966171168
  %v579 = vunpack.c.0.s8 %v578
  %v580 = vlaneseq
  %v581 = vshrl.u32 %v580, 7
  %v582 = vsub.s32 %v579, %v581
  %v583 = vrot.slane %v28, %v582
  %v585 = vunpack.c.l.s4 1966171168
  %v586 = vunpack.c.0.s8 %v585
  %v587 = vlaneseq
  %v588 = vshrl.u32 %v587, 7
  %v589 = vsub.s32 %v586, %v588
  %v590 = vrot.slane %v576, %v589
  %v591 = vcombine.high %v583, %v583
  %v592 = vcombine.high %v590, %v590
  %v594 = vunpack.c.l.s4 1966171168
  %v595 = vunpack.c.0.s8 %v594
  %v596 = vlaneseq
  %v597 = vshrl.u32 %v596, 7
  %v598 = vsub.s32 %v595, %v597
  %v599 = vrot.slane %v583, %v598
  %v601 = vunpack.c.l.s4 1966171168
  %v602 = vunpack.c.0.s8 %v601
  %v603 = vlaneseq
  %v604 = vshrl.u32 %v603, 7
  %v605 = vsub.s32 %v602, %v604
  %v606 = vrot.slane %v590, %v605
  %v608 = vunpack.c.l.s4 1966171168
  %v609 = vunpack.c.0.s8 %v608
  %v610 = vlaneseq
  %v611 = vshrl.u32 %v610, 7
  %v612 = vsub.s32 %v609, %v611
  %v613 = vrot.slane %v591, %v612
  %v615 = vunpack.c.l.s4 1966171168
  %v616 = vunpack.c.0.s8 %v615
  %v617 = vlaneseq
  %v618 = vshrl.u32 %v617, 7
  %v619 = vsub.s32 %v616, %v618
  %v620 = vrot.slane %v592, %v619
  %v621 = vcombine.high %v599, %v599
  %v622 = vcombine.high %v606, %v606
  %v623 = vcombine.high %v613, %v613
  %v624 = vcombine.high %v620, %v620
  %v625 = vcombine.high %v29, %v29
  %v627 = vunpack.c.l.s4 1966171168
  %v628 = vunpack.c.0.s8 %v627
  %v629 = vlaneseq
  %v630 = vshrl.u32 %v629, 7
  %v631 = vsub.s32 %v628, %v630
  %v632 = vrot.slane %v29, %v631
  %v634 = vunpack.c.l.s4 1966171168
  %v635 = vunpack.c.0.s8 %v634
  %v636 = vlaneseq
  %v637 = vshrl.u32 %v636, 7
  %v638 = vsub.s32 %v635, %v637
  %v639 = vrot.slane %v625, %v638
  %v640 = vcombine.high %v632, %v632
  %v641 = vcombine.high %v639, %v639
  %v643 = vunpack.c.l.s4 1966171168
  %v644 = vunpack.c.0.s8 %v643
  %v645 = vlaneseq
  %v646 = vshrl.u32 %v645, 7
  %v647 = vsub.s32 %v644, %v646
  %v648 = vrot.slane %v632, %v647
  %v650 = vunpack.c.l.s4 1966171168
  %v651 = vunpack.c.0.s8 %v650
  %v652 = vlaneseq
  %v653 = vshrl.u32 %v652, 7
  %v654 = vsub.s32 %v651, %v653
  %v655 = vrot.slane %v639, %v654
  %v657 = vunpack.c.l.s4 1966171168
  %v658 = vunpack.c.0.s8 %v657
  %v659 = vlaneseq
  %v660 = vshrl.u32 %v659, 7
  %v661 = vsub.s32 %v658, %v660
  %v662 = vrot.slane %v640, %v661
  %v664 = vunpack.c.l.s4 1966171168
  %v665 = vunpack.c.0.s8 %v664
  %v666 = vlaneseq
  %v667 = vshrl.u32 %v666, 7
  %v668 = vsub.s32 %v665, %v667
  %v669 = vrot.slane %v641, %v668
  %v670 = vcombine.high %v648, %v648
  %v671 = vcombine.high %v655, %v655
  %v672 = vcombine.high %v662, %v662
  %v673 = vcombine.high %v669, %v669
  %v1202 = vunpack.c.l.b16 %v30
  %v1203 = vunpack.c.h.b16 %v30
  %v1204 = vunpack.c.l.b16 %v31
  %v1205 = vunpack.c.h.b16 %v31
  %v1206 = vunpack.c.l.b16 %v32
  %v1207 = vunpack.c.h.b16 %v32
  %v1208 = vunpack.c.l.b16 %v33
  %v1209 = vunpack.c.h.b16 %v33
  %v1210 = vunpack.c.l.b16 %v34
  %v1211 = vunpack.c.h.b16 %v34
  %v1212 = vunpack.c.l.b16 %v35
  %v1213 = vunpack.c.h.b16 %v35
  %v1214 = vunpack.c.l.b16 %v36
  %v1215 = vunpack.c.h.b16 %v36
  %v1216 = vunpack.c.l.b16 %v37
  %v1217 = vunpack.c.h.b16 %v37
  %v1218 = vunpack.c.l.b16 %v38
  %v1219 = vunpack.c.h.b16 %v38
  %v1220 = vunpack.c.l.b16 %v39
  %v1221 = vunpack.c.h.b16 %v39
  %v1222 = vunpack.c.l.b16 %v40
  %v1223 = vunpack.c.h.b16 %v40
  %v1224 = vunpack.c.l.b16 %v41
  %v1225 = vunpack.c.h.b16 %v41
  %v1226 = vunpack.c.l.b16 %v42
  %v1227 = vunpack.c.h.b16 %v42
  %v1228 = vunpack.c.l.b16 %v43
  %v1229 = vunpack.c.h.b16 %v43
  %v1230 = vunpack.c.l.b16 %v44
  %v1231 = vunpack.c.h.b16 %v44
  %v1232 = vunpack.c.l.b16 %v45
  %v1233 = vunpack.c.h.b16 %v45
  %v1234 = vunpack.c.l.b16 %v46
  %v1235 = vunpack.c.h.b16 %v46
  %v1236 = vunpack.c.l.b16 %v47
  %v1237 = vunpack.c.h.b16 %v47
  %v1238 = vunpack.c.l.b16 %v48
  %v1239 = vunpack.c.h.b16 %v48
  %v1240 = vunpack.c.l.b16 %v49
  %v1241 = vunpack.c.h.b16 %v49
  %v1242 = vunpack.c.l.b16 %v50
  %v1243 = vunpack.c.h.b16 %v50
  %v1244 = vunpack.c.l.b16 %v51
  %v1245 = vunpack.c.h.b16 %v51
  %v1246 = vunpack.c.l.b16 %v52
  %v1247 = vunpack.c.h.b16 %v52
  %v1248 = vunpack.c.l.b16 %v53
  %v1249 = vunpack.c.h.b16 %v53
  %v1250 = vunpack.c.l.b16 %v54
  %v1251 = vunpack.c.h.b16 %v54
  %v1252 = vunpack.c.l.b16 %v55
  %v1253 = vunpack.c.h.b16 %v55
  %v1254 = vunpack.c.l.b16 %v56
  %v1255 = vunpack.c.h.b16 %v56
  %v1256 = vunpack.c.l.b16 %v57
  %v1257 = vunpack.c.h.b16 %v57
  %v1258 = vunpack.c.l.b16 %v58
  %v1259 = vunpack.c.h.b16 %v58
  %v1260 = vunpack.c.l.b16 %v59
  %v1261 = vunpack.c.h.b16 %v59
  %v1262 = vunpack.c.l.b16 %v60
  %v1263 = vunpack.c.h.b16 %v60
  %v1264 = vunpack.c.l.b16 %v61
  %v1265 = vunpack.c.h.b16 %v61
  %v1266 = vunpack.c.l.b16 %v62
  %v1267 = vunpack.c.h.b16 %v62
  %v1268 = vunpack.c.l.b16 %v63
  %v1269 = vunpack.c.h.b16 %v63
  %v1270 = vunpack.c.l.b16 %v64
  %v1271 = vunpack.c.h.b16 %v64
  %v1272 = vunpack.c.l.b16 %v65
  %v1273 = vunpack.c.h.b16 %v65
  %v1274 = vunpack.c.l.b16 %v66
  %v1275 = vunpack.c.h.b16 %v66
  %v1276 = vunpack.c.l.b16 %v67
  %v1277 = vunpack.c.h.b16 %v67
  %v1278 = vunpack.c.l.b16 %v68
  %v1279 = vunpack.c.h.b16 %v68
  %v1280 = vunpack.c.l.b16 %v69
  %v1281 = vunpack.c.h.b16 %v69
  %v1282 = vunpack.c.l.b16 %v70
  %v1283 = vunpack.c.h.b16 %v70
  %v1284 = vunpack.c.l.b16 %v71
  %v1285 = vunpack.c.h.b16 %v71
  %v1286 = vunpack.c.l.b16 %v72
  %v1287 = vunpack.c.h.b16 %v72
  %v1288 = vunpack.c.l.b16 %v73
  %v1289 = vunpack.c.h.b16 %v73
  %v1290 = vunpack.c.l.b16 %v74
  %v1291 = vunpack.c.h.b16 %v74
  %v1292 = vunpack.c.l.b16 %v75
  %v1293 = vunpack.c.h.b16 %v75
  %v1294 = vunpack.c.l.b16 %v76
  %v1295 = vunpack.c.h.b16 %v76
  %v1296 = vunpack.c.l.b16 %v77
  %v1297 = vunpack.c.h.b16 %v77
  %v1298 = vunpack.c.l.b16 %v78
  %v1299 = vunpack.c.h.b16 %v78
  %v1300 = vunpack.c.l.b16 %v79
  %v1301 = vunpack.c.h.b16 %v79
  %v1302 = vunpack.c.l.b16 %v80
  %v1303 = vunpack.c.h.b16 %v80
  %v1304 = vunpack.c.l.b16 %v81
  %v1305 = vunpack.c.h.b16 %v81
  %v1306 = vunpack.c.l.b16 %v82
  %v1307 = vunpack.c.h.b16 %v82
  %v1308 = vunpack.c.l.b16 %v83
  %v1309 = vunpack.c.h.b16 %v83
  %v1310 = vunpack.c.l.b16 %v84
  %v1311 = vunpack.c.h.b16 %v84
  %v1312 = vunpack.c.l.b16 %v85
  %v1313 = vunpack.c.h.b16 %v85
  %v1314 = vunpack.c.l.b16 %v86
  %v1315 = vunpack.c.h.b16 %v86
  %v1316 = vunpack.c.l.b16 %v87
  %v1317 = vunpack.c.h.b16 %v87
  %v1318 = vunpack.c.l.b16 %v88
  %v1319 = vunpack.c.h.b16 %v88
  %v1320 = vunpack.c.l.b16 %v89
  %v1321 = vunpack.c.h.b16 %v89
  %v1322 = vunpack.c.l.b16 %v90
  %v1323 = vunpack.c.h.b16 %v90
  %v1324 = vunpack.c.l.b16 %v91
  %v1325 = vunpack.c.h.b16 %v91
  %v1326 = vunpack.c.l.b16 %v92
  %v1327 = vunpack.c.h.b16 %v92
  %v1328 = vunpack.c.l.b16 %v93
  %v1329 = vunpack.c.h.b16 %v93
  %v1330 = vunpack.c.l.b16 %v94
  %v1331 = vunpack.c.h.b16 %v94
  %v1332 = vunpack.c.l.b16 %v95
  %v1333 = vunpack.c.h.b16 %v95
  %v1334 = vunpack.c.l.b16 %v96
  %v1335 = vunpack.c.h.b16 %v96
  %v1336 = vunpack.c.l.b16 %v97
  %v1337 = vunpack.c.h.b16 %v97
  %v1338 = vunpack.c.l.b16 %v98
  %v1339 = vunpack.c.h.b16 %v98
  %v1340 = vunpack.c.l.b16 %v99
  %v1341 = vunpack.c.h.b16 %v99
  %v1342 = vunpack.c.l.b16 %v100
  %v1343 = vunpack.c.h.b16 %v100
  %v1344 = vunpack.c.l.b16 %v101
  %v1345 = vunpack.c.h.b16 %v101
  %v1346 = vunpack.c.l.b16 %v102
  %v1347 = vunpack.c.h.b16 %v102
  %v1348 = vunpack.c.l.b16 %v103
  %v1349 = vunpack.c.h.b16 %v103
  %v1350 = vunpack.c.l.b16 %v104
  %v1351 = vunpack.c.h.b16 %v104
  %v1352 = vunpack.c.l.b16 %v105
  %v1353 = vunpack.c.h.b16 %v105
  %v1354 = vunpack.c.l.b16 %v106
  %v1355 = vunpack.c.h.b16 %v106
  %v1356 = vunpack.c.l.b16 %v107
  %v1357 = vunpack.c.h.b16 %v107
  %v1358 = vunpack.c.l.b16 %v108
  %v1359 = vunpack.c.h.b16 %v108
  %v1360 = vunpack.c.l.b16 %v109
  %v1361 = vunpack.c.h.b16 %v109
  %v1362 = vunpack.c.l.b16 %v110
  %v1363 = vunpack.c.h.b16 %v110
  %v1364 = vunpack.c.l.b16 %v111
  %v1365 = vunpack.c.h.b16 %v111
  %v1366 = vunpack.c.l.b16 %v112
  %v1367 = vunpack.c.h.b16 %v112
  %v1368 = vunpack.c.l.b16 %v113
  %v1369 = vunpack.c.h.b16 %v113
  %v1370 = vunpack.c.l.b16 %v114
  %v1371 = vunpack.c.h.b16 %v114
  %v1372 = vunpack.c.l.b16 %v115
  %v1373 = vunpack.c.h.b16 %v115
  %v1374 = vunpack.c.l.b16 %v116
  %v1375 = vunpack.c.h.b16 %v116
  %v1376 = vunpack.c.l.b16 %v117
  %v1377 = vunpack.c.h.b16 %v117
  %v1378 = vunpack.c.l.b16 %v118
  %v1379 = vunpack.c.h.b16 %v118
  %v1380 = vunpack.c.l.b16 %v119
  %v1381 = vunpack.c.h.b16 %v119
  %v1382 = vunpack.c.l.b16 %v120
  %v1383 = vunpack.c.h.b16 %v120
  %v1384 = vunpack.c.l.b16 %v121
  %v1385 = vunpack.c.h.b16 %v121
  %v1386 = vunpack.c.l.b16 %v122
  %v1387 = vunpack.c.h.b16 %v122
  %v1388 = vunpack.c.l.b16 %v123
  %v1389 = vunpack.c.h.b16 %v123
  %v1390 = vunpack.c.l.b16 %v124
  %v1391 = vunpack.c.h.b16 %v124
  %v1392 = vunpack.c.l.b16 %v125
  %v1393 = vunpack.c.h.b16 %v125
  %v1394 = vunpack.c.l.b16 %v126
  %v1395 = vunpack.c.h.b16 %v126
  %v1396 = vunpack.c.l.b16 %v127
  %v1397 = vunpack.c.h.b16 %v127
  %v1398 = vunpack.c.l.b16 %v128
  %v1399 = vunpack.c.h.b16 %v128
  %v1400 = vunpack.c.l.b16 %v129
  %v1401 = vunpack.c.h.b16 %v129
  %v1402 = vunpack.c.l.b16 %v130
  %v1403 = vunpack.c.h.b16 %v130
  %v1404 = vunpack.c.l.b16 %v131
  %v1405 = vunpack.c.h.b16 %v131
  %v1406 = vunpack.c.l.b16 %v132
  %v1407 = vunpack.c.h.b16 %v132
  %v1408 = vunpack.c.l.b16 %v133
  %v1409 = vunpack.c.h.b16 %v133
  %v1410 = vunpack.c.l.b16 %v134
  %v1411 = vunpack.c.h.b16 %v134
  %v1412 = vunpack.c.l.b16 %v135
  %v1413 = vunpack.c.h.b16 %v135
  %v1414 = vunpack.c.l.b16 %v136
  %v1415 = vunpack.c.h.b16 %v136
  %v1416 = vunpack.c.l.b16 %v137
  %v1417 = vunpack.c.h.b16 %v137
  %v1418 = vunpack.c.l.b16 %v138
  %v1419 = vunpack.c.h.b16 %v138
  %v1420 = vunpack.c.l.b16 %v139
  %v1421 = vunpack.c.h.b16 %v139
  %v1422 = vunpack.c.l.b16 %v140
  %v1423 = vunpack.c.h.b16 %v140
  %v1424 = vunpack.c.l.b16 %v141
  %v1425 = vunpack.c.h.b16 %v141
  %v1426 = vunpack.c.l.b16 %v142
  %v1427 = vunpack.c.h.b16 %v142
  %v1428 = vunpack.c.l.b16 %v143
  %v1429 = vunpack.c.h.b16 %v143
  %v1430 = vunpack.c.l.b16 %v144
  %v1431 = vunpack.c.h.b16 %v144
  %v1432 = vunpack.c.l.b16 %v145
  %v1433 = vunpack.c.h.b16 %v145
  %v1434 = vunpack.c.l.b16 %v146
  %v1435 = vunpack.c.h.b16 %v146
  %v1436 = vunpack.c.l.b16 %v147
  %v1437 = vunpack.c.h.b16 %v147
  %v1438 = vunpack.c.l.b16 %v148
  %v1439 = vunpack.c.h.b16 %v148
  %v1440 = vunpack.c.l.b16 %v149
  %v1441 = vunpack.c.h.b16 %v149
  %v1442 = vunpack.c.l.b16 %v150
  %v1443 = vunpack.c.h.b16 %v150
  %v1444 = vunpack.c.l.b16 %v151
  %v1445 = vunpack.c.h.b16 %v151
  %v1446 = vunpack.c.l.b16 %v152
  %v1447 = vunpack.c.h.b16 %v152
  %v1448 = vunpack.c.l.b16 %v153
  %v1449 = vunpack.c.h.b16 %v153
  %v1450 = vunpack.c.l.b16 %v154
  %v1451 = vunpack.c.h.b16 %v154
  %v1452 = vunpack.c.l.b16 %v155
  %v1453 = vunpack.c.h.b16 %v155
  %v1454 = vunpack.c.l.b16 %v156
  %v1455 = vunpack.c.h.b16 %v156
  %v1456 = vunpack.c.l.b16 %v157
  %v1457 = vunpack.c.h.b16 %v157
  %v1458 = vunpack.c.l.b16 %v158
  %v1459 = vunpack.c.h.b16 %v158
  %v1460 = vunpack.c.l.b16 %v159
  %v1461 = vunpack.c.h.b16 %v159
  %v1462 = vunpack.c.l.b16 %v160
  %v1463 = vunpack.c.h.b16 %v160
  %v1464 = vunpack.c.l.b16 %v161
  %v1465 = vunpack.c.h.b16 %v161
  %v1466 = vunpack.c.l.b16 %v162
  %v1467 = vunpack.c.h.b16 %v162
  %v1468 = vunpack.c.l.b16 %v163
  %v1469 = vunpack.c.h.b16 %v163
  %v1470 = vunpack.c.l.b16 %v164
  %v1471 = vunpack.c.h.b16 %v164
  %v1472 = vunpack.c.l.b16 %v165
  %v1473 = vunpack.c.h.b16 %v165
  %v1474 = vunpack.c.l.b16 %v166
  %v1475 = vunpack.c.h.b16 %v166
  %v1476 = vunpack.c.l.b16 %v167
  %v1477 = vunpack.c.h.b16 %v167
  %v1478 = vunpack.c.l.b16 %v168
  %v1479 = vunpack.c.h.b16 %v168
  %v1480 = vunpack.c.l.b16 %v169
  %v1481 = vunpack.c.h.b16 %v169
  %v1482 = vunpack.c.l.b16 %v170
  %v1483 = vunpack.c.h.b16 %v170
  %v1484 = vunpack.c.l.b16 %v171
  %v1485 = vunpack.c.h.b16 %v171
  %v1486 = vunpack.c.l.b16 %v172
  %v1487 = vunpack.c.h.b16 %v172
  %v1488 = vunpack.c.l.b16 %v173
  %v1489 = vunpack.c.h.b16 %v173
  %v1490 = vunpack.c.l.b16 %v174
  %v1491 = vunpack.c.h.b16 %v174
  %v1492 = vunpack.c.l.b16 %v175
  %v1493 = vunpack.c.h.b16 %v175
  %v1494 = vunpack.c.l.b16 %v176
  %v1495 = vunpack.c.h.b16 %v176
  %v1496 = vunpack.c.l.b16 %v177
  %v1497 = vunpack.c.h.b16 %v177
  %v1498 = vunpack.c.l.b16 %v178
  %v1499 = vunpack.c.h.b16 %v178
  %v1500 = vunpack.c.l.b16 %v179
  %v1501 = vunpack.c.h.b16 %v179
  %v1502 = vunpack.c.l.b16 %v180
  %v1503 = vunpack.c.h.b16 %v180
  %v1504 = vunpack.c.l.b16 %v181
  %v1505 = vunpack.c.h.b16 %v181
  %v1506 = vunpack.c.l.b16 %v182
  %v1507 = vunpack.c.h.b16 %v182
  %v1508 = vunpack.c.l.b16 %v183
  %v1509 = vunpack.c.h.b16 %v183
  %v1510 = vunpack.c.l.b16 %v184
  %v1511 = vunpack.c.h.b16 %v184
  %v1512 = vunpack.c.l.b16 %v185
  %v1513 = vunpack.c.h.b16 %v185
  %v1514 = vunpack.c.l.b16 %v186
  %v1515 = vunpack.c.h.b16 %v186
  %v1516 = vunpack.c.l.b16 %v187
  %v1517 = vunpack.c.h.b16 %v187
  %v1518 = vunpack.c.l.b16 %v188
  %v1519 = vunpack.c.h.b16 %v188
  %v1520 = vunpack.c.l.b16 %v189
  %v1521 = vunpack.c.h.b16 %v189
  %v1522 = vunpack.c.l.b16 %v190
  %v1523 = vunpack.c.h.b16 %v190
  %v1524 = vunpack.c.l.b16 %v191
  %v1525 = vunpack.c.h.b16 %v191
  %v1526 = vunpack.c.l.b16 %v192
  %v1527 = vunpack.c.h.b16 %v192
  %v1528 = vunpack.c.l.b16 %v193
  %v1529 = vunpack.c.h.b16 %v193
  %v1530 = vunpack.c.l.b16 %v194
  %v1531 = vunpack.c.h.b16 %v194
  %v1532 = vunpack.c.l.b16 %v195
  %v1533 = vunpack.c.h.b16 %v195
  %v1534 = vunpack.c.l.b16 %v196
  %v1535 = vunpack.c.h.b16 %v196
  %v1536 = vunpack.c.l.b16 %v197
  %v1537 = vunpack.c.h.b16 %v197
  %v1538 = vunpack.c.l.b16 %v198
  %v1539 = vunpack.c.h.b16 %v198
  %v1540 = vunpack.c.l.b16 %v199
  %v1541 = vunpack.c.h.b16 %v199
  %v1542 = vunpack.c.l.b16 %v200
  %v1543 = vunpack.c.h.b16 %v200
  %v1544 = vunpack.c.l.b16 %v201
  %v1545 = vunpack.c.h.b16 %v201
  %v1546 = vunpack.c.l.b16 %v202
  %v1547 = vunpack.c.h.b16 %v202
  %v1548 = vunpack.c.l.b16 %v203
  %v1549 = vunpack.c.h.b16 %v203
  %v1550 = vunpack.c.l.b16 %v204
  %v1551 = vunpack.c.h.b16 %v204
  %v1552 = vunpack.c.l.b16 %v205
  %v1553 = vunpack.c.h.b16 %v205
  %v1554 = vunpack.c.l.b16 %v206
  %v1555 = vunpack.c.h.b16 %v206
  %v1556 = vunpack.c.l.b16 %v207
  %v1557 = vunpack.c.h.b16 %v207
  %v1558 = vunpack.c.l.b16 %v208
  %v1559 = vunpack.c.h.b16 %v208
  %v1560 = vunpack.c.l.b16 %v209
  %v1561 = vunpack.c.h.b16 %v209
  %v1562 = vunpack.c.l.b16 %v210
  %v1563 = vunpack.c.h.b16 %v210
  %v1564 = vunpack.c.l.b16 %v211
  %v1565 = vunpack.c.h.b16 %v211
  %v1566 = vunpack.c.l.b16 %v212
  %v1567 = vunpack.c.h.b16 %v212
  %v1568 = vunpack.c.l.b16 %v213
  %v1569 = vunpack.c.h.b16 %v213
  %v1570 = vunpack.c.l.b16 %v214
  %v1571 = vunpack.c.h.b16 %v214
  %v1572 = vunpack.c.l.b16 %v215
  %v1573 = vunpack.c.h.b16 %v215
  %v1574 = vunpack.c.l.b16 %v216
  %v1575 = vunpack.c.h.b16 %v216
  %v1576 = vunpack.c.l.b16 %v217
  %v1577 = vunpack.c.h.b16 %v217
  %v1578 = vunpack.c.l.b16 %v218
  %v1579 = vunpack.c.h.b16 %v218
  %v1580 = vunpack.c.l.b16 %v219
  %v1581 = vunpack.c.h.b16 %v219
  %v1582 = vunpack.c.l.b16 %v220
  %v1583 = vunpack.c.h.b16 %v220
  %v1584 = vunpack.c.l.b16 %v221
  %v1585 = vunpack.c.h.b16 %v221
  %v1586 = vunpack.c.l.b16 %v222
  %v1587 = vunpack.c.h.b16 %v222
  %v1588 = vunpack.c.l.b16 %v223
  %v1589 = vunpack.c.h.b16 %v223
  %v1590 = vunpack.c.l.b16 %v224
  %v1591 = vunpack.c.h.b16 %v224
  %v1592 = vunpack.c.l.b16 %v225
  %v1593 = vunpack.c.h.b16 %v225
  %v1594 = vunpack.c.l.b16 %v226
  %v1595 = vunpack.c.h.b16 %v226
  %v1596 = vunpack.c.l.b16 %v227
  %v1597 = vunpack.c.h.b16 %v227
  %v1598 = vunpack.c.l.b16 %v228
  %v1599 = vunpack.c.h.b16 %v228
  %v1600 = vunpack.c.l.b16 %v229
  %v1601 = vunpack.c.h.b16 %v229
  %v1602 = vunpack.c.l.b16 %v230
  %v1603 = vunpack.c.h.b16 %v230
  %v1604 = vunpack.c.l.b16 %v231
  %v1605 = vunpack.c.h.b16 %v231
  %v1606 = vunpack.c.l.b16 %v232
  %v1607 = vunpack.c.h.b16 %v232
  %v1608 = vunpack.c.l.b16 %v233
  %v1609 = vunpack.c.h.b16 %v233
  %v1610 = vunpack.c.l.b16 %v234
  %v1611 = vunpack.c.h.b16 %v234
  %v1612 = vunpack.c.l.b16 %v235
  %v1613 = vunpack.c.h.b16 %v235
  %v1614 = vunpack.c.l.b16 %v236
  %v1615 = vunpack.c.h.b16 %v236
  %v1616 = vunpack.c.l.b16 %v237
  %v1617 = vunpack.c.h.b16 %v237
  %v1618 = vunpack.c.l.b16 %v238
  %v1619 = vunpack.c.h.b16 %v238
  %v1620 = vunpack.c.l.b16 %v239
  %v1621 = vunpack.c.h.b16 %v239
  %v1622 = vunpack.c.l.b16 %v240
  %v1623 = vunpack.c.h.b16 %v240
  %v1624 = vunpack.c.l.b16 %v241
  %v1625 = vunpack.c.h.b16 %v241
  %v1626 = vunpack.c.l.b16 %v242
  %v1627 = vunpack.c.h.b16 %v242
  %v1628 = vunpack.c.l.b16 %v243
  %v1629 = vunpack.c.h.b16 %v243
  %v1630 = vunpack.c.l.b16 %v244
  %v1631 = vunpack.c.h.b16 %v244
  %v1632 = vunpack.c.l.b16 %v245
  %v1633 = vunpack.c.h.b16 %v245
  %v1634 = vunpack.c.l.b16 %v246
  %v1635 = vunpack.c.h.b16 %v246
  %v1636 = vunpack.c.l.b16 %v247
  %v1637 = vunpack.c.h.b16 %v247
  %v1638 = vunpack.c.l.b16 %v248
  %v1639 = vunpack.c.h.b16 %v248
  %v1640 = vunpack.c.l.b16 %v249
  %v1641 = vunpack.c.h.b16 %v249
  %v1642 = vunpack.c.l.b16 %v250
  %v1643 = vunpack.c.h.b16 %v250
  %v1644 = vunpack.c.l.b16 %v251
  %v1645 = vunpack.c.h.b16 %v251
  %v1646 = vunpack.c.l.b16 %v252
  %v1647 = vunpack.c.h.b16 %v252
  %v1648 = vunpack.c.l.b16 %v253
  %v1649 = vunpack.c.h.b16 %v253
  %v1650 = vunpack.c.l.b16 %v254
  %v1651 = vunpack.c.h.b16 %v254
  %v1652 = vunpack.c.l.b16 %v255
  %v1653 = vunpack.c.h.b16 %v255
  %v1654 = vunpack.c.l.b16 %v256
  %v1655 = vunpack.c.h.b16 %v256
  %v1656 = vunpack.c.l.b16 %v257
  %v1657 = vunpack.c.h.b16 %v257
  %v1658 = vunpack.c.l.b16 %v258
  %v1659 = vunpack.c.h.b16 %v258
  %v1660 = vunpack.c.l.b16 %v259
  %v1661 = vunpack.c.h.b16 %v259
  %v1662 = vunpack.c.l.b16 %v260
  %v1663 = vunpack.c.h.b16 %v260
  %v1664 = vunpack.c.l.b16 %v261
  %v1665 = vunpack.c.h.b16 %v261
  %v1666 = vunpack.c.l.b16 %v262
  %v1667 = vunpack.c.h.b16 %v262
  %v1668 = vunpack.c.l.b16 %v263
  %v1669 = vunpack.c.h.b16 %v263
  %v1670 = vunpack.c.l.b16 %v264
  %v1671 = vunpack.c.h.b16 %v264
  %v1672 = vunpack.c.l.b16 %v265
  %v1673 = vunpack.c.h.b16 %v265
  %v1674 = vunpack.c.l.b16 %v266
  %v1675 = vunpack.c.h.b16 %v266
  %v1676 = vunpack.c.l.b16 %v267
  %v1677 = vunpack.c.h.b16 %v267
  %v1678 = vunpack.c.l.b16 %v268
  %v1679 = vunpack.c.h.b16 %v268
  %v1680 = vunpack.c.l.b16 %v269
  %v1681 = vunpack.c.h.b16 %v269
  %v1682 = vunpack.c.l.b16 %v270
  %v1683 = vunpack.c.h.b16 %v270
  %v1684 = vunpack.c.l.b16 %v271
  %v1685 = vunpack.c.h.b16 %v271
  %v1686 = vunpack.c.l.b16 %v272
  %v1687 = vunpack.c.h.b16 %v272
  %v1688 = vunpack.c.l.b16 %v273
  %v1689 = vunpack.c.h.b16 %v273
  %v1690 = vunpack.c.l.b16 %v274
  %v1691 = vunpack.c.h.b16 %v274
  %v1692 = vunpack.c.l.b16 %v275
  %v1693 = vunpack.c.h.b16 %v275
  %v1694 = vunpack.c.l.b16 %v276
  %v1695 = vunpack.c.h.b16 %v276
  %v1696 = vunpack.c.l.b16 %v277
  %v1697 = vunpack.c.h.b16 %v277
  %v1698 = vunpack.c.l.b16 %v278
  %v1699 = vunpack.c.h.b16 %v278
  %v1700 = vunpack.c.l.b16 %v279
  %v1701 = vunpack.c.h.b16 %v279
  %v1702 = vunpack.c.l.b16 %v280
  %v1703 = vunpack.c.h.b16 %v280
  %v1704 = vunpack.c.l.b16 %v281
  %v1705 = vunpack.c.h.b16 %v281
  %v1706 = vunpack.c.l.b16 %v282
  %v1707 = vunpack.c.h.b16 %v282
  %v1708 = vunpack.c.l.b16 %v283
  %v1709 = vunpack.c.h.b16 %v283
  %v1710 = vunpack.c.l.b16 %v284
  %v1711 = vunpack.c.h.b16 %v284
  %v1712 = vunpack.c.l.b16 %v285
  %v1713 = vunpack.c.h.b16 %v285
  %v1714 = vunpack.c.l.b16 %v286
  %v1715 = vunpack.c.h.b16 %v286
  %v1716 = vunpack.c.l.b16 %v287
  %v1717 = vunpack.c.h.b16 %v287
  %v1718 = vunpack.c.l.b16 %v288
  %v1719 = vunpack.c.h.b16 %v288
  %v1720 = vunpack.c.l.b16 %v289
  %v1721 = vunpack.c.h.b16 %v289
  %v1722 = vunpack.c.l.b16 %v290
  %v1723 = vunpack.c.h.b16 %v290
  %v1724 = vunpack.c.l.b16 %v291
  %v1725 = vunpack.c.h.b16 %v291
  %v1726 = vunpack.c.l.b16 %v292
  %v1727 = vunpack.c.h.b16 %v292
  %v1728 = vunpack.c.l.b16 %v293
  %v1729 = vunpack.c.h.b16 %v293
  %v1730 = vunpack.c.l.b16 %v294
  %v1731 = vunpack.c.h.b16 %v294
  %v1732 = vunpack.c.l.b16 %v295
  %v1733 = vunpack.c.h.b16 %v295
  %v1734 = vunpack.c.l.b16 %v296
  %v1735 = vunpack.c.h.b16 %v296
  %v1736 = vunpack.c.l.b16 %v297
  %v1737 = vunpack.c.h.b16 %v297
  %v1738 = vunpack.c.l.b16 %v298
  %v1739 = vunpack.c.h.b16 %v298
  %v1740 = vunpack.c.l.b16 %v299
  %v1741 = vunpack.c.h.b16 %v299
  %v1742 = vunpack.c.l.b16 %v300
  %v1743 = vunpack.c.h.b16 %v300
  %v1744 = vunpack.c.l.b16 %v301
  %v1745 = vunpack.c.h.b16 %v301
  %v1746 = vunpack.c.l.b16 %v302
  %v1747 = vunpack.c.h.b16 %v302
  %v1748 = vunpack.c.l.b16 %v303
  %v1749 = vunpack.c.h.b16 %v303
  %v1750 = vunpack.c.l.b16 %v304
  %v1751 = vunpack.c.h.b16 %v304
  %v1752 = vunpack.c.l.b16 %v305
  %v1753 = vunpack.c.h.b16 %v305
  %v1754 = vunpack.c.l.b16 %v306
  %v1755 = vunpack.c.h.b16 %v306
  %v1756 = vunpack.c.l.b16 %v307
  %v1757 = vunpack.c.h.b16 %v307
  %v1758 = vunpack.c.l.b16 %v308
  %v1759 = vunpack.c.h.b16 %v308
  %v1760 = vunpack.c.l.b16 %v309
  %v1761 = vunpack.c.h.b16 %v309
  %v1762 = vunpack.c.l.b16 %v310
  %v1763 = vunpack.c.h.b16 %v310
  %v1764 = vunpack.c.l.b16 %v311
  %v1765 = vunpack.c.h.b16 %v311
  %v1766 = vunpack.c.l.b16 %v312
  %v1767 = vunpack.c.h.b16 %v312
  %v1768 = vunpack.c.l.b16 %v313
  %v1769 = vunpack.c.h.b16 %v313
  %v1770 = vunpack.c.l.b16 %v314
  %v1771 = vunpack.c.h.b16 %v314
  %v1772 = vunpack.c.l.b16 %v315
  %v1773 = vunpack.c.h.b16 %v315
  %v1774 = vunpack.c.l.b16 %v316
  %v1775 = vunpack.c.h.b16 %v316
  %v1776 = vunpack.c.l.b16 %v317
  %v1777 = vunpack.c.h.b16 %v317
  %v1778 = vunpack.c.l.b16 %v318
  %v1779 = vunpack.c.h.b16 %v318
  %v1780 = vunpack.c.l.b16 %v319
  %v1781 = vunpack.c.h.b16 %v319
  %v1782 = vunpack.c.l.b16 %v320
  %v1783 = vunpack.c.h.b16 %v320
  %v1784 = vunpack.c.l.b16 %v321
  %v1785 = vunpack.c.h.b16 %v321
  %v1786 = vunpack.c.l.b16 %v322
  %v1787 = vunpack.c.h.b16 %v322
  %v1788 = vunpack.c.l.b16 %v323
  %v1789 = vunpack.c.h.b16 %v323
  %v1790 = vunpack.c.l.b16 %v324
  %v1791 = vunpack.c.h.b16 %v324
  %v1792 = vunpack.c.l.b16 %v325
  %v1793 = vunpack.c.h.b16 %v325
  %v1794 = vunpack.c.l.b16 %v326
  %v1795 = vunpack.c.h.b16 %v326
  %v1796 = vunpack.c.l.b16 %v327
  %v1797 = vunpack.c.h.b16 %v327
  %v1798 = vunpack.c.l.b16 %v328
  %v1799 = vunpack.c.h.b16 %v328
  %v1800 = vunpack.c.l.b16 %v329
  %v1801 = vunpack.c.h.b16 %v329
  %v1802 = vunpack.c.l.b16 %v330
  %v1803 = vunpack.c.h.b16 %v330
  %v1804 = vunpack.c.l.b16 %v331
  %v1805 = vunpack.c.h.b16 %v331
  %v1806 = vunpack.c.l.b16 %v332
  %v1807 = vunpack.c.h.b16 %v332
  %v1808 = vunpack.c.l.b16 %v333
  %v1809 = vunpack.c.h.b16 %v333
  %v1810 = vunpack.c.l.b16 %v334
  %v1811 = vunpack.c.h.b16 %v334
  %v1812 = vunpack.c.l.b16 %v335
  %v1813 = vunpack.c.h.b16 %v335
  %v1814 = vunpack.c.l.b16 %v336
  %v1815 = vunpack.c.h.b16 %v336
  %v1816 = vunpack.c.l.b16 %v337
  %v1817 = vunpack.c.h.b16 %v337
  %v1818 = vunpack.c.l.b16 %v338
  %v1819 = vunpack.c.h.b16 %v338
  %v1820 = vunpack.c.l.b16 %v339
  %v1821 = vunpack.c.h.b16 %v339
  %v1822 = vunpack.c.l.b16 %v340
  %v1823 = vunpack.c.h.b16 %v340
  %v1824 = vunpack.c.l.b16 %v341
  %v1825 = vunpack.c.h.b16 %v341
  %v1826 = vunpack.c.l.b16 %v342
  %v1827 = vunpack.c.h.b16 %v342
  %v1828 = vunpack.c.l.b16 %v343
  %v1829 = vunpack.c.h.b16 %v343
  %v1830 = vunpack.c.l.b16 %v344
  %v1831 = vunpack.c.h.b16 %v344
  %v1832 = vunpack.c.l.b16 %v345
  %v1833 = vunpack.c.h.b16 %v345
  %v1834 = vunpack.c.l.b16 %v346
  %v1835 = vunpack.c.h.b16 %v346
  %v1836 = vunpack.c.l.b16 %v347
  %v1837 = vunpack.c.h.b16 %v347
  %v1838 = vunpack.c.l.b16 %v348
  %v1839 = vunpack.c.h.b16 %v348
  %v1840 = vunpack.c.l.b16 %v349
  %v1841 = vunpack.c.h.b16 %v349
  %v1842 = vunpack.c.l.b16 %v350
  %v1843 = vunpack.c.h.b16 %v350
  %v1844 = vunpack.c.l.b16 %v351
  %v1845 = vunpack.c.h.b16 %v351
  %v1846 = vunpack.c.l.b16 %v352
  %v1847 = vunpack.c.h.b16 %v352
  %v1848 = vunpack.c.l.b16 %v353
  %v1849 = vunpack.c.h.b16 %v353
  %v1850 = vunpack.c.l.b16 %v354
  %v1851 = vunpack.c.h.b16 %v354
  %v1852 = vunpack.c.l.b16 %v355
  %v1853 = vunpack.c.h.b16 %v355
  %v1854 = vunpack.c.l.b16 %v356
  %v1855 = vunpack.c.h.b16 %v356
  %v1856 = vunpack.c.l.b16 %v357
  %v1857 = vunpack.c.h.b16 %v357
  %v1858 = vunpack.c.l.b16 %v358
  %v1859 = vunpack.c.h.b16 %v358
  %v1860 = vunpack.c.l.b16 %v359
  %v1861 = vunpack.c.h.b16 %v359
  %v1862 = vunpack.c.l.b16 %v360
  %v1863 = vunpack.c.h.b16 %v360
  %v1864 = vunpack.c.l.b16 %v361
  %v1865 = vunpack.c.h.b16 %v361
  %v1866 = vunpack.c.l.b16 %v362
  %v1867 = vunpack.c.h.b16 %v362
  %v1868 = vunpack.c.l.b16 %v363
  %v1869 = vunpack.c.h.b16 %v363
  %v1870 = vunpack.c.l.b16 %v364
  %v1871 = vunpack.c.h.b16 %v364
  %v1872 = vunpack.c.l.b16 %v365
  %v1873 = vunpack.c.h.b16 %v365
  %v1874 = vunpack.c.l.b16 %v366
  %v1875 = vunpack.c.h.b16 %v366
  %v1876 = vunpack.c.l.b16 %v367
  %v1877 = vunpack.c.h.b16 %v367
  %v1878 = vunpack.c.l.b16 %v368
  %v1879 = vunpack.c.h.b16 %v368
  %v1880 = vunpack.c.l.b16 %v369
  %v1881 = vunpack.c.h.b16 %v369
  %v1882 = vunpack.c.l.b16 %v370
  %v1883 = vunpack.c.h.b16 %v370
  %v1884 = vunpack.c.l.b16 %v371
  %v1885 = vunpack.c.h.b16 %v371
  %v1886 = vunpack.c.l.b16 %v372
  %v1887 = vunpack.c.h.b16 %v372
  %v1888 = vunpack.c.l.b16 %v373
  %v1889 = vunpack.c.h.b16 %v373
  %v1890 = vunpack.c.l.b16 %v374
  %v1891 = vunpack.c.h.b16 %v374
  %v1892 = vunpack.c.l.b16 %v375
  %v1893 = vunpack.c.h.b16 %v375
  %v1894 = vunpack.c.l.b16 %v376
  %v1895 = vunpack.c.h.b16 %v376
  %v1896 = vunpack.c.l.b16 %v377
  %v1897 = vunpack.c.h.b16 %v377
  %v1898 = vunpack.c.l.b16 %v378
  %v1899 = vunpack.c.h.b16 %v378
  %v1900 = vunpack.c.l.b16 %v379
  %v1901 = vunpack.c.h.b16 %v379
  %v1902 = vunpack.c.l.b16 %v380
  %v1903 = vunpack.c.h.b16 %v380
  %v1904 = vunpack.c.l.b16 %v381
  %v1905 = vunpack.c.h.b16 %v381
  %v1906 = vunpack.c.l.b16 %v382
  %v1907 = vunpack.c.h.b16 %v382
  %v1908 = vunpack.c.l.b16 %v383
  %v1909 = vunpack.c.h.b16 %v383
  %v1910 = vunpack.c.l.b16 %v384
  %v1911 = vunpack.c.h.b16 %v384
  %v1912 = vunpack.c.l.b16 %v385
  %v1913 = vunpack.c.h.b16 %v385
  %v1914 = vunpack.c.l.b16 %v386
  %v1915 = vunpack.c.h.b16 %v386
  %v1916 = vunpack.c.l.b16 %v387
  %v1917 = vunpack.c.h.b16 %v387
  %v1918 = vunpack.c.l.b16 %v388
  %v1919 = vunpack.c.h.b16 %v388
  %v1920 = vunpack.c.l.b16 %v389
  %v1921 = vunpack.c.h.b16 %v389
  %v1922 = vunpack.c.l.b16 %v390
  %v1923 = vunpack.c.h.b16 %v390
  %v1924 = vunpack.c.l.b16 %v391
  %v1925 = vunpack.c.h.b16 %v391
  %v1926 = vunpack.c.l.b16 %v392
  %v1927 = vunpack.c.h.b16 %v392
  %v1928 = vunpack.c.l.b16 %v393
  %v1929 = vunpack.c.h.b16 %v393
  %v1930 = vunpack.c.l.b16 %v394
  %v1931 = vunpack.c.h.b16 %v394
  %v1932 = vunpack.c.l.b16 %v395
  %v1933 = vunpack.c.h.b16 %v395
  %v1934 = vunpack.c.l.b16 %v396
  %v1935 = vunpack.c.h.b16 %v396
  %v1936 = vunpack.c.l.b16 %v397
  %v1937 = vunpack.c.h.b16 %v397
  %v1938 = vunpack.c.l.b16 %v398
  %v1939 = vunpack.c.h.b16 %v398
  %v1940 = vunpack.c.l.b16 %v399
  %v1941 = vunpack.c.h.b16 %v399
  %v1942 = vunpack.c.l.b16 %v400
  %v1943 = vunpack.c.h.b16 %v400
  %v1944 = vunpack.c.l.b16 %v401
  %v1945 = vunpack.c.h.b16 %v401
  %v1946 = vunpack.c.l.b16 %v402
  %v1947 = vunpack.c.h.b16 %v402
  %v1948 = vunpack.c.l.b16 %v403
  %v1949 = vunpack.c.h.b16 %v403
  %v1950 = vunpack.c.l.b16 %v404
  %v1951 = vunpack.c.h.b16 %v404
  %v1952 = vunpack.c.l.b16 %v405
  %v1953 = vunpack.c.h.b16 %v405
  %v1954 = vunpack.c.l.b16 %v406
  %v1955 = vunpack.c.h.b16 %v406
  %v1956 = vunpack.c.l.b16 %v407
  %v1957 = vunpack.c.h.b16 %v407
  %v1958 = vunpack.c.l.b16 %v408
  %v1959 = vunpack.c.h.b16 %v408
  %v1960 = vunpack.c.l.b16 %v409
  %v1961 = vunpack.c.h.b16 %v409
  %v1962 = vunpack.c.l.b16 %v410
  %v1963 = vunpack.c.h.b16 %v410
  %v1964 = vunpack.c.l.b16 %v411
  %v1965 = vunpack.c.h.b16 %v411
  %v1966 = vunpack.c.l.b16 %v412
  %v1967 = vunpack.c.h.b16 %v412
  %v1968 = vunpack.c.l.b16 %v413
  %v1969 = vunpack.c.h.b16 %v413
  %v1970 = vunpack.c.l.b16 %v414
  %v1971 = vunpack.c.h.b16 %v414
  %v1972 = vunpack.c.l.b16 %v415
  %v1973 = vunpack.c.h.b16 %v415
  %v1974 = vunpack.c.l.b16 %v416
  %v1975 = vunpack.c.h.b16 %v416
  %v1976 = vunpack.c.l.b16 %v417
  %v1977 = vunpack.c.h.b16 %v417
  %v1978 = vunpack.c.l.b16 %v418
  %v1979 = vunpack.c.h.b16 %v418
  %v1980 = vunpack.c.l.b16 %v419
  %v1981 = vunpack.c.h.b16 %v419
  %v1982 = vunpack.c.l.b16 %v420
  %v1983 = vunpack.c.h.b16 %v420
  %v1984 = vunpack.c.l.b16 %v421
  %v1985 = vunpack.c.h.b16 %v421
  %v1986 = vunpack.c.l.b16 %v422
  %v1987 = vunpack.c.h.b16 %v422
  %v1988 = vunpack.c.l.b16 %v423
  %v1989 = vunpack.c.h.b16 %v423
  %v1990 = vunpack.c.l.b16 %v424
  %v1991 = vunpack.c.h.b16 %v424
  %v1992 = vunpack.c.l.b16 %v425
  %v1993 = vunpack.c.h.b16 %v425
  %v1994 = vunpack.c.l.b16 %v426
  %v1995 = vunpack.c.h.b16 %v426
  %v1996 = vunpack.c.l.b16 %v427
  %v1997 = vunpack.c.h.b16 %v427
  %v1998 = vunpack.c.l.b16 %v428
  %v1999 = vunpack.c.h.b16 %v428
  %v2000 = vunpack.c.l.b16 %v429
  %v2001 = vunpack.c.h.b16 %v429
  %v2002 = vunpack.c.l.b16 %v430
  %v2003 = vunpack.c.h.b16 %v430
  %v2004 = vunpack.c.l.b16 %v431
  %v2005 = vunpack.c.h.b16 %v431
  %v2006 = vunpack.c.l.b16 %v432
  %v2007 = vunpack.c.h.b16 %v432
  %v2008 = vunpack.c.l.b16 %v433
  %v2009 = vunpack.c.h.b16 %v433
  %v2010 = vunpack.c.l.b16 %v434
  %v2011 = vunpack.c.h.b16 %v434
  %v2012 = vunpack.c.l.b16 %v435
  %v2013 = vunpack.c.h.b16 %v435
  %v2014 = vunpack.c.l.b16 %v436
  %v2015 = vunpack.c.h.b16 %v436
  %v2016 = vunpack.c.l.b16 %v437
  %v2017 = vunpack.c.h.b16 %v437
  %v2018 = vunpack.c.l.b16 %v438
  %v2019 = vunpack.c.h.b16 %v438
  %v2020 = vunpack.c.l.b16 %v439
  %v2021 = vunpack.c.h.b16 %v439
  %v2022 = vunpack.c.l.b16 %v440
  %v2023 = vunpack.c.h.b16 %v440
  %v2024 = vunpack.c.l.b16 %v441
  %v2025 = vunpack.c.h.b16 %v441
  %v2026 = vunpack.c.l.b16 %v442
  %v2027 = vunpack.c.h.b16 %v442
  %v2028 = vunpack.c.l.b16 %v443
  %v2029 = vunpack.c.h.b16 %v443
  %v2030 = vunpack.c.l.b16 %v444
  %v2031 = vunpack.c.h.b16 %v444
  %v2032 = vunpack.c.l.b16 %v445
  %v2033 = vunpack.c.h.b16 %v445
  %v2034 = vunpack.c.l.b16 %v446
  %v2035 = vunpack.c.h.b16 %v446
  %v2036 = vunpack.c.l.b16 %v447
  %v2037 = vunpack.c.h.b16 %v447
  %v2038 = vunpack.c.l.b16 %v448
  %v2039 = vunpack.c.h.b16 %v448
  %v2040 = vunpack.c.l.b16 %v449
  %v2041 = vunpack.c.h.b16 %v449
  %v2042 = vunpack.c.l.b16 %v450
  %v2043 = vunpack.c.h.b16 %v450
  %v2044 = vunpack.c.l.b16 %v451
  %v2045 = vunpack.c.h.b16 %v451
  %v2046 = vunpack.c.l.b16 %v452
  %v2047 = vunpack.c.h.b16 %v452
  %v2048 = vunpack.c.l.b16 %v453
  %v2049 = vunpack.c.h.b16 %v453
  %v2050 = vunpack.c.l.b16 %v454
  %v2051 = vunpack.c.h.b16 %v454
  %v2052 = vunpack.c.l.b16 %v455
  %v2053 = vunpack.c.h.b16 %v455
  %v2054 = vunpack.c.l.b16 %v456
  %v2055 = vunpack.c.h.b16 %v456
  %v2056 = vunpack.c.l.b16 %v457
  %v2057 = vunpack.c.h.b16 %v457
  %v2058 = vunpack.c.l.b16 %v458
  %v2059 = vunpack.c.h.b16 %v458
  %v2060 = vunpack.c.l.b16 %v459
  %v2061 = vunpack.c.h.b16 %v459
  %v2062 = vunpack.c.l.b16 %v460
  %v2063 = vunpack.c.h.b16 %v460
  %v2064 = vunpack.c.l.b16 %v461
  %v2065 = vunpack.c.h.b16 %v461
  %v2066 = vunpack.c.l.b16 %v462
  %v2067 = vunpack.c.h.b16 %v462
  %v2068 = vunpack.c.l.b16 %v463
  %v2069 = vunpack.c.h.b16 %v463
  %v2070 = vunpack.c.l.b16 %v464
  %v2071 = vunpack.c.h.b16 %v464
  %v2072 = vunpack.c.l.b16 %v465
  %v2073 = vunpack.c.h.b16 %v465
  %v2074 = vunpack.c.l.b16 %v466
  %v2075 = vunpack.c.h.b16 %v466
  %v2076 = vunpack.c.l.b16 %v467
  %v2077 = vunpack.c.h.b16 %v467
  %v2078 = vunpack.c.l.b16 %v468
  %v2079 = vunpack.c.h.b16 %v468
  %v2080 = vunpack.c.l.b16 %v469
  %v2081 = vunpack.c.h.b16 %v469
  %v2082 = vunpack.c.l.b16 %v470
  %v2083 = vunpack.c.h.b16 %v470
  %v2084 = vunpack.c.l.b16 %v471
  %v2085 = vunpack.c.h.b16 %v471
  %v2086 = vunpack.c.l.b16 %v472
  %v2087 = vunpack.c.h.b16 %v472
  %v2088 = vunpack.c.l.b16 %v473
  %v2089 = vunpack.c.h.b16 %v473
  %v2090 = vunpack.c.l.b16 %v474
  %v2091 = vunpack.c.h.b16 %v474
  %v2092 = vunpack.c.l.b16 %v475
  %v2093 = vunpack.c.h.b16 %v475
  %v2094 = vunpack.c.l.b16 %v476
  %v2095 = vunpack.c.h.b16 %v476
  %v2096 = vunpack.c.l.b16 %v477
  %v2097 = vunpack.c.h.b16 %v477
  %v2098 = vunpack.c.l.b16 %v478
  %v2099 = vunpack.c.h.b16 %v478
  %v2100 = vunpack.c.l.b16 %v479
  %v2101 = vunpack.c.h.b16 %v479
  %v2102 = vunpack.c.l.b16 %v480
  %v2103 = vunpack.c.h.b16 %v480
  %v2104 = vunpack.c.l.b16 %v481
  %v2105 = vunpack.c.h.b16 %v481
  %v2106 = vunpack.c.l.b16 %v482
  %v2107 = vunpack.c.h.b16 %v482
  %v2108 = vunpack.c.l.b16 %v483
  %v2109 = vunpack.c.h.b16 %v483
  %v2110 = vunpack.c.l.b16 %v484
  %v2111 = vunpack.c.h.b16 %v484
  %v2112 = vunpack.c.l.b16 %v485
  %v2113 = vunpack.c.h.b16 %v485
  %v2114 = vunpack.c.l.b16 %v486
  %v2115 = vunpack.c.h.b16 %v486
  %v2116 = vunpack.c.l.b16 %v487
  %v2117 = vunpack.c.h.b16 %v487
  %v2118 = vunpack.c.l.b16 %v488
  %v2119 = vunpack.c.h.b16 %v488
  %v2120 = vunpack.c.l.b16 %v489
  %v2121 = vunpack.c.h.b16 %v489
  %v2122 = vunpack.c.l.b16 %v490
  %v2123 = vunpack.c.h.b16 %v490
  %v2124 = vunpack.c.l.b16 %v491
  %v2125 = vunpack.c.h.b16 %v491
  %v2126 = vunpack.c.l.b16 %v492
  %v2127 = vunpack.c.h.b16 %v492
  %v2128 = vunpack.c.l.b16 %v493
  %v2129 = vunpack.c.h.b16 %v493
  %v2130 = vunpack.c.l.b16 %v494
  %v2131 = vunpack.c.h.b16 %v494
  %v2132 = vunpack.c.l.b16 %v495
  %v2133 = vunpack.c.h.b16 %v495
  %v2134 = vunpack.c.l.b16 %v496
  %v2135 = vunpack.c.h.b16 %v496
  %v2136 = vunpack.c.l.b16 %v497
  %v2137 = vunpack.c.h.b16 %v497
  %v2138 = vunpack.c.l.b16 %v498
  %v2139 = vunpack.c.h.b16 %v498
  %v2140 = vunpack.c.l.b16 %v499
  %v2141 = vunpack.c.h.b16 %v499
  %v2142 = vunpack.c.l.b16 %v500
  %v2143 = vunpack.c.h.b16 %v500
  %v2144 = vunpack.c.l.b16 %v501
  %v2145 = vunpack.c.h.b16 %v501
  %v2146 = vunpack.c.l.b16 %v502
  %v2147 = vunpack.c.h.b16 %v502
  %v2148 = vunpack.c.l.b16 %v503
  %v2149 = vunpack.c.h.b16 %v503
  %v2150 = vunpack.c.l.b16 %v504
  %v2151 = vunpack.c.h.b16 %v504
  %v2152 = vunpack.c.l.b16 %v505
  %v2153 = vunpack.c.h.b16 %v505
  %v2154 = vunpack.c.l.b16 %v506
  %v2155 = vunpack.c.h.b16 %v506
  %v2156 = vunpack.c.l.b16 %v507
  %v2157 = vunpack.c.h.b16 %v507
  %v2158 = vunpack.c.l.b16 %v508
  %v2159 = vunpack.c.h.b16 %v508
  %v2160 = vunpack.c.l.b16 %v509
  %v2161 = vunpack.c.h.b16 %v509
  %v2162 = vunpack.c.l.b16 %v510
  %v2163 = vunpack.c.h.b16 %v510
  %v2164 = vunpack.c.l.b16 %v511
  %v2165 = vunpack.c.h.b16 %v511
  %v2166 = vunpack.c.l.b16 %v512
  %v2167 = vunpack.c.h.b16 %v512
  %v2168 = vunpack.c.l.b16 %v513
  %v2169 = vunpack.c.h.b16 %v513
  %v2170 = vunpack.c.l.b16 %v514
  %v2171 = vunpack.c.h.b16 %v514
  %v2172 = vunpack.c.l.b16 %v515
  %v2173 = vunpack.c.h.b16 %v515
  %v2174 = vunpack.c.l.b16 %v516
  %v2175 = vunpack.c.h.b16 %v516
  %v2176 = vunpack.c.l.b16 %v517
  %v2177 = vunpack.c.h.b16 %v517
  %v2178 = vunpack.c.l.b16 %v518
  %v2179 = vunpack.c.h.b16 %v518
  %v2180 = vunpack.c.l.b16 %v519
  %v2181 = vunpack.c.h.b16 %v519
  %v2182 = vunpack.c.l.b16 %v520
  %v2183 = vunpack.c.h.b16 %v520
  %v2184 = vunpack.c.l.b16 %v521
  %v2185 = vunpack.c.h.b16 %v521
  %v2186 = vunpack.c.l.b16 %v522
  %v2187 = vunpack.c.h.b16 %v522
  %v2188 = vunpack.c.l.b16 %v523
  %v2189 = vunpack.c.h.b16 %v523
  %v2190 = vunpack.c.l.b16 %v524
  %v2191 = vunpack.c.h.b16 %v524
  %v2192 = vunpack.c.l.b16 %v525
  %v2193 = vunpack.c.h.b16 %v525
  %v2194 = vunpack.c.l.b16 %v526
  %v2195 = vunpack.c.h.b16 %v526
  %v2196 = vunpack.c.l.b16 %v527
  %v2197 = vunpack.c.h.b16 %v527
  %v2198 = vunpack.c.l.b16 %v528
  %v2199 = vunpack.c.h.b16 %v528
  %v2200 = vunpack.c.l.b16 %v529
  %v2201 = vunpack.c.h.b16 %v529
  %v2202 = vunpack.c.l.b16 %v530
  %v2203 = vunpack.c.h.b16 %v530
  %v2204 = vunpack.c.l.b16 %v531
  %v2205 = vunpack.c.h.b16 %v531
  %v2206 = vunpack.c.l.b16 %v532
  %v2207 = vunpack.c.h.b16 %v532
  %v2208 = vunpack.c.l.b16 %v533
  %v2209 = vunpack.c.h.b16 %v533
  %v2210 = vunpack.c.l.b16 %v534
  %v2211 = vunpack.c.h.b16 %v534
  %v2212 = vunpack.c.l.b16 %v535
  %v2213 = vunpack.c.h.b16 %v535
  %v2214 = vunpack.c.l.b16 %v536
  %v2215 = vunpack.c.h.b16 %v536
  %v2216 = vunpack.c.l.b16 %v537
  %v2217 = vunpack.c.h.b16 %v537
  %v2218 = vunpack.c.l.b16 %v538
  %v2219 = vunpack.c.h.b16 %v538
  %v2220 = vunpack.c.l.b16 %v539
  %v2221 = vunpack.c.h.b16 %v539
  %v2222 = vunpack.c.l.b16 %v540
  %v2223 = vunpack.c.h.b16 %v540
  %v2224 = vunpack.c.l.b16 %v541
  %v2225 = vunpack.c.h.b16 %v541
  %v2226 = vpack.c.b16 %v1206, %v1202
  %v2227 = vpack.c.b16 %v1207, %v1203
  %v2228 = vpack.c.b16 %v1208, %v1204
  %v2229 = vpack.c.b16 %v1209, %v1205
  %v2230 = vpack.c.b16 %v1214, %v1210
  %v2231 = vpack.c.b16 %v1215, %v1211
  %v2232 = vpack.c.b16 %v1216, %v1212
  %v2233 = vpack.c.b16 %v1217, %v1213
  %v2234 = vpack.c.b16 %v1222, %v1218
  %v2235 = vpack.c.b16 %v1223, %v1219
  %v2236 = vpack.c.b16 %v1224, %v1220
  %v2237 = vpack.c.b16 %v1225, %v1221
  %v2238 = vpack.c.b16 %v1230, %v1226
  %v2239 = vpack.c.b16 %v1231, %v1227
  %v2240 = vpack.c.b16 %v1232, %v1228
  %v2241 = vpack.c.b16 %v1233, %v1229
  %v2242 = vpack.c.b16 %v1238, %v1234
  %v2243 = vpack.c.b16 %v1239, %v1235
  %v2244 = vpack.c.b16 %v1240, %v1236
  %v2245 = vpack.c.b16 %v1241, %v1237
  %v2246 = vpack.c.b16 %v1246, %v1242
  %v2247 = vpack.c.b16 %v1247, %v1243
  %v2248 = vpack.c.b16 %v1248, %v1244
  %v2249 = vpack.c.b16 %v1249, %v1245
  %v2250 = vpack.c.b16 %v1254, %v1250
  %v2251 = vpack.c.b16 %v1255, %v1251
  %v2252 = vpack.c.b16 %v1256, %v1252
  %v2253 = vpack.c.b16 %v1257, %v1253
  %v2254 = vpack.c.b16 %v1262, %v1258
  %v2255 = vpack.c.b16 %v1263, %v1259
  %v2256 = vpack.c.b16 %v1264, %v1260
  %v2257 = vpack.c.b16 %v1265, %v1261
  %v2258 = vpack.c.b16 %v1270, %v1266
  %v2259 = vpack.c.b16 %v1271, %v1267
  %v2260 = vpack.c.b16 %v1272, %v1268
  %v2261 = vpack.c.b16 %v1273, %v1269
  %v2262 = vpack.c.b16 %v1278, %v1274
  %v2263 = vpack.c.b16 %v1279, %v1275
  %v2264 = vpack.c.b16 %v1280, %v1276
  %v2265 = vpack.c.b16 %v1281, %v1277
  %v2266 = vpack.c.b16 %v1286, %v1282
  %v2267 = vpack.c.b16 %v1287, %v1283
  %v2268 = vpack.c.b16 %v1288, %v1284
  %v2269 = vpack.c.b16 %v1289, %v1285
  %v2270 = vpack.c.b16 %v1294, %v1290
  %v2271 = vpack.c.b16 %v1295, %v1291
  %v2272 = vpack.c.b16 %v1296, %v1292
  %v2273 = vpack.c.b16 %v1297, %v1293
  %v2274 = vpack.c.b16 %v1302, %v1298
  %v2275 = vpack.c.b16 %v1303, %v1299
  %v2276 = vpack.c.b16 %v1304, %v1300
  %v2277 = vpack.c.b16 %v1305, %v1301
  %v2278 = vpack.c.b16 %v1310, %v1306
  %v2279 = vpack.c.b16 %v1311, %v1307
  %v2280 = vpack.c.b16 %v1312, %v1308
  %v2281 = vpack.c.b16 %v1313, %v1309
  %v2282 = vpack.c.b16 %v1318, %v1314
  %v2283 = vpack.c.b16 %v1319, %v1315
  %v2284 = vpack.c.b16 %v1320, %v1316
  %v2285 = vpack.c.b16 %v1321, %v1317
  %v2286 = vpack.c.b16 %v1326, %v1322
  %v2287 = vpack.c.b16 %v1327, %v1323
  %v2288 = vpack.c.b16 %v1328, %v1324
  %v2289 = vpack.c.b16 %v1329, %v1325
  %v2290 = vpack.c.b16 %v1334, %v1330
  %v2291 = vpack.c.b16 %v1335, %v1331
  %v2292 = vpack.c.b16 %v1336, %v1332
  %v2293 = vpack.c.b16 %v1337, %v1333
  %v2294 = vpack.c.b16 %v1342, %v1338
  %v2295 = vpack.c.b16 %v1343, %v1339
  %v2296 = vpack.c.b16 %v1344, %v1340
  %v2297 = vpack.c.b16 %v1345, %v1341
  %v2298 = vpack.c.b16 %v1350, %v1346
  %v2299 = vpack.c.b16 %v1351, %v1347
  %v2300 = vpack.c.b16 %v1352, %v1348
  %v2301 = vpack.c.b16 %v1353, %v1349
  %v2302 = vpack.c.b16 %v1358, %v1354
  %v2303 = vpack.c.b16 %v1359, %v1355
  %v2304 = vpack.c.b16 %v1360, %v1356
  %v2305 = vpack.c.b16 %v1361, %v1357
  %v2306 = vpack.c.b16 %v1366, %v1362
  %v2307 = vpack.c.b16 %v1367, %v1363
  %v2308 = vpack.c.b16 %v1368, %v1364
  %v2309 = vpack.c.b16 %v1369, %v1365
  %v2310 = vpack.c.b16 %v1374, %v1370
  %v2311 = vpack.c.b16 %v1375, %v1371
  %v2312 = vpack.c.b16 %v1376, %v1372
  %v2313 = vpack.c.b16 %v1377, %v1373
  %v2314 = vpack.c.b16 %v1382, %v1378
  %v2315 = vpack.c.b16 %v1383, %v1379
  %v2316 = vpack.c.b16 %v1384, %v1380
  %v2317 = vpack.c.b16 %v1385, %v1381
  %v2318 = vpack.c.b16 %v1390, %v1386
  %v2319 = vpack.c.b16 %v1391, %v1387
  %v2320 = vpack.c.b16 %v1392, %v1388
  %v2321 = vpack.c.b16 %v1393, %v1389
  %v2322 = vpack.c.b16 %v1398, %v1394
  %v2323 = vpack.c.b16 %v1399, %v1395
  %v2324 = vpack.c.b16 %v1400, %v1396
  %v2325 = vpack.c.b16 %v1401, %v1397
  %v2326 = vpack.c.b16 %v1406, %v1402
  %v2327 = vpack.c.b16 %v1407, %v1403
  %v2328 = vpack.c.b16 %v1408, %v1404
  %v2329 = vpack.c.b16 %v1409, %v1405
  %v2330 = vpack.c.b16 %v1414, %v1410
  %v2331 = vpack.c.b16 %v1415, %v1411
  %v2332 = vpack.c.b16 %v1416, %v1412
  %v2333 = vpack.c.b16 %v1417, %v1413
  %v2334 = vpack.c.b16 %v1422, %v1418
  %v2335 = vpack.c.b16 %v1423, %v1419
  %v2336 = vpack.c.b16 %v1424, %v1420
  %v2337 = vpack.c.b16 %v1425, %v1421
  %v2338 = vpack.c.b16 %v1430, %v1426
  %v2339 = vpack.c.b16 %v1431, %v1427
  %v2340 = vpack.c.b16 %v1432, %v1428
  %v2341 = vpack.c.b16 %v1433, %v1429
  %v2342 = vpack.c.b16 %v1438, %v1434
  %v2343 = vpack.c.b16 %v1439, %v1435
  %v2344 = vpack.c.b16 %v1440, %v1436
  %v2345 = vpack.c.b16 %v1441, %v1437
  %v2346 = vpack.c.b16 %v1446, %v1442
  %v2347 = vpack.c.b16 %v1447, %v1443
  %v2348 = vpack.c.b16 %v1448, %v1444
  %v2349 = vpack.c.b16 %v1449, %v1445
  %v2350 = vpack.c.b16 %v1454, %v1450
  %v2351 = vpack.c.b16 %v1455, %v1451
  %v2352 = vpack.c.b16 %v1456, %v1452
  %v2353 = vpack.c.b16 %v1457, %v1453
  %v2354 = vpack.c.b16 %v1462, %v1458
  %v2355 = vpack.c.b16 %v1463, %v1459
  %v2356 = vpack.c.b16 %v1464, %v1460
  %v2357 = vpack.c.b16 %v1465, %v1461
  %v2358 = vpack.c.b16 %v1470, %v1466
  %v2359 = vpack.c.b16 %v1471, %v1467
  %v2360 = vpack.c.b16 %v1472, %v1468
  %v2361 = vpack.c.b16 %v1473, %v1469
  %v2362 = vpack.c.b16 %v1478, %v1474
  %v2363 = vpack.c.b16 %v1479, %v1475
  %v2364 = vpack.c.b16 %v1480, %v1476
  %v2365 = vpack.c.b16 %v1481, %v1477
  %v2366 = vpack.c.b16 %v1486, %v1482
  %v2367 = vpack.c.b16 %v1487, %v1483
  %v2368 = vpack.c.b16 %v1488, %v1484
  %v2369 = vpack.c.b16 %v1489, %v1485
  %v2370 = vpack.c.b16 %v1494, %v1490
  %v2371 = vpack.c.b16 %v1495, %v1491
  %v2372 = vpack.c.b16 %v1496, %v1492
  %v2373 = vpack.c.b16 %v1497, %v1493
  %v2374 = vpack.c.b16 %v1502, %v1498
  %v2375 = vpack.c.b16 %v1503, %v1499
  %v2376 = vpack.c.b16 %v1504, %v1500
  %v2377 = vpack.c.b16 %v1505, %v1501
  %v2378 = vpack.c.b16 %v1510, %v1506
  %v2379 = vpack.c.b16 %v1511, %v1507
  %v2380 = vpack.c.b16 %v1512, %v1508
  %v2381 = vpack.c.b16 %v1513, %v1509
  %v2382 = vpack.c.b16 %v1518, %v1514
  %v2383 = vpack.c.b16 %v1519, %v1515
  %v2384 = vpack.c.b16 %v1520, %v1516
  %v2385 = vpack.c.b16 %v1521, %v1517
  %v2386 = vpack.c.b16 %v1526, %v1522
  %v2387 = vpack.c.b16 %v1527, %v1523
  %v2388 = vpack.c.b16 %v1528, %v1524
  %v2389 = vpack.c.b16 %v1529, %v1525
  %v2390 = vpack.c.b16 %v1534, %v1530
  %v2391 = vpack.c.b16 %v1535, %v1531
  %v2392 = vpack.c.b16 %v1536, %v1532
  %v2393 = vpack.c.b16 %v1537, %v1533
  %v2394 = vpack.c.b16 %v1542, %v1538
  %v2395 = vpack.c.b16 %v1543, %v1539
  %v2396 = vpack.c.b16 %v1544, %v1540
  %v2397 = vpack.c.b16 %v1545, %v1541
  %v2398 = vpack.c.b16 %v1550, %v1546
  %v2399 = vpack.c.b16 %v1551, %v1547
  %v2400 = vpack.c.b16 %v1552, %v1548
  %v2401 = vpack.c.b16 %v1553, %v1549
  %v2402 = vpack.c.b16 %v1558, %v1554
  %v2403 = vpack.c.b16 %v1559, %v1555
  %v2404 = vpack.c.b16 %v1560, %v1556
  %v2405 = vpack.c.b16 %v1561, %v1557
  %v2406 = vpack.c.b16 %v1566, %v1562
  %v2407 = vpack.c.b16 %v1567, %v1563
  %v2408 = vpack.c.b16 %v1568, %v1564
  %v2409 = vpack.c.b16 %v1569, %v1565
  %v2410 = vpack.c.b16 %v1574, %v1570
  %v2411 = vpack.c.b16 %v1575, %v1571
  %v2412 = vpack.c.b16 %v1576, %v1572
  %v2413 = vpack.c.b16 %v1577, %v1573
  %v2414 = vpack.c.b16 %v1582, %v1578
  %v2415 = vpack.c.b16 %v1583, %v1579
  %v2416 = vpack.c.b16 %v1584, %v1580
  %v2417 = vpack.c.b16 %v1585, %v1581
  %v2418 = vpack.c.b16 %v1590, %v1586
  %v2419 = vpack.c.b16 %v1591, %v1587
  %v2420 = vpack.c.b16 %v1592, %v1588
  %v2421 = vpack.c.b16 %v1593, %v1589
  %v2422 = vpack.c.b16 %v1598, %v1594
  %v2423 = vpack.c.b16 %v1599, %v1595
  %v2424 = vpack.c.b16 %v1600, %v1596
  %v2425 = vpack.c.b16 %v1601, %v1597
  %v2426 = vpack.c.b16 %v1606, %v1602
  %v2427 = vpack.c.b16 %v1607, %v1603
  %v2428 = vpack.c.b16 %v1608, %v1604
  %v2429 = vpack.c.b16 %v1609, %v1605
  %v2430 = vpack.c.b16 %v1614, %v1610
  %v2431 = vpack.c.b16 %v1615, %v1611
  %v2432 = vpack.c.b16 %v1616, %v1612
  %v2433 = vpack.c.b16 %v1617, %v1613
  %v2434 = vpack.c.b16 %v1622, %v1618
  %v2435 = vpack.c.b16 %v1623, %v1619
  %v2436 = vpack.c.b16 %v1624, %v1620
  %v2437 = vpack.c.b16 %v1625, %v1621
  %v2438 = vpack.c.b16 %v1630, %v1626
  %v2439 = vpack.c.b16 %v1631, %v1627
  %v2440 = vpack.c.b16 %v1632, %v1628
  %v2441 = vpack.c.b16 %v1633, %v1629
  %v2442 = vpack.c.b16 %v1638, %v1634
  %v2443 = vpack.c.b16 %v1639, %v1635
  %v2444 = vpack.c.b16 %v1640, %v1636
  %v2445 = vpack.c.b16 %v1641, %v1637
  %v2446 = vpack.c.b16 %v1646, %v1642
  %v2447 = vpack.c.b16 %v1647, %v1643
  %v2448 = vpack.c.b16 %v1648, %v1644
  %v2449 = vpack.c.b16 %v1649, %v1645
  %v2450 = vpack.c.b16 %v1654, %v1650
  %v2451 = vpack.c.b16 %v1655, %v1651
  %v2452 = vpack.c.b16 %v1656, %v1652
  %v2453 = vpack.c.b16 %v1657, %v1653
  %v2454 = vpack.c.b16 %v1662, %v1658
  %v2455 = vpack.c.b16 %v1663, %v1659
  %v2456 = vpack.c.b16 %v1664, %v1660
  %v2457 = vpack.c.b16 %v1665, %v1661
  %v2458 = vpack.c.b16 %v1670, %v1666
  %v2459 = vpack.c.b16 %v1671, %v1667
  %v2460 = vpack.c.b16 %v1672, %v1668
  %v2461 = vpack.c.b16 %v1673, %v1669
  %v2462 = vpack.c.b16 %v1678, %v1674
  %v2463 = vpack.c.b16 %v1679, %v1675
  %v2464 = vpack.c.b16 %v1680, %v1676
  %v2465 = vpack.c.b16 %v1681, %v1677
  %v2466 = vpack.c.b16 %v1686, %v1682
  %v2467 = vpack.c.b16 %v1687, %v1683
  %v2468 = vpack.c.b16 %v1688, %v1684
  %v2469 = vpack.c.b16 %v1689, %v1685
  %v2470 = vpack.c.b16 %v1694, %v1690
  %v2471 = vpack.c.b16 %v1695, %v1691
  %v2472 = vpack.c.b16 %v1696, %v1692
  %v2473 = vpack.c.b16 %v1697, %v1693
  %v2474 = vpack.c.b16 %v1702, %v1698
  %v2475 = vpack.c.b16 %v1703, %v1699
  %v2476 = vpack.c.b16 %v1704, %v1700
  %v2477 = vpack.c.b16 %v1705, %v1701
  %v2478 = vpack.c.b16 %v1710, %v1706
  %v2479 = vpack.c.b16 %v1711, %v1707
  %v2480 = vpack.c.b16 %v1712, %v1708
  %v2481 = vpack.c.b16 %v1713, %v1709
  %v2482 = vpack.c.b16 %v1718, %v1714
  %v2483 = vpack.c.b16 %v1719, %v1715
  %v2484 = vpack.c.b16 %v1720, %v1716
  %v2485 = vpack.c.b16 %v1721, %v1717
  %v2486 = vpack.c.b16 %v1726, %v1722
  %v2487 = vpack.c.b16 %v1727, %v1723
  %v2488 = vpack.c.b16 %v1728, %v1724
  %v2489 = vpack.c.b16 %v1729, %v1725
  %v2490 = vpack.c.b16 %v1734, %v1730
  %v2491 = vpack.c.b16 %v1735, %v1731
  %v2492 = vpack.c.b16 %v1736, %v1732
  %v2493 = vpack.c.b16 %v1737, %v1733
  %v2494 = vpack.c.b16 %v1742, %v1738
  %v2495 = vpack.c.b16 %v1743, %v1739
  %v2496 = vpack.c.b16 %v1744, %v1740
  %v2497 = vpack.c.b16 %v1745, %v1741
  %v2498 = vpack.c.b16 %v1750, %v1746
  %v2499 = vpack.c.b16 %v1751, %v1747
  %v2500 = vpack.c.b16 %v1752, %v1748
  %v2501 = vpack.c.b16 %v1753, %v1749
  %v2502 = vpack.c.b16 %v1758, %v1754
  %v2503 = vpack.c.b16 %v1759, %v1755
  %v2504 = vpack.c.b16 %v1760, %v1756
  %v2505 = vpack.c.b16 %v1761, %v1757
  %v2506 = vpack.c.b16 %v1766, %v1762
  %v2507 = vpack.c.b16 %v1767, %v1763
  %v2508 = vpack.c.b16 %v1768, %v1764
  %v2509 = vpack.c.b16 %v1769, %v1765
  %v2510 = vpack.c.b16 %v1774, %v1770
  %v2511 = vpack.c.b16 %v1775, %v1771
  %v2512 = vpack.c.b16 %v1776, %v1772
  %v2513 = vpack.c.b16 %v1777, %v1773
  %v2514 = vpack.c.b16 %v1782, %v1778
  %v2515 = vpack.c.b16 %v1783, %v1779
  %v2516 = vpack.c.b16 %v1784, %v1780
  %v2517 = vpack.c.b16 %v1785, %v1781
  %v2518 = vpack.c.b16 %v1790, %v1786
  %v2519 = vpack.c.b16 %v1791, %v1787
  %v2520 = vpack.c.b16 %v1792, %v1788
  %v2521 = vpack.c.b16 %v1793, %v1789
  %v2522 = vpack.c.b16 %v1798, %v1794
  %v2523 = vpack.c.b16 %v1799, %v1795
  %v2524 = vpack.c.b16 %v1800, %v1796
  %v2525 = vpack.c.b16 %v1801, %v1797
  %v2526 = vpack.c.b16 %v1806, %v1802
  %v2527 = vpack.c.b16 %v1807, %v1803
  %v2528 = vpack.c.b16 %v1808, %v1804
  %v2529 = vpack.c.b16 %v1809, %v1805
  %v2530 = vpack.c.b16 %v1814, %v1810
  %v2531 = vpack.c.b16 %v1815, %v1811
  %v2532 = vpack.c.b16 %v1816, %v1812
  %v2533 = vpack.c.b16 %v1817, %v1813
  %v2534 = vpack.c.b16 %v1822, %v1818
  %v2535 = vpack.c.b16 %v1823, %v1819
  %v2536 = vpack.c.b16 %v1824, %v1820
  %v2537 = vpack.c.b16 %v1825, %v1821
  %v2538 = vpack.c.b16 %v1830, %v1826
  %v2539 = vpack.c.b16 %v1831, %v1827
  %v2540 = vpack.c.b16 %v1832, %v1828
  %v2541 = vpack.c.b16 %v1833, %v1829
  %v2542 = vpack.c.b16 %v1838, %v1834
  %v2543 = vpack.c.b16 %v1839, %v1835
  %v2544 = vpack.c.b16 %v1840, %v1836
  %v2545 = vpack.c.b16 %v1841, %v1837
  %v2546 = vpack.c.b16 %v1846, %v1842
  %v2547 = vpack.c.b16 %v1847, %v1843
  %v2548 = vpack.c.b16 %v1848, %v1844
  %v2549 = vpack.c.b16 %v1849, %v1845
  %v2550 = vpack.c.b16 %v1854, %v1850
  %v2551 = vpack.c.b16 %v1855, %v1851
  %v2552 = vpack.c.b16 %v1856, %v1852
  %v2553 = vpack.c.b16 %v1857, %v1853
  %v2554 = vpack.c.b16 %v1862, %v1858
  %v2555 = vpack.c.b16 %v1863, %v1859
  %v2556 = vpack.c.b16 %v1864, %v1860
  %v2557 = vpack.c.b16 %v1865, %v1861
  %v2558 = vpack.c.b16 %v1870, %v1866
  %v2559 = vpack.c.b16 %v1871, %v1867
  %v2560 = vpack.c.b16 %v1872, %v1868
  %v2561 = vpack.c.b16 %v1873, %v1869
  %v2562 = vpack.c.b16 %v1878, %v1874
  %v2563 = vpack.c.b16 %v1879, %v1875
  %v2564 = vpack.c.b16 %v1880, %v1876
  %v2565 = vpack.c.b16 %v1881, %v1877
  %v2566 = vpack.c.b16 %v1886, %v1882
  %v2567 = vpack.c.b16 %v1887, %v1883
  %v2568 = vpack.c.b16 %v1888, %v1884
  %v2569 = vpack.c.b16 %v1889, %v1885
  %v2570 = vpack.c.b16 %v1894, %v1890
  %v2571 = vpack.c.b16 %v1895, %v1891
  %v2572 = vpack.c.b16 %v1896, %v1892
  %v2573 = vpack.c.b16 %v1897, %v1893
  %v2574 = vpack.c.b16 %v1902, %v1898
  %v2575 = vpack.c.b16 %v1903, %v1899
  %v2576 = vpack.c.b16 %v1904, %v1900
  %v2577 = vpack.c.b16 %v1905, %v1901
  %v2578 = vpack.c.b16 %v1910, %v1906
  %v2579 = vpack.c.b16 %v1911, %v1907
  %v2580 = vpack.c.b16 %v1912, %v1908
  %v2581 = vpack.c.b16 %v1913, %v1909
  %v2582 = vpack.c.b16 %v1918, %v1914
  %v2583 = vpack.c.b16 %v1919, %v1915
  %v2584 = vpack.c.b16 %v1920, %v1916
  %v2585 = vpack.c.b16 %v1921, %v1917
  %v2586 = vpack.c.b16 %v1926, %v1922
  %v2587 = vpack.c.b16 %v1927, %v1923
  %v2588 = vpack.c.b16 %v1928, %v1924
  %v2589 = vpack.c.b16 %v1929, %v1925
  %v2590 = vpack.c.b16 %v1934, %v1930
  %v2591 = vpack.c.b16 %v1935, %v1931
  %v2592 = vpack.c.b16 %v1936, %v1932
  %v2593 = vpack.c.b16 %v1937, %v1933
  %v2594 = vpack.c.b16 %v1942, %v1938
  %v2595 = vpack.c.b16 %v1943, %v1939
  %v2596 = vpack.c.b16 %v1944, %v1940
  %v2597 = vpack.c.b16 %v1945, %v1941
  %v2598 = vpack.c.b16 %v1950, %v1946
  %v2599 = vpack.c.b16 %v1951, %v1947
  %v2600 = vpack.c.b16 %v1952, %v1948
  %v2601 = vpack.c.b16 %v1953, %v1949
  %v2602 = vpack.c.b16 %v1958, %v1954
  %v2603 = vpack.c.b16 %v1959, %v1955
  %v2604 = vpack.c.b16 %v1960, %v1956
  %v2605 = vpack.c.b16 %v1961, %v1957
  %v2606 = vpack.c.b16 %v1966, %v1962
  %v2607 = vpack.c.b16 %v1967, %v1963
  %v2608 = vpack.c.b16 %v1968, %v1964
  %v2609 = vpack.c.b16 %v1969, %v1965
  %v2610 = vpack.c.b16 %v1974, %v1970
  %v2611 = vpack.c.b16 %v1975, %v1971
  %v2612 = vpack.c.b16 %v1976, %v1972
  %v2613 = vpack.c.b16 %v1977, %v1973
  %v2614 = vpack.c.b16 %v1982, %v1978
  %v2615 = vpack.c.b16 %v1983, %v1979
  %v2616 = vpack.c.b16 %v1984, %v1980
  %v2617 = vpack.c.b16 %v1985, %v1981
  %v2618 = vpack.c.b16 %v1990, %v1986
  %v2619 = vpack.c.b16 %v1991, %v1987
  %v2620 = vpack.c.b16 %v1992, %v1988
  %v2621 = vpack.c.b16 %v1993, %v1989
  %v2622 = vpack.c.b16 %v1998, %v1994
  %v2623 = vpack.c.b16 %v1999, %v1995
  %v2624 = vpack.c.b16 %v2000, %v1996
  %v2625 = vpack.c.b16 %v2001, %v1997
  %v2626 = vpack.c.b16 %v2006, %v2002
  %v2627 = vpack.c.b16 %v2007, %v2003
  %v2628 = vpack.c.b16 %v2008, %v2004
  %v2629 = vpack.c.b16 %v2009, %v2005
  %v2630 = vpack.c.b16 %v2014, %v2010
  %v2631 = vpack.c.b16 %v2015, %v2011
  %v2632 = vpack.c.b16 %v2016, %v2012
  %v2633 = vpack.c.b16 %v2017, %v2013
  %v2634 = vpack.c.b16 %v2022, %v2018
  %v2635 = vpack.c.b16 %v2023, %v2019
  %v2636 = vpack.c.b16 %v2024, %v2020
  %v2637 = vpack.c.b16 %v2025, %v2021
  %v2638 = vpack.c.b16 %v2030, %v2026
  %v2639 = vpack.c.b16 %v2031, %v2027
  %v2640 = vpack.c.b16 %v2032, %v2028
  %v2641 = vpack.c.b16 %v2033, %v2029
  %v2642 = vpack.c.b16 %v2038, %v2034
  %v2643 = vpack.c.b16 %v2039, %v2035
  %v2644 = vpack.c.b16 %v2040, %v2036
  %v2645 = vpack.c.b16 %v2041, %v2037
  %v2646 = vpack.c.b16 %v2046, %v2042
  %v2647 = vpack.c.b16 %v2047, %v2043
  %v2648 = vpack.c.b16 %v2048, %v2044
  %v2649 = vpack.c.b16 %v2049, %v2045
  %v2650 = vpack.c.b16 %v2054, %v2050
  %v2651 = vpack.c.b16 %v2055, %v2051
  %v2652 = vpack.c.b16 %v2056, %v2052
  %v2653 = vpack.c.b16 %v2057, %v2053
  %v2654 = vpack.c.b16 %v2062, %v2058
  %v2655 = vpack.c.b16 %v2063, %v2059
  %v2656 = vpack.c.b16 %v2064, %v2060
  %v2657 = vpack.c.b16 %v2065, %v2061
  %v2658 = vpack.c.b16 %v2070, %v2066
  %v2659 = vpack.c.b16 %v2071, %v2067
  %v2660 = vpack.c.b16 %v2072, %v2068
  %v2661 = vpack.c.b16 %v2073, %v2069
  %v2662 = vpack.c.b16 %v2078, %v2074
  %v2663 = vpack.c.b16 %v2079, %v2075
  %v2664 = vpack.c.b16 %v2080, %v2076
  %v2665 = vpack.c.b16 %v2081, %v2077
  %v2666 = vpack.c.b16 %v2086, %v2082
  %v2667 = vpack.c.b16 %v2087, %v2083
  %v2668 = vpack.c.b16 %v2088, %v2084
  %v2669 = vpack.c.b16 %v2089, %v2085
  %v2670 = vpack.c.b16 %v2094, %v2090
  %v2671 = vpack.c.b16 %v2095, %v2091
  %v2672 = vpack.c.b16 %v2096, %v2092
  %v2673 = vpack.c.b16 %v2097, %v2093
  %v2674 = vpack.c.b16 %v2102, %v2098
  %v2675 = vpack.c.b16 %v2103, %v2099
  %v2676 = vpack.c.b16 %v2104, %v2100
  %v2677 = vpack.c.b16 %v2105, %v2101
  %v2678 = vpack.c.b16 %v2110, %v2106
  %v2679 = vpack.c.b16 %v2111, %v2107
  %v2680 = vpack.c.b16 %v2112, %v2108
  %v2681 = vpack.c.b16 %v2113, %v2109
  %v2682 = vpack.c.b16 %v2118, %v2114
  %v2683 = vpack.c.b16 %v2119, %v2115
  %v2684 = vpack.c.b16 %v2120, %v2116
  %v2685 = vpack.c.b16 %v2121, %v2117
  %v2686 = vpack.c.b16 %v2126, %v2122
  %v2687 = vpack.c.b16 %v2127, %v2123
  %v2688 = vpack.c.b16 %v2128, %v2124
  %v2689 = vpack.c.b16 %v2129, %v2125
  %v2690 = vpack.c.b16 %v2134, %v2130
  %v2691 = vpack.c.b16 %v2135, %v2131
  %v2692 = vpack.c.b16 %v2136, %v2132
  %v2693 = vpack.c.b16 %v2137, %v2133
  %v2694 = vpack.c.b16 %v2142, %v2138
  %v2695 = vpack.c.b16 %v2143, %v2139
  %v2696 = vpack.c.b16 %v2144, %v2140
  %v2697 = vpack.c.b16 %v2145, %v2141
  %v2698 = vpack.c.b16 %v2150, %v2146
  %v2699 = vpack.c.b16 %v2151, %v2147
  %v2700 = vpack.c.b16 %v2152, %v2148
  %v2701 = vpack.c.b16 %v2153, %v2149
  %v2702 = vpack.c.b16 %v2158, %v2154
  %v2703 = vpack.c.b16 %v2159, %v2155
  %v2704 = vpack.c.b16 %v2160, %v2156
  %v2705 = vpack.c.b16 %v2161, %v2157
  %v2706 = vpack.c.b16 %v2166, %v2162
  %v2707 = vpack.c.b16 %v2167, %v2163
  %v2708 = vpack.c.b16 %v2168, %v2164
  %v2709 = vpack.c.b16 %v2169, %v2165
  %v2710 = vpack.c.b16 %v2174, %v2170
  %v2711 = vpack.c.b16 %v2175, %v2171
  %v2712 = vpack.c.b16 %v2176, %v2172
  %v2713 = vpack.c.b16 %v2177, %v2173
  %v2714 = vpack.c.b16 %v2182, %v2178
  %v2715 = vpack.c.b16 %v2183, %v2179
  %v2716 = vpack.c.b16 %v2184, %v2180
  %v2717 = vpack.c.b16 %v2185, %v2181
  %v2718 = vpack.c.b16 %v2190, %v2186
  %v2719 = vpack.c.b16 %v2191, %v2187
  %v2720 = vpack.c.b16 %v2192, %v2188
  %v2721 = vpack.c.b16 %v2193, %v2189
  %v2722 = vpack.c.b16 %v2198, %v2194
  %v2723 = vpack.c.b16 %v2199, %v2195
  %v2724 = vpack.c.b16 %v2200, %v2196
  %v2725 = vpack.c.b16 %v2201, %v2197
  %v2726 = vpack.c.b16 %v2206, %v2202
  %v2727 = vpack.c.b16 %v2207, %v2203
  %v2728 = vpack.c.b16 %v2208, %v2204
  %v2729 = vpack.c.b16 %v2209, %v2205
  %v2730 = vpack.c.b16 %v2214, %v2210
  %v2731 = vpack.c.b16 %v2215, %v2211
  %v2732 = vpack.c.b16 %v2216, %v2212
  %v2733 = vpack.c.b16 %v2217, %v2213
  %v2734 = vpack.c.b16 %v2222, %v2218
  %v2735 = vpack.c.b16 %v2223, %v2219
  %v2736 = vpack.c.b16 %v2224, %v2220
  %v2737 = vpack.c.b16 %v2225, %v2221
  %3250 = vmatprep.subr.bf16.mxu0 %v2227
  %3251 = vmatpush1.bf16.msra.mxu0 %v2226
  %3252 = vmatprep.subr.bf16.mxu0 %v2231
  %3253 = vmatpush1.bf16.msra.mxu0 %v2230
  %3254 = vmatprep.subr.bf16.mxu0 %v2235
  %3255 = vmatpush1.bf16.msra.mxu0 %v2234
  %3256 = vmatprep.subr.bf16.mxu0 %v2239
  %3257 = vmatpush1.bf16.msra.mxu0 %v2238
  %3258 = vmatprep.subr.bf16.mxu0 %v2243
  %3259 = vmatpush1.bf16.msra.mxu0 %v2242
  %3260 = vmatprep.subr.bf16.mxu0 %v2247
  %3261 = vmatpush1.bf16.msra.mxu0 %v2246
  %3262 = vmatprep.subr.bf16.mxu0 %v2251
  %3263 = vmatpush1.bf16.msra.mxu0 %v2250
  %3264 = vmatprep.subr.bf16.mxu0 %v2255
  %3265 = vmatpush1.bf16.msra.mxu0 %v2254
  %3266 = vmatprep.subr.bf16.mxu0 %v2259
  %3267 = vmatpush1.bf16.msra.mxu0 %v2258
  %3268 = vmatprep.subr.bf16.mxu0 %v2263
  %3269 = vmatpush1.bf16.msra.mxu0 %v2262
  %3270 = vmatprep.subr.bf16.mxu0 %v2267
  %3271 = vmatpush1.bf16.msra.mxu0 %v2266
  %3272 = vmatprep.subr.bf16.mxu0 %v2271
  %3273 = vmatpush1.bf16.msra.mxu0 %v2270
  %3274 = vmatprep.subr.bf16.mxu0 %v2275
  %3275 = vmatpush1.bf16.msra.mxu0 %v2274
  %3276 = vmatprep.subr.bf16.mxu0 %v2279
  %3277 = vmatpush1.bf16.msra.mxu0 %v2278
  %3278 = vmatprep.subr.bf16.mxu0 %v2283
  %3279 = vmatpush1.bf16.msra.mxu0 %v2282
  %3280 = vmatprep.subr.bf16.mxu0 %v2287
  %3281 = vmatpush1.bf16.msra.mxu0 %v2286
  %3282 = vmatprep.mubr.bf16.mxu0 %v613
  %3283 = vmatmul.mubr.bf16.gmra.mrb[0].mxu0 %v599
  %v3284 = vpop.f32.mrb[0].mxu0
  %v3285 = vadd.f32 %v570, %v3284
  %v3286 = vpop.f32.mrb[0].mxu0
  %v3287 = vadd.f32 %v571, %v3286
  %v3288 = vpop.f32.mrb[0].mxu0
  %v3289 = vpop.f32.mrb[0].mxu0
  %3290 = vdwg.mxu0
  %3291 = vmatprep.subr.bf16.mxu0 %v2291
  %3292 = vmatpush1.bf16.msra.mxu0 %v2290
  %3293 = vmatprep.subr.bf16.mxu0 %v2295
  %3294 = vmatpush1.bf16.msra.mxu0 %v2294
  %3295 = vmatprep.subr.bf16.mxu0 %v2299
  %3296 = vmatpush1.bf16.msra.mxu0 %v2298
  %3297 = vmatprep.subr.bf16.mxu0 %v2303
  %3298 = vmatpush1.bf16.msra.mxu0 %v2302
  %3299 = vmatprep.subr.bf16.mxu0 %v2307
  %3300 = vmatpush1.bf16.msra.mxu0 %v2306
  %3301 = vmatprep.subr.bf16.mxu0 %v2311
  %3302 = vmatpush1.bf16.msra.mxu0 %v2310
  %3303 = vmatprep.subr.bf16.mxu0 %v2315
  %3304 = vmatpush1.bf16.msra.mxu0 %v2314
  %3305 = vmatprep.subr.bf16.mxu0 %v2319
  %3306 = vmatpush1.bf16.msra.mxu0 %v2318
  %3307 = vmatprep.subr.bf16.mxu0 %v2323
  %3308 = vmatpush1.bf16.msra.mxu0 %v2322
  %3309 = vmatprep.subr.bf16.mxu0 %v2327
  %3310 = vmatpush1.bf16.msra.mxu0 %v2326
  %3311 = vmatprep.subr.bf16.mxu0 %v2331
  %3312 = vmatpush1.bf16.msra.mxu0 %v2330
  %3313 = vmatprep.subr.bf16.mxu0 %v2335
  %3314 = vmatpush1.bf16.msra.mxu0 %v2334
  %3315 = vmatprep.subr.bf16.mxu0 %v2339
  %3316 = vmatpush1.bf16.msra.mxu0 %v2338
  %3317 = vmatprep.subr.bf16.mxu0 %v2343
  %3318 = vmatpush1.bf16.msra.mxu0 %v2342
  %3319 = vmatprep.subr.bf16.mxu0 %v2347
  %3320 = vmatpush1.bf16.msra.mxu0 %v2346
  %3321 = vmatprep.subr.bf16.mxu0 %v2351
  %3322 = vmatpush1.bf16.msra.mxu0 %v2350
  %3323 = vmatprep.mubr.bf16.mxu0 %v623
  %3324 = vmatmul.mubr.bf16.gmra.mrb[0].mxu0 %v621
  %v3325 = vpop.f32.mrb[0].mxu0
  %v3326 = vadd.f32 %v3285, %v3325
  %v3327 = vpop.f32.mrb[0].mxu0
  %v3328 = vadd.f32 %v3287, %v3327
  %v3329 = vpop.f32.mrb[0].mxu0
  %v3330 = vpop.f32.mrb[0].mxu0
  %3331 = vdwg.mxu0
  %3332 = vmatprep.subr.bf16.mxu0 %v2355
  %3333 = vmatpush1.bf16.msra.mxu0 %v2354
  %3334 = vmatprep.subr.bf16.mxu0 %v2359
  %3335 = vmatpush1.bf16.msra.mxu0 %v2358
  %3336 = vmatprep.subr.bf16.mxu0 %v2363
  %3337 = vmatpush1.bf16.msra.mxu0 %v2362
  %3338 = vmatprep.subr.bf16.mxu0 %v2367
  %3339 = vmatpush1.bf16.msra.mxu0 %v2366
  %3340 = vmatprep.subr.bf16.mxu0 %v2371
  %3341 = vmatpush1.bf16.msra.mxu0 %v2370
  %3342 = vmatprep.subr.bf16.mxu0 %v2375
  %3343 = vmatpush1.bf16.msra.mxu0 %v2374
  %3344 = vmatprep.subr.bf16.mxu0 %v2379
  %3345 = vmatpush1.bf16.msra.mxu0 %v2378
  %3346 = vmatprep.subr.bf16.mxu0 %v2383
  %3347 = vmatpush1.bf16.msra.mxu0 %v2382
  %3348 = vmatprep.subr.bf16.mxu0 %v2387
  %3349 = vmatpush1.bf16.msra.mxu0 %v2386
  %3350 = vmatprep.subr.bf16.mxu0 %v2391
  %3351 = vmatpush1.bf16.msra.mxu0 %v2390
  %3352 = vmatprep.subr.bf16.mxu0 %v2395
  %3353 = vmatpush1.bf16.msra.mxu0 %v2394
  %3354 = vmatprep.subr.bf16.mxu0 %v2399
  %3355 = vmatpush1.bf16.msra.mxu0 %v2398
  %3356 = vmatprep.subr.bf16.mxu0 %v2403
  %3357 = vmatpush1.bf16.msra.mxu0 %v2402
  %3358 = vmatprep.subr.bf16.mxu0 %v2407
  %3359 = vmatpush1.bf16.msra.mxu0 %v2406
  %3360 = vmatprep.subr.bf16.mxu0 %v2411
  %3361 = vmatpush1.bf16.msra.mxu0 %v2410
  %3362 = vmatprep.subr.bf16.mxu0 %v2415
  %3363 = vmatpush1.bf16.msra.mxu0 %v2414
  %3364 = vmatprep.mubr.bf16.mxu0 %v620
  %3365 = vmatmul.mubr.bf16.gmra.mrb[0].mxu0 %v606
  %v3366 = vpop.f32.mrb[0].mxu0
  %v3367 = vadd.f32 %v3326, %v3366
  %v3368 = vpop.f32.mrb[0].mxu0
  %v3369 = vadd.f32 %v3328, %v3368
  %v3370 = vpop.f32.mrb[0].mxu0
  %v3371 = vpop.f32.mrb[0].mxu0
  %3372 = vdwg.mxu0
  %3373 = vmatprep.subr.bf16.mxu0 %v2419
  %3374 = vmatpush1.bf16.msra.mxu0 %v2418
  %3375 = vmatprep.subr.bf16.mxu0 %v2423
  %3376 = vmatpush1.bf16.msra.mxu0 %v2422
  %3377 = vmatprep.subr.bf16.mxu0 %v2427
  %3378 = vmatpush1.bf16.msra.mxu0 %v2426
  %3379 = vmatprep.subr.bf16.mxu0 %v2431
  %3380 = vmatpush1.bf16.msra.mxu0 %v2430
  %3381 = vmatprep.subr.bf16.mxu0 %v2435
  %3382 = vmatpush1.bf16.msra.mxu0 %v2434
  %3383 = vmatprep.subr.bf16.mxu0 %v2439
  %3384 = vmatpush1.bf16.msra.mxu0 %v2438
  %3385 = vmatprep.subr.bf16.mxu0 %v2443
  %3386 = vmatpush1.bf16.msra.mxu0 %v2442
  %3387 = vmatprep.subr.bf16.mxu0 %v2447
  %3388 = vmatpush1.bf16.msra.mxu0 %v2446
  %3389 = vmatprep.subr.bf16.mxu0 %v2451
  %3390 = vmatpush1.bf16.msra.mxu0 %v2450
  %3391 = vmatprep.subr.bf16.mxu0 %v2455
  %3392 = vmatpush1.bf16.msra.mxu0 %v2454
  %3393 = vmatprep.subr.bf16.mxu0 %v2459
  %3394 = vmatpush1.bf16.msra.mxu0 %v2458
  %3395 = vmatprep.subr.bf16.mxu0 %v2463
  %3396 = vmatpush1.bf16.msra.mxu0 %v2462
  %3397 = vmatprep.subr.bf16.mxu0 %v2467
  %3398 = vmatpush1.bf16.msra.mxu0 %v2466
  %3399 = vmatprep.subr.bf16.mxu0 %v2471
  %3400 = vmatpush1.bf16.msra.mxu0 %v2470
  %3401 = vmatprep.subr.bf16.mxu0 %v2475
  %3402 = vmatpush1.bf16.msra.mxu0 %v2474
  %3403 = vmatprep.subr.bf16.mxu0 %v2479
  %3404 = vmatpush1.bf16.msra.mxu0 %v2478
  %3405 = vmatprep.mubr.bf16.mxu0 %v624
  %3406 = vmatmul.mubr.bf16.gmra.mrb[0].mxu0 %v622
  %v3407 = vpop.f32.mrb[0].mxu0
  %v3408 = vadd.f32 %v3367, %v3407
  %v3409 = vpop.f32.mrb[0].mxu0
  %v3410 = vadd.f32 %v3369, %v3409
  %v3411 = vpop.f32.mrb[0].mxu0
  %v3412 = vpop.f32.mrb[0].mxu0
  %3413 = vdwg.mxu0
  %3414 = vmatprep.subr.bf16.mxu0 %v2483
  %3415 = vmatpush1.bf16.msra.mxu0 %v2482
  %3416 = vmatprep.subr.bf16.mxu0 %v2487
  %3417 = vmatpush1.bf16.msra.mxu0 %v2486
  %3418 = vmatprep.subr.bf16.mxu0 %v2491
  %3419 = vmatpush1.bf16.msra.mxu0 %v2490
  %3420 = vmatprep.subr.bf16.mxu0 %v2495
  %3421 = vmatpush1.bf16.msra.mxu0 %v2494
  %3422 = vmatprep.subr.bf16.mxu0 %v2499
  %3423 = vmatpush1.bf16.msra.mxu0 %v2498
  %3424 = vmatprep.subr.bf16.mxu0 %v2503
  %3425 = vmatpush1.bf16.msra.mxu0 %v2502
  %3426 = vmatprep.subr.bf16.mxu0 %v2507
  %3427 = vmatpush1.bf16.msra.mxu0 %v2506
  %3428 = vmatprep.subr.bf16.mxu0 %v2511
  %3429 = vmatpush1.bf16.msra.mxu0 %v2510
  %3430 = vmatprep.subr.bf16.mxu0 %v2515
  %3431 = vmatpush1.bf16.msra.mxu0 %v2514
  %3432 = vmatprep.subr.bf16.mxu0 %v2519
  %3433 = vmatpush1.bf16.msra.mxu0 %v2518
  %3434 = vmatprep.subr.bf16.mxu0 %v2523
  %3435 = vmatpush1.bf16.msra.mxu0 %v2522
  %3436 = vmatprep.subr.bf16.mxu0 %v2527
  %3437 = vmatpush1.bf16.msra.mxu0 %v2526
  %3438 = vmatprep.subr.bf16.mxu0 %v2531
  %3439 = vmatpush1.bf16.msra.mxu0 %v2530
  %3440 = vmatprep.subr.bf16.mxu0 %v2535
  %3441 = vmatpush1.bf16.msra.mxu0 %v2534
  %3442 = vmatprep.subr.bf16.mxu0 %v2539
  %3443 = vmatpush1.bf16.msra.mxu0 %v2538
  %3444 = vmatprep.subr.bf16.mxu0 %v2543
  %3445 = vmatpush1.bf16.msra.mxu0 %v2542
  %3446 = vmatprep.mubr.bf16.mxu0 %v662
  %3447 = vmatmul.mubr.bf16.gmra.mrb[0].mxu0 %v648
  %v3448 = vpop.f32.mrb[0].mxu0
  %v3449 = vadd.f32 %v3408, %v3448
  %v3450 = vpop.f32.mrb[0].mxu0
  %v3451 = vadd.f32 %v3410, %v3450
  %v3452 = vpop.f32.mrb[0].mxu0
  %v3453 = vpop.f32.mrb[0].mxu0
  %3454 = vdwg.mxu0
  %3455 = vmatprep.subr.bf16.mxu0 %v2547
  %3456 = vmatpush1.bf16.msra.mxu0 %v2546
  %3457 = vmatprep.subr.bf16.mxu0 %v2551
  %3458 = vmatpush1.bf16.msra.mxu0 %v2550
  %3459 = vmatprep.subr.bf16.mxu0 %v2555
  %3460 = vmatpush1.bf16.msra.mxu0 %v2554
  %3461 = vmatprep.subr.bf16.mxu0 %v2559
  %3462 = vmatpush1.bf16.msra.mxu0 %v2558
  %3463 = vmatprep.subr.bf16.mxu0 %v2563
  %3464 = vmatpush1.bf16.msra.mxu0 %v2562
  %3465 = vmatprep.subr.bf16.mxu0 %v2567
  %3466 = vmatpush1.bf16.msra.mxu0 %v2566
  %3467 = vmatprep.subr.bf16.mxu0 %v2571
  %3468 = vmatpush1.bf16.msra.mxu0 %v2570
  %3469 = vmatprep.subr.bf16.mxu0 %v2575
  %3470 = vmatpush1.bf16.msra.mxu0 %v2574
  %3471 = vmatprep.subr.bf16.mxu0 %v2579
  %3472 = vmatpush1.bf16.msra.mxu0 %v2578
  %3473 = vmatprep.subr.bf16.mxu0 %v2583
  %3474 = vmatpush1.bf16.msra.mxu0 %v2582
  %3475 = vmatprep.subr.bf16.mxu0 %v2587
  %3476 = vmatpush1.bf16.msra.mxu0 %v2586
  %3477 = vmatprep.subr.bf16.mxu0 %v2591
  %3478 = vmatpush1.bf16.msra.mxu0 %v2590
  %3479 = vmatprep.subr.bf16.mxu0 %v2595
  %3480 = vmatpush1.bf16.msra.mxu0 %v2594
  %3481 = vmatprep.subr.bf16.mxu0 %v2599
  %3482 = vmatpush1.bf16.msra.mxu0 %v2598
  %3483 = vmatprep.subr.bf16.mxu0 %v2603
  %3484 = vmatpush1.bf16.msra.mxu0 %v2602
  %3485 = vmatprep.subr.bf16.mxu0 %v2607
  %3486 = vmatpush1.bf16.msra.mxu0 %v2606
  %3487 = vmatprep.mubr.bf16.mxu0 %v672
  %3488 = vmatmul.mubr.bf16.gmra.mrb[0].mxu0 %v670
  %v3489 = vpop.f32.mrb[0].mxu0
  %v3490 = vadd.f32 %v3449, %v3489
  %v3491 = vpop.f32.mrb[0].mxu0
  %v3492 = vadd.f32 %v3451, %v3491
  %v3493 = vpop.f32.mrb[0].mxu0
  %v3494 = vpop.f32.mrb[0].mxu0
  %3495 = vdwg.mxu0
  %3496 = vmatprep.subr.bf16.mxu0 %v2611
  %3497 = vmatpush1.bf16.msra.mxu0 %v2610
  %3498 = vmatprep.subr.bf16.mxu0 %v2615
  %3499 = vmatpush1.bf16.msra.mxu0 %v2614
  %3500 = vmatprep.subr.bf16.mxu0 %v2619
  %3501 = vmatpush1.bf16.msra.mxu0 %v2618
  %3502 = vmatprep.subr.bf16.mxu0 %v2623
  %3503 = vmatpush1.bf16.msra.mxu0 %v2622
  %3504 = vmatprep.subr.bf16.mxu0 %v2627
  %3505 = vmatpush1.bf16.msra.mxu0 %v2626
  %3506 = vmatprep.subr.bf16.mxu0 %v2631
  %3507 = vmatpush1.bf16.msra.mxu0 %v2630
  %3508 = vmatprep.subr.bf16.mxu0 %v2635
  %3509 = vmatpush1.bf16.msra.mxu0 %v2634
  %3510 = vmatprep.subr.bf16.mxu0 %v2639
  %3511 = vmatpush1.bf16.msra.mxu0 %v2638
  %3512 = vmatprep.subr.bf16.mxu0 %v2643
  %3513 = vmatpush1.bf16.msra.mxu0 %v2642
  %3514 = vmatprep.subr.bf16.mxu0 %v2647
  %3515 = vmatpush1.bf16.msra.mxu0 %v2646
  %3516 = vmatprep.subr.bf16.mxu0 %v2651
  %3517 = vmatpush1.bf16.msra.mxu0 %v2650
  %3518 = vmatprep.subr.bf16.mxu0 %v2655
  %3519 = vmatpush1.bf16.msra.mxu0 %v2654
  %3520 = vmatprep.subr.bf16.mxu0 %v2659
  %3521 = vmatpush1.bf16.msra.mxu0 %v2658
  %3522 = vmatprep.subr.bf16.mxu0 %v2663
  %3523 = vmatpush1.bf16.msra.mxu0 %v2662
  %3524 = vmatprep.subr.bf16.mxu0 %v2667
  %3525 = vmatpush1.bf16.msra.mxu0 %v2666
  %3526 = vmatprep.subr.bf16.mxu0 %v2671
  %3527 = vmatpush1.bf16.msra.mxu0 %v2670
  %3528 = vmatprep.mubr.bf16.mxu0 %v669
  %3529 = vmatmul.mubr.bf16.gmra.mrb[0].mxu0 %v655
  %v3530 = vpop.f32.mrb[0].mxu0
  %v3531 = vadd.f32 %v3490, %v3530
  %v3532 = vpop.f32.mrb[0].mxu0
  %v3533 = vadd.f32 %v3492, %v3532
  %v3534 = vpop.f32.mrb[0].mxu0
  %v3535 = vpop.f32.mrb[0].mxu0
  %3536 = vdwg.mxu0
  %3537 = vmatprep.subr.bf16.mxu0 %v2675
  %3538 = vmatpush1.bf16.msra.mxu0 %v2674
  %3539 = vmatprep.subr.bf16.mxu0 %v2679
  %3540 = vmatpush1.bf16.msra.mxu0 %v2678
  %3541 = vmatprep.subr.bf16.mxu0 %v2683
  %3542 = vmatpush1.bf16.msra.mxu0 %v2682
  %3543 = vmatprep.subr.bf16.mxu0 %v2687
  %3544 = vmatpush1.bf16.msra.mxu0 %v2686
  %3545 = vmatprep.subr.bf16.mxu0 %v2691
  %3546 = vmatpush1.bf16.msra.mxu0 %v2690
  %3547 = vmatprep.subr.bf16.mxu0 %v2695
  %3548 = vmatpush1.bf16.msra.mxu0 %v2694
  %3549 = vmatprep.subr.bf16.mxu0 %v2699
  %3550 = vmatpush1.bf16.msra.mxu0 %v2698
  %3551 = vmatprep.subr.bf16.mxu0 %v2703
  %3552 = vmatpush1.bf16.msra.mxu0 %v2702
  %3553 = vmatprep.subr.bf16.mxu0 %v2707
  %3554 = vmatpush1.bf16.msra.mxu0 %v2706
  %3555 = vmatprep.subr.bf16.mxu0 %v2711
  %3556 = vmatpush1.bf16.msra.mxu0 %v2710
  %3557 = vmatprep.subr.bf16.mxu0 %v2715
  %3558 = vmatpush1.bf16.msra.mxu0 %v2714
  %3559 = vmatprep.subr.bf16.mxu0 %v2719
  %3560 = vmatpush1.bf16.msra.mxu0 %v2718
  %3561 = vmatprep.subr.bf16.mxu0 %v2723
  %3562 = vmatpush1.bf16.msra.mxu0 %v2722
  %3563 = vmatprep.subr.bf16.mxu0 %v2727
  %3564 = vmatpush1.bf16.msra.mxu0 %v2726
  %3565 = vmatprep.subr.bf16.mxu0 %v2731
  %3566 = vmatpush1.bf16.msra.mxu0 %v2730
  %3567 = vmatprep.subr.bf16.mxu0 %v2735
  %3568 = vmatpush1.bf16.msra.mxu0 %v2734
  %3569 = vmatprep.mubr.bf16.mxu0 %v673
  %3570 = vmatmul.mubr.bf16.gmra.mrb[0].mxu0 %v671
  %v3571 = vpop.f32.mrb[0].mxu0
  %v3572 = vadd.f32 %v3531, %v3571
  %v3573 = vpop.f32.mrb[0].mxu0
  %v3574 = vadd.f32 %v3533, %v3573
  %v3575 = vpop.f32.mrb[0].mxu0
  %v3576 = vpop.f32.mrb[0].mxu0
  %3577 = vdwg.mxu0
  %3578 = vmatprep.subr.bf16.mxu0 %v2229
  %3579 = vmatpush1.bf16.msra.mxu0 %v2228
  %3580 = vmatprep.subr.bf16.mxu0 %v2233
  %3581 = vmatpush1.bf16.msra.mxu0 %v2232
  %3582 = vmatprep.subr.bf16.mxu0 %v2237
  %3583 = vmatpush1.bf16.msra.mxu0 %v2236
  %3584 = vmatprep.subr.bf16.mxu0 %v2241
  %3585 = vmatpush1.bf16.msra.mxu0 %v2240
  %3586 = vmatprep.subr.bf16.mxu0 %v2245
  %3587 = vmatpush1.bf16.msra.mxu0 %v2244
  %3588 = vmatprep.subr.bf16.mxu0 %v2249
  %3589 = vmatpush1.bf16.msra.mxu0 %v2248
  %3590 = vmatprep.subr.bf16.mxu0 %v2253
  %3591 = vmatpush1.bf16.msra.mxu0 %v2252
  %3592 = vmatprep.subr.bf16.mxu0 %v2257
  %3593 = vmatpush1.bf16.msra.mxu0 %v2256
  %3594 = vmatprep.subr.bf16.mxu0 %v2261
  %3595 = vmatpush1.bf16.msra.mxu0 %v2260
  %3596 = vmatprep.subr.bf16.mxu0 %v2265
  %3597 = vmatpush1.bf16.msra.mxu0 %v2264
  %3598 = vmatprep.subr.bf16.mxu0 %v2269
  %3599 = vmatpush1.bf16.msra.mxu0 %v2268
  %3600 = vmatprep.subr.bf16.mxu0 %v2273
  %3601 = vmatpush1.bf16.msra.mxu0 %v2272
  %3602 = vmatprep.subr.bf16.mxu0 %v2277
  %3603 = vmatpush1.bf16.msra.mxu0 %v2276
  %3604 = vmatprep.subr.bf16.mxu0 %v2281
  %3605 = vmatpush1.bf16.msra.mxu0 %v2280
  %3606 = vmatprep.subr.bf16.mxu0 %v2285
  %3607 = vmatpush1.bf16.msra.mxu0 %v2284
  %3608 = vmatprep.subr.bf16.mxu0 %v2289
  %3609 = vmatpush1.bf16.msra.mxu0 %v2288
  %3610 = vmatprep.mubr.bf16.mxu0 %v613
  %3611 = vmatmul.mubr.bf16.gmra.mrb[0].mxu0 %v599
  %v3612 = vpop.f32.mrb[0].mxu0
  %v3613 = vadd.f32 %v572, %v3612
  %v3614 = vpop.f32.mrb[0].mxu0
  %v3615 = vadd.f32 %v573, %v3614
  %v3616 = vpop.f32.mrb[0].mxu0
  %v3617 = vpop.f32.mrb[0].mxu0
  %3618 = vdwg.mxu0
  %3619 = vmatprep.subr.bf16.mxu0 %v2293
  %3620 = vmatpush1.bf16.msra.mxu0 %v2292
  %3621 = vmatprep.subr.bf16.mxu0 %v2297
  %3622 = vmatpush1.bf16.msra.mxu0 %v2296
  %3623 = vmatprep.subr.bf16.mxu0 %v2301
  %3624 = vmatpush1.bf16.msra.mxu0 %v2300
  %3625 = vmatprep.subr.bf16.mxu0 %v2305
  %3626 = vmatpush1.bf16.msra.mxu0 %v2304
  %3627 = vmatprep.subr.bf16.mxu0 %v2309
  %3628 = vmatpush1.bf16.msra.mxu0 %v2308
  %3629 = vmatprep.subr.bf16.mxu0 %v2313
  %3630 = vmatpush1.bf16.msra.mxu0 %v2312
  %3631 = vmatprep.subr.bf16.mxu0 %v2317
  %3632 = vmatpush1.bf16.msra.mxu0 %v2316
  %3633 = vmatprep.subr.bf16.mxu0 %v2321
  %3634 = vmatpush1.bf16.msra.mxu0 %v2320
  %3635 = vmatprep.subr.bf16.mxu0 %v2325
  %3636 = vmatpush1.bf16.msra.mxu0 %v2324
  %3637 = vmatprep.subr.bf16.mxu0 %v2329
  %3638 = vmatpush1.bf16.msra.mxu0 %v2328
  %3639 = vmatprep.subr.bf16.mxu0 %v2333
  %3640 = vmatpush1.bf16.msra.mxu0 %v2332
  %3641 = vmatprep.subr.bf16.mxu0 %v2337
  %3642 = vmatpush1.bf16.msra.mxu0 %v2336
  %3643 = vmatprep.subr.bf16.mxu0 %v2341
  %3644 = vmatpush1.bf16.msra.mxu0 %v2340
  %3645 = vmatprep.subr.bf16.mxu0 %v2345
  %3646 = vmatpush1.bf16.msra.mxu0 %v2344
  %3647 = vmatprep.subr.bf16.mxu0 %v2349
  %3648 = vmatpush1.bf16.msra.mxu0 %v2348
  %3649 = vmatprep.subr.bf16.mxu0 %v2353
  %3650 = vmatpush1.bf16.msra.mxu0 %v2352
  %3651 = vmatprep.mubr.bf16.mxu0 %v623
  %3652 = vmatmul.mubr.bf16.gmra.mrb[0].mxu0 %v621
  %v3653 = vpop.f32.mrb[0].mxu0
  %v3654 = vadd.f32 %v3613, %v3653
  %v3655 = vpop.f32.mrb[0].mxu0
  %v3656 = vadd.f32 %v3615, %v3655
  %v3657 = vpop.f32.mrb[0].mxu0
  %v3658 = vpop.f32.mrb[0].mxu0
  %3659 = vdwg.mxu0
  %3660 = vmatprep.subr.bf16.mxu0 %v2357
  %3661 = vmatpush1.bf16.msra.mxu0 %v2356
  %3662 = vmatprep.subr.bf16.mxu0 %v2361
  %3663 = vmatpush1.bf16.msra.mxu0 %v2360
  %3664 = vmatprep.subr.bf16.mxu0 %v2365
  %3665 = vmatpush1.bf16.msra.mxu0 %v2364
  %3666 = vmatprep.subr.bf16.mxu0 %v2369
  %3667 = vmatpush1.bf16.msra.mxu0 %v2368
  %3668 = vmatprep.subr.bf16.mxu0 %v2373
  %3669 = vmatpush1.bf16.msra.mxu0 %v2372
  %3670 = vmatprep.subr.bf16.mxu0 %v2377
  %3671 = vmatpush1.bf16.msra.mxu0 %v2376
  %3672 = vmatprep.subr.bf16.mxu0 %v2381
  %3673 = vmatpush1.bf16.msra.mxu0 %v2380
  %3674 = vmatprep.subr.bf16.mxu0 %v2385
  %3675 = vmatpush1.bf16.msra.mxu0 %v2384
  %3676 = vmatprep.subr.bf16.mxu0 %v2389
  %3677 = vmatpush1.bf16.msra.mxu0 %v2388
  %3678 = vmatprep.subr.bf16.mxu0 %v2393
  %3679 = vmatpush1.bf16.msra.mxu0 %v2392
  %3680 = vmatprep.subr.bf16.mxu0 %v2397
  %3681 = vmatpush1.bf16.msra.mxu0 %v2396
  %3682 = vmatprep.subr.bf16.mxu0 %v2401
  %3683 = vmatpush1.bf16.msra.mxu0 %v2400
  %3684 = vmatprep.subr.bf16.mxu0 %v2405
  %3685 = vmatpush1.bf16.msra.mxu0 %v2404
  %3686 = vmatprep.subr.bf16.mxu0 %v2409
  %3687 = vmatpush1.bf16.msra.mxu0 %v2408
  %3688 = vmatprep.subr.bf16.mxu0 %v2413
  %3689 = vmatpush1.bf16.msra.mxu0 %v2412
  %3690 = vmatprep.subr.bf16.mxu0 %v2417
  %3691 = vmatpush1.bf16.msra.mxu0 %v2416
  %3692 = vmatprep.mubr.bf16.mxu0 %v620
  %3693 = vmatmul.mubr.bf16.gmra.mrb[0].mxu0 %v606
  %v3694 = vpop.f32.mrb[0].mxu0
  %v3695 = vadd.f32 %v3654, %v3694
  %v3696 = vpop.f32.mrb[0].mxu0
  %v3697 = vadd.f32 %v3656, %v3696
  %v3698 = vpop.f32.mrb[0].mxu0
  %v3699 = vpop.f32.mrb[0].mxu0
  %3700 = vdwg.mxu0
  %3701 = vmatprep.subr.bf16.mxu0 %v2421
  %3702 = vmatpush1.bf16.msra.mxu0 %v2420
  %3703 = vmatprep.subr.bf16.mxu0 %v2425
  %3704 = vmatpush1.bf16.msra.mxu0 %v2424
  %3705 = vmatprep.subr.bf16.mxu0 %v2429
  %3706 = vmatpush1.bf16.msra.mxu0 %v2428
  %3707 = vmatprep.subr.bf16.mxu0 %v2433
  %3708 = vmatpush1.bf16.msra.mxu0 %v2432
  %3709 = vmatprep.subr.bf16.mxu0 %v2437
  %3710 = vmatpush1.bf16.msra.mxu0 %v2436
  %3711 = vmatprep.subr.bf16.mxu0 %v2441
  %3712 = vmatpush1.bf16.msra.mxu0 %v2440
  %3713 = vmatprep.subr.bf16.mxu0 %v2445
  %3714 = vmatpush1.bf16.msra.mxu0 %v2444
  %3715 = vmatprep.subr.bf16.mxu0 %v2449
  %3716 = vmatpush1.bf16.msra.mxu0 %v2448
  %3717 = vmatprep.subr.bf16.mxu0 %v2453
  %3718 = vmatpush1.bf16.msra.mxu0 %v2452
  %3719 = vmatprep.subr.bf16.mxu0 %v2457
  %3720 = vmatpush1.bf16.msra.mxu0 %v2456
  %3721 = vmatprep.subr.bf16.mxu0 %v2461
  %3722 = vmatpush1.bf16.msra.mxu0 %v2460
  %3723 = vmatprep.subr.bf16.mxu0 %v2465
  %3724 = vmatpush1.bf16.msra.mxu0 %v2464
  %3725 = vmatprep.subr.bf16.mxu0 %v2469
  %3726 = vmatpush1.bf16.msra.mxu0 %v2468
  %3727 = vmatprep.subr.bf16.mxu0 %v2473
  %3728 = vmatpush1.bf16.msra.mxu0 %v2472
  %3729 = vmatprep.subr.bf16.mxu0 %v2477
  %3730 = vmatpush1.bf16.msra.mxu0 %v2476
  %3731 = vmatprep.subr.bf16.mxu0 %v2481
  %3732 = vmatpush1.bf16.msra.mxu0 %v2480
  %3733 = vmatprep.mubr.bf16.mxu0 %v624
  %3734 = vmatmul.mubr.bf16.gmra.mrb[0].mxu0 %v622
  %v3735 = vpop.f32.mrb[0].mxu0
  %v3736 = vadd.f32 %v3695, %v3735
  %v3737 = vpop.f32.mrb[0].mxu0
  %v3738 = vadd.f32 %v3697, %v3737
  %v3739 = vpop.f32.mrb[0].mxu0
  %v3740 = vpop.f32.mrb[0].mxu0
  %3741 = vdwg.mxu0
  %3742 = vmatprep.subr.bf16.mxu0 %v2485
  %3743 = vmatpush1.bf16.msra.mxu0 %v2484
  %3744 = vmatprep.subr.bf16.mxu0 %v2489
  %3745 = vmatpush1.bf16.msra.mxu0 %v2488
  %3746 = vmatprep.subr.bf16.mxu0 %v2493
  %3747 = vmatpush1.bf16.msra.mxu0 %v2492
  %3748 = vmatprep.subr.bf16.mxu0 %v2497
  %3749 = vmatpush1.bf16.msra.mxu0 %v2496
  %3750 = vmatprep.subr.bf16.mxu0 %v2501
  %3751 = vmatpush1.bf16.msra.mxu0 %v2500
  %3752 = vmatprep.subr.bf16.mxu0 %v2505
  %3753 = vmatpush1.bf16.msra.mxu0 %v2504
  %3754 = vmatprep.subr.bf16.mxu0 %v2509
  %3755 = vmatpush1.bf16.msra.mxu0 %v2508
  %3756 = vmatprep.subr.bf16.mxu0 %v2513
  %3757 = vmatpush1.bf16.msra.mxu0 %v2512
  %3758 = vmatprep.subr.bf16.mxu0 %v2517
  %3759 = vmatpush1.bf16.msra.mxu0 %v2516
  %3760 = vmatprep.subr.bf16.mxu0 %v2521
  %3761 = vmatpush1.bf16.msra.mxu0 %v2520
  %3762 = vmatprep.subr.bf16.mxu0 %v2525
  %3763 = vmatpush1.bf16.msra.mxu0 %v2524
  %3764 = vmatprep.subr.bf16.mxu0 %v2529
  %3765 = vmatpush1.bf16.msra.mxu0 %v2528
  %3766 = vmatprep.subr.bf16.mxu0 %v2533
  %3767 = vmatpush1.bf16.msra.mxu0 %v2532
  %3768 = vmatprep.subr.bf16.mxu0 %v2537
  %3769 = vmatpush1.bf16.msra.mxu0 %v2536
  %3770 = vmatprep.subr.bf16.mxu0 %v2541
  %3771 = vmatpush1.bf16.msra.mxu0 %v2540
  %3772 = vmatprep.subr.bf16.mxu0 %v2545
  %3773 = vmatpush1.bf16.msra.mxu0 %v2544
  %3774 = vmatprep.mubr.bf16.mxu0 %v662
  %3775 = vmatmul.mubr.bf16.gmra.mrb[0].mxu0 %v648
  %v3776 = vpop.f32.mrb[0].mxu0
  %v3777 = vadd.f32 %v3736, %v3776
  %v3778 = vpop.f32.mrb[0].mxu0
  %v3779 = vadd.f32 %v3738, %v3778
  %v3780 = vpop.f32.mrb[0].mxu0
  %v3781 = vpop.f32.mrb[0].mxu0
  %3782 = vdwg.mxu0
  %3783 = vmatprep.subr.bf16.mxu0 %v2549
  %3784 = vmatpush1.bf16.msra.mxu0 %v2548
  %3785 = vmatprep.subr.bf16.mxu0 %v2553
  %3786 = vmatpush1.bf16.msra.mxu0 %v2552
  %3787 = vmatprep.subr.bf16.mxu0 %v2557
  %3788 = vmatpush1.bf16.msra.mxu0 %v2556
  %3789 = vmatprep.subr.bf16.mxu0 %v2561
  %3790 = vmatpush1.bf16.msra.mxu0 %v2560
  %3791 = vmatprep.subr.bf16.mxu0 %v2565
  %3792 = vmatpush1.bf16.msra.mxu0 %v2564
  %3793 = vmatprep.subr.bf16.mxu0 %v2569
  %3794 = vmatpush1.bf16.msra.mxu0 %v2568
  %3795 = vmatprep.subr.bf16.mxu0 %v2573
  %3796 = vmatpush1.bf16.msra.mxu0 %v2572
  %3797 = vmatprep.subr.bf16.mxu0 %v2577
  %3798 = vmatpush1.bf16.msra.mxu0 %v2576
  %3799 = vmatprep.subr.bf16.mxu0 %v2581
  %3800 = vmatpush1.bf16.msra.mxu0 %v2580
  %3801 = vmatprep.subr.bf16.mxu0 %v2585
  %3802 = vmatpush1.bf16.msra.mxu0 %v2584
  %3803 = vmatprep.subr.bf16.mxu0 %v2589
  %3804 = vmatpush1.bf16.msra.mxu0 %v2588
  %3805 = vmatprep.subr.bf16.mxu0 %v2593
  %3806 = vmatpush1.bf16.msra.mxu0 %v2592
  %3807 = vmatprep.subr.bf16.mxu0 %v2597
  %3808 = vmatpush1.bf16.msra.mxu0 %v2596
  %3809 = vmatprep.subr.bf16.mxu0 %v2601
  %3810 = vmatpush1.bf16.msra.mxu0 %v2600
  %3811 = vmatprep.subr.bf16.mxu0 %v2605
  %3812 = vmatpush1.bf16.msra.mxu0 %v2604
  %3813 = vmatprep.subr.bf16.mxu0 %v2609
  %3814 = vmatpush1.bf16.msra.mxu0 %v2608
  %3815 = vmatprep.mubr.bf16.mxu0 %v672
  %3816 = vmatmul.mubr.bf16.gmra.mrb[0].mxu0 %v670
  %v3817 = vpop.f32.mrb[0].mxu0
  %v3818 = vadd.f32 %v3777, %v3817
  %v3819 = vpop.f32.mrb[0].mxu0
  %v3820 = vadd.f32 %v3779, %v3819
  %v3821 = vpop.f32.mrb[0].mxu0
  %v3822 = vpop.f32.mrb[0].mxu0
  %3823 = vdwg.mxu0
  %3824 = vmatprep.subr.bf16.mxu0 %v2613
  %3825 = vmatpush1.bf16.msra.mxu0 %v2612
  %3826 = vmatprep.subr.bf16.mxu0 %v2617
  %3827 = vmatpush1.bf16.msra.mxu0 %v2616
  %3828 = vmatprep.subr.bf16.mxu0 %v2621
  %3829 = vmatpush1.bf16.msra.mxu0 %v2620
  %3830 = vmatprep.subr.bf16.mxu0 %v2625
  %3831 = vmatpush1.bf16.msra.mxu0 %v2624
  %3832 = vmatprep.subr.bf16.mxu0 %v2629
  %3833 = vmatpush1.bf16.msra.mxu0 %v2628
  %3834 = vmatprep.subr.bf16.mxu0 %v2633
  %3835 = vmatpush1.bf16.msra.mxu0 %v2632
  %3836 = vmatprep.subr.bf16.mxu0 %v2637
  %3837 = vmatpush1.bf16.msra.mxu0 %v2636
  %3838 = vmatprep.subr.bf16.mxu0 %v2641
  %3839 = vmatpush1.bf16.msra.mxu0 %v2640
  %3840 = vmatprep.subr.bf16.mxu0 %v2645
  %3841 = vmatpush1.bf16.msra.mxu0 %v2644
  %3842 = vmatprep.subr.bf16.mxu0 %v2649
  %3843 = vmatpush1.bf16.msra.mxu0 %v2648
  %3844 = vmatprep.subr.bf16.mxu0 %v2653
  %3845 = vmatpush1.bf16.msra.mxu0 %v2652
  %3846 = vmatprep.subr.bf16.mxu0 %v2657
  %3847 = vmatpush1.bf16.msra.mxu0 %v2656
  %3848 = vmatprep.subr.bf16.mxu0 %v2661
  %3849 = vmatpush1.bf16.msra.mxu0 %v2660
  %3850 = vmatprep.subr.bf16.mxu0 %v2665
  %3851 = vmatpush1.bf16.msra.mxu0 %v2664
  %3852 = vmatprep.subr.bf16.mxu0 %v2669
  %3853 = vmatpush1.bf16.msra.mxu0 %v2668
  %3854 = vmatprep.subr.bf16.mxu0 %v2673
  %3855 = vmatpush1.bf16.msra.mxu0 %v2672
  %3856 = vmatprep.mubr.bf16.mxu0 %v669
  %3857 = vmatmul.mubr.bf16.gmra.mrb[0].mxu0 %v655
  %v3858 = vpop.f32.mrb[0].mxu0
  %v3859 = vadd.f32 %v3818, %v3858
  %v3860 = vpop.f32.mrb[0].mxu0
  %v3861 = vadd.f32 %v3820, %v3860
  %v3862 = vpop.f32.mrb[0].mxu0
  %v3863 = vpop.f32.mrb[0].mxu0
  %3864 = vdwg.mxu0
  %3865 = vmatprep.subr.bf16.mxu0 %v2677
  %3866 = vmatpush1.bf16.msra.mxu0 %v2676
  %3867 = vmatprep.subr.bf16.mxu0 %v2681
  %3868 = vmatpush1.bf16.msra.mxu0 %v2680
  %3869 = vmatprep.subr.bf16.mxu0 %v2685
  %3870 = vmatpush1.bf16.msra.mxu0 %v2684
  %3871 = vmatprep.subr.bf16.mxu0 %v2689
  %3872 = vmatpush1.bf16.msra.mxu0 %v2688
  %3873 = vmatprep.subr.bf16.mxu0 %v2693
  %3874 = vmatpush1.bf16.msra.mxu0 %v2692
  %3875 = vmatprep.subr.bf16.mxu0 %v2697
  %3876 = vmatpush1.bf16.msra.mxu0 %v2696
  %3877 = vmatprep.subr.bf16.mxu0 %v2701
  %3878 = vmatpush1.bf16.msra.mxu0 %v2700
  %3879 = vmatprep.subr.bf16.mxu0 %v2705
  %3880 = vmatpush1.bf16.msra.mxu0 %v2704
  %3881 = vmatprep.subr.bf16.mxu0 %v2709
  %3882 = vmatpush1.bf16.msra.mxu0 %v2708
  %3883 = vmatprep.subr.bf16.mxu0 %v2713
  %3884 = vmatpush1.bf16.msra.mxu0 %v2712
  %3885 = vmatprep.subr.bf16.mxu0 %v2717
  %3886 = vmatpush1.bf16.msra.mxu0 %v2716
  %3887 = vmatprep.subr.bf16.mxu0 %v2721
  %3888 = vmatpush1.bf16.msra.mxu0 %v2720
  %3889 = vmatprep.subr.bf16.mxu0 %v2725
  %3890 = vmatpush1.bf16.msra.mxu0 %v2724
  %3891 = vmatprep.subr.bf16.mxu0 %v2729
  %3892 = vmatpush1.bf16.msra.mxu0 %v2728
  %3893 = vmatprep.subr.bf16.mxu0 %v2733
  %3894 = vmatpush1.bf16.msra.mxu0 %v2732
  %3895 = vmatprep.subr.bf16.mxu0 %v2737
  %3896 = vmatpush1.bf16.msra.mxu0 %v2736
  %3897 = vmatprep.mubr.bf16.mxu0 %v673
  %3898 = vmatmul.mubr.bf16.gmra.mrb[0].mxu0 %v671
  %v3899 = vpop.f32.mrb[0].mxu0
  %v3900 = vadd.f32 %v3859, %v3899
  %v3901 = vpop.f32.mrb[0].mxu0
  %v3902 = vadd.f32 %v3861, %v3901
  %v3903 = vpop.f32.mrb[0].mxu0
  %v3904 = vpop.f32.mrb[0].mxu0
  %3905 = vdwg.mxu0
  %v3906 = vld [vmem:[%s4] sm:$0xf]
  %v3908 = vlaneseq
  %v3909 = vshrl.u32 %v3908, 7
  %v3910 = vsub.s32 0, %v3909
  %v3911 = vrot.slane %v3906, %v3910
  %v3912 = vlaneseq
  %v3913 = vshrl.u32 %v3912, 7
  %v3914 = vsub.s32 1, %v3913
  %v3915 = vrot.slane %v3906, %v3914
  %v3916 = vlaneseq
  %v3917 = vshrl.u32 %v3916, 7
  %v3918 = vsub.s32 2, %v3917
  %v3919 = vrot.slane %v3906, %v3918
  %v3920 = vlaneseq
  %v3921 = vshrl.u32 %v3920, 7
  %v3922 = vsub.s32 3, %v3921
  %v3923 = vrot.slane %v3906, %v3922
  %v3928 = vadd.f32 %v3572, %v3911
  %v3929 = vadd.f32 %v3574, %v3915
  %v3930 = vadd.f32 %v3900, %v3919
  %v3931 = vadd.f32 %v3902, %v3923
  %v3932 = vmax.f32 %v3928, 0.0
  %v3933 = vmax.f32 %v3929, 0.0
  %v3934 = vmax.f32 %v3930, 0.0
  %v3935 = vmax.f32 %v3931, 0.0
  %v3936 = vld [vmem:[%s5] sm:$0xf]
  %v3938 = vlaneseq
  %v3939 = vshrl.u32 %v3938, 7
  %v3940 = vsub.s32 0, %v3939
  %v3941 = vrot.slane %v3936, %v3940
  %v3942 = vlaneseq
  %v3943 = vshrl.u32 %v3942, 7
  %v3944 = vsub.s32 1, %v3943
  %v3945 = vrot.slane %v3936, %v3944
  %v3946 = vlaneseq
  %v3947 = vshrl.u32 %v3946, 7
  %v3948 = vsub.s32 2, %v3947
  %v3949 = vrot.slane %v3936, %v3948
  %v3950 = vlaneseq
  %v3951 = vshrl.u32 %v3950, 7
  %v3952 = vsub.s32 3, %v3951
  %v3953 = vrot.slane %v3936, %v3952
  %v3958 = vmul.f32 %v3932, %v3941
  %v3959 = vmul.f32 %v3933, %v3945
  %v3960 = vmul.f32 %v3934, %v3949
  %v3961 = vmul.f32 %v3935, %v3953
  %vm3962 = vcmask 1041408
  %v3963 = vsel %vm3962, %v3958, 0.0
  %v3964 = vsel %vm3962, %v3959, 0.0
  %v3965 = vadd.f32 %v3963, %v3964
  %v3966 = vsel %vm3962, %v3960, 0.0
  %v3967 = vadd.f32 %v3965, %v3966
  %v3968 = vsel %vm3962, %v3961, 0.0
  %v3969 = vadd.f32 %v3967, %v3968
  %3970 = vadd.xlane.f32.xlu0 %v3969
  %v3971 = vpop.xlane.xlu0 %3970
  %v3972 = vld [vmem:[#allocation2] sm:$0x1]
  %v3974 = vlaneseq
  %v3975 = vshrl.u32 %v3974, 7
  %v3976 = vsub.s32 0, %v3975
  %v3977 = vrot.slane %v3972, %v3976
  %v3979 = vadd.f32 %v3971, %v3977
  %vm3980 = vcmask 1024
  %3981 = vst.msk [vmem:[%s7] sm:$0x3] %vm3980, %v3979
  // Predicated region
  $region30: #{simplest_net_forward.1} parent=0 // pred_check
    _
  $region31: #{simplest_net_forward.1} parent=0 // pred_check_branch
    %3983 = sbr.rel (0) target = $region33
  $region32: #{simplest_net_forward.1} parent=0 // pred_region
    _
  $region33: #{simplest_net_forward.1} parent=0 // pred_fallthru
    _
  // Predicated region
  $region34: #{simplest_net_forward.1} parent=0 // pred_check
    _
  $region35: #{simplest_net_forward.1} parent=0 // pred_check_branch
    %3985 = sbr.rel (0) target = $region37
  $region36: #{simplest_net_forward.1} parent=0 // pred_region
    _
  $region37: #{simplest_net_forward.1} parent=0 // pred_fallthru
    _

</llo_original>
